<compile_context>
chip_gen: v5e
topology: v5e:2x2
jax: 0.10.0
libtpu: 0.0.40
codegen_flags: <defaults>
</compile_context>

<pallas_src>
import math

import jax
import jax.numpy as jnp
from jax import lax
from jax.experimental import pallas as pl
from jax.experimental.pallas import tpu as pltpu

# ----------------------------- configuration ---------------------------------
NUM_LAYERS = 2
D_MODEL = 32
D_FF = 64
NUM_HEADS = 4
D_HEAD = D_MODEL // NUM_HEADS
SCALE = 1.0 / math.sqrt(D_HEAD)
LN_EPS = 1e-5

BATCH = 2
SEQ = 8

# TODO(synk): dropout is treated as identity (eval semantics); a training-mode
#             port would need pltpu.prng_* inside the kernel.


# ------------------------------ Pallas kernel --------------------------------
def decoder_stack_kernel(
    # activations / additive mask biases
    x_ref, enc_ref, dbias_ref, ebias_ref,
    # packed parameters (stacked over layers)
    attn_w_ref, attn_b_ref, ln_g_ref, ln_b_ref,
    ffn_w1_ref, ffn_b1_ref, ffn_w2_ref, ffn_b2_ref,
    # output
    out_ref,
):
    """Whole decoder stack in one invocation.

    Shapes (NS = N * S, D = D_MODEL, L = NUM_LAYERS):
      x_ref, enc_ref, out_ref : (NS, D)
      dbias_ref, ebias_ref    : (NS, NS)  additive bias (0 keep / -1e9 drop),
                                block-diagonal over the folded batch axis
      attn_w_ref : (L, 2, D, 4*D)   [self, cross] x [Wq | Wk | Wv | Wo]
      attn_b_ref : (L, 2, 1, 4*D)   [self, cross] x [bq | bk | bv | bo]
      ln_g_ref / ln_b_ref : (L, 3, D)   LN1 / LN2 / LN3 gamma, beta
      ffn_w1_ref : (L, D, D_FF)     ffn_b1_ref : (L, 1, D_FF)
      ffn_w2_ref : (L, D_FF, D)     ffn_b2_ref : (L, 1, D)
    """
    D = D_MODEL

    x = x_ref[...]          # (NS, D) f32
    enc = enc_ref[...]      # (NS, D)
    dbias = dbias_ref[...]  # (NS, NS)
    ebias = ebias_ref[...]  # (NS, NS)

    def layer_norm(h, gamma, beta):
        mu = jnp.mean(h, axis=-1, keepdims=True)
        var = jnp.mean(jnp.square(h - mu), axis=-1, keepdims=True)
        return (h - mu) * lax.rsqrt(var + LN_EPS) * gamma + beta

    def mha(q_in, kv_in, bias, w, b):
        # w: (D, 4D) = [Wq | Wk | Wv | Wo];  b: (1, 4D)
        q = jnp.dot(q_in, w[:, 0 * D:1 * D],
                    preferred_element_type=jnp.float32) + b[:, 0 * D:1 * D]
        k = jnp.dot(kv_in, w[:, 1 * D:2 * D],
                    preferred_element_type=jnp.float32) + b[:, 1 * D:2 * D]
        v = jnp.dot(kv_in, w[:, 2 * D:3 * D],
                    preferred_element_type=jnp.float32) + b[:, 2 * D:3 * D]
        head_outs = []
        for h in range(NUM_HEADS):
            lo = h * D_HEAD
            qh = q[:, lo:lo + D_HEAD]
            kh = k[:, lo:lo + D_HEAD]
            vh = v[:, lo:lo + D_HEAD]
            # contract last dims of q and k directly (no materialized transpose)
            s = lax.dot_general(qh, kh, (((1,), (1,)), ((), ())),
                                preferred_element_type=jnp.float32)
            s = s * SCALE + bias
            s = s - jnp.max(s, axis=-1, keepdims=True)
            p = jnp.exp(s)
            inv = pl.reciprocal(jnp.sum(p, axis=-1, keepdims=True), approx=True)
            head_outs.append(
                jnp.dot(p * inv, vh, preferred_element_type=jnp.float32))
        concat = jnp.concatenate(head_outs, axis=-1)          # (NS, D)
        return jnp.dot(concat, w[:, 3 * D:4 * D],
                       preferred_element_type=jnp.float32) + b[:, 3 * D:4 * D]

    for l in range(NUM_LAYERS):  # static unroll: all layers in one kernel
        aw = attn_w_ref[l]       # (2, D, 4D)
        ab = attn_b_ref[l]       # (2, 1, 4D)
        lg = ln_g_ref[l]         # (3, D)
        lb = ln_b_ref[l]         # (3, D)
        w1 = ffn_w1_ref[l]       # (D, D_FF)
        b1 = ffn_b1_ref[l]       # (1, D_FF)
        w2 = ffn_w2_ref[l]       # (D_FF, D)
        b2 = ffn_b2_ref[l]       # (1, D)

        # 1) masked self-attention + residual + LayerNorm
        sa = mha(x, x, dbias, aw[0], ab[0])
        x = layer_norm(x + sa, lg[0:1, :], lb[0:1, :])

        # 2) cross-attention over encoder output + residual + LayerNorm
        ca = mha(x, enc, ebias, aw[1], ab[1])
        x = layer_norm(x + ca, lg[1:2, :], lb[1:2, :])

        # 3) position-wise feed-forward (ReLU) + residual + LayerNorm
        h1 = jnp.maximum(
            jnp.dot(x, w1, preferred_element_type=jnp.float32) + b1, 0.0)
        ff = jnp.dot(h1, w2, preferred_element_type=jnp.float32) + b2
        x = layer_norm(x + ff, lg[2:3, :], lb[2:3, :])

    out_ref[...] = x.astype(out_ref.dtype)


# ------------------------------ host wrapper ----------------------------------
@jax.jit
def decoder_model_forward(x, encoder_output, decoder_mask, encoder_mask, params):
    (attn_w, attn_b, ln_g, ln_b, ffn_w1, ffn_b1, ffn_w2, ffn_b2) = params
    N, S, D = x.shape
    NS = N * S

    x2 = x.reshape(NS, D).astype(jnp.float32)
    enc2 = encoder_output.reshape(NS, D).astype(jnp.float32)

    # Hoist the 0/1 masks into additive biases, block-diagonal over the folded
    # batch axis (off-diagonal blocks = -1e9 so tokens never attend across batch).
    neg = jnp.float32(-1e9)
    eye = jnp.eye(N, dtype=jnp.float32)
    dmask_blk = jnp.kron(eye, decoder_mask.astype(jnp.float32))   # (NS, NS)
    emask_blk = jnp.kron(eye, encoder_mask.astype(jnp.float32))   # (NS, NS)
    dbias = jnp.where(dmask_blk > 0, jnp.float32(0.0), neg)
    ebias = jnp.where(emask_blk > 0, jnp.float32(0.0), neg)

    vmem = pl.BlockSpec(memory_space=pltpu.MemorySpace.VMEM)
    out2 = pl.pallas_call(
        decoder_stack_kernel,
        out_shape=jax.ShapeDtypeStruct((NS, D), jnp.float32),
        in_specs=[vmem] * 12,
        out_specs=vmem,
    )(x2, enc2, dbias, ebias,
      attn_w, attn_b, ln_g, ln_b, ffn_w1, ffn_b1, ffn_w2, ffn_b2)
    return out2.reshape(N, S, D)


# --------------------------- parameter construction ---------------------------
def init_params(key):
    """Build the packed, layer-stacked parameter slabs."""
    std = 0.02
    layer_keys = jax.random.split(key, NUM_LAYERS)

    def w(k, shape):
        return jax.random.normal(k, shape, dtype=jnp.float32) * std

    attn_w_l, attn_b_l, w1_l, b1_l, w2_l, b2_l = [], [], [], [], [], []
    for lk in layer_keys:
        ks = jax.random.split(lk, 12)
        sa = jnp.concatenate([w(ks[0], (D_MODEL, D_MODEL)),
                              w(ks[1], (D_MODEL, D_MODEL)),
                              w(ks[2], (D_MODEL, D_MODEL)),
                              w(ks[3], (D_MODEL, D_MODEL))], axis=1)  # (D, 4D)
        ca = jnp.concatenate([w(ks[4], (D_MODEL, D_MODEL)),
                              w(ks[5], (D_MODEL, D_MODEL)),
                              w(ks[6], (D_MODEL, D_MODEL)),
                              w(ks[7], (D_MODEL, D_MODEL))], axis=1)  # (D, 4D)
        attn_w_l.append(jnp.stack([sa, ca], axis=0))                  # (2, D, 4D)
        attn_b_l.append(jnp.stack([w(ks[8], (1, 4 * D_MODEL)),
                                   w(ks[9], (1, 4 * D_MODEL))], axis=0))
        w1_l.append(w(ks[10], (D_MODEL, D_FF)))
        b1_l.append(jnp.zeros((1, D_FF), jnp.float32))
        w2_l.append(w(ks[11], (D_FF, D_MODEL)))
        b2_l.append(jnp.zeros((1, D_MODEL), jnp.float32))

    attn_w = jnp.stack(attn_w_l, axis=0)                 # (L, 2, D, 4D)
    attn_b = jnp.stack(attn_b_l, axis=0)                 # (L, 2, 1, 4D)
    ln_g = jnp.ones((NUM_LAYERS, 3, D_MODEL), jnp.float32)
    ln_b = jnp.zeros((NUM_LAYERS, 3, D_MODEL), jnp.float32)
    ffn_w1 = jnp.stack(w1_l, axis=0)                     # (L, D, D_FF)
    ffn_b1 = jnp.stack(b1_l, axis=0)                     # (L, 1, D_FF)
    ffn_w2 = jnp.stack(w2_l, axis=0)                     # (L, D_FF, D)
    ffn_b2 = jnp.stack(b2_l, axis=0)                     # (L, 1, D)
    return (attn_w, attn_b, ln_g, ln_b, ffn_w1, ffn_b1, ffn_w2, ffn_b2)


if __name__ == "__main__":
    key = jax.random.PRNGKey(0)
    k_x, k_enc, k_params = jax.random.split(key, 3)

    x = jax.random.normal(k_x, (BATCH, SEQ, D_MODEL), dtype=jnp.float32)
    encoder_output = jax.random.normal(k_enc, (BATCH, SEQ, D_MODEL),
                                       dtype=jnp.float32)

    # decoder mask: causal; encoder mask: all-visible (1 = keep, 0 = masked)
    decoder_mask = jnp.tril(jnp.ones((SEQ, SEQ), jnp.float32))
    encoder_mask = jnp.ones((SEQ, SEQ), jnp.float32)

    params = init_params(k_params)

    out = decoder_model_forward(x, encoder_output, decoder_mask, encoder_mask,
                                params)
    out = jax.block_until_ready(out)
    assert out.shape == (BATCH, SEQ, D_MODEL)
    assert bool(jnp.all(jnp.isfinite(out)))
    print("KERNEL_OK")
</pallas_src>

<mosaic_0001>
module attributes {stable_mosaic.version = 11 : i64} {
  func.func @decoder_stack_kernel(%arg0: memref<16x32xf32, #tpu.memory_space<vmem>>, %arg1: memref<16x32xf32, #tpu.memory_space<vmem>>, %arg2: memref<16x16xf32, #tpu.memory_space<vmem>>, %arg3: memref<16x16xf32, #tpu.memory_space<vmem>>, %arg4: memref<2x2x32x128xf32, #tpu.memory_space<vmem>>, %arg5: memref<2x2x1x128xf32, #tpu.memory_space<vmem>>, %arg6: memref<2x3x32xf32, #tpu.memory_space<vmem>>, %arg7: memref<2x3x32xf32, #tpu.memory_space<vmem>>, %arg8: memref<2x32x64xf32, #tpu.memory_space<vmem>>, %arg9: memref<2x1x64xf32, #tpu.memory_space<vmem>>, %arg10: memref<2x64x32xf32, #tpu.memory_space<vmem>>, %arg11: memref<2x1x32xf32, #tpu.memory_space<vmem>>, %arg12: memref<16x32xf32, #tpu.memory_space<vmem>>) attributes {dimension_semantics = [], scalar_prefetch = 0 : i64, scratch_operands = 0 : i64, tpu.core_type = #tpu.core_type<tc>} {
    %c0 = arith.constant 0 : index
    %c0_0 = arith.constant 0 : index
    %0 = vector.load %arg0[%c0, %c0_0] : memref<16x32xf32, #tpu.memory_space<vmem>>, vector<16x32xf32>
    %c0_1 = arith.constant 0 : index
    %c0_2 = arith.constant 0 : index
    %1 = vector.load %arg1[%c0_1, %c0_2] : memref<16x32xf32, #tpu.memory_space<vmem>>, vector<16x32xf32>
    %c0_3 = arith.constant 0 : index
    %c0_4 = arith.constant 0 : index
    %2 = vector.load %arg2[%c0_3, %c0_4] : memref<16x16xf32, #tpu.memory_space<vmem>>, vector<16x16xf32>
    %c0_5 = arith.constant 0 : index
    %c0_6 = arith.constant 0 : index
    %3 = vector.load %arg3[%c0_5, %c0_6] : memref<16x16xf32, #tpu.memory_space<vmem>>, vector<16x16xf32>
    %c0_7 = arith.constant 0 : index
    %c0_8 = arith.constant 0 : index
    %c0_9 = arith.constant 0 : index
    %c0_10 = arith.constant 0 : index
    %4 = vector.load %arg4[%c0_7, %c0_8, %c0_9, %c0_10] : memref<2x2x32x128xf32, #tpu.memory_space<vmem>>, vector<1x2x32x128xf32>
    %5 = vector.shape_cast %4 : vector<1x2x32x128xf32> to vector<2x32x128xf32>
    %c0_11 = arith.constant 0 : index
    %c0_12 = arith.constant 0 : index
    %c0_13 = arith.constant 0 : index
    %c0_14 = arith.constant 0 : index
    %6 = vector.load %arg5[%c0_11, %c0_12, %c0_13, %c0_14] : memref<2x2x1x128xf32, #tpu.memory_space<vmem>>, vector<1x2x1x128xf32>
    %7 = vector.shape_cast %6 : vector<1x2x1x128xf32> to vector<2x1x128xf32>
    %c0_15 = arith.constant 0 : index
    %c0_16 = arith.constant 0 : index
    %c0_17 = arith.constant 0 : index
    %8 = vector.load %arg6[%c0_15, %c0_16, %c0_17] : memref<2x3x32xf32, #tpu.memory_space<vmem>>, vector<1x3x32xf32>
    %9 = vector.shape_cast %8 : vector<1x3x32xf32> to vector<3x32xf32>
    %c0_18 = arith.constant 0 : index
    %c0_19 = arith.constant 0 : index
    %c0_20 = arith.constant 0 : index
    %10 = vector.load %arg7[%c0_18, %c0_19, %c0_20] : memref<2x3x32xf32, #tpu.memory_space<vmem>>, vector<1x3x32xf32>
    %11 = vector.shape_cast %10 : vector<1x3x32xf32> to vector<3x32xf32>
    %c0_21 = arith.constant 0 : index
    %c0_22 = arith.constant 0 : index
    %c0_23 = arith.constant 0 : index
    %12 = vector.load %arg8[%c0_21, %c0_22, %c0_23] : memref<2x32x64xf32, #tpu.memory_space<vmem>>, vector<1x32x64xf32>
    %13 = vector.shape_cast %12 : vector<1x32x64xf32> to vector<32x64xf32>
    %c0_24 = arith.constant 0 : index
    %c0_25 = arith.constant 0 : index
    %c0_26 = arith.constant 0 : index
    %14 = vector.load %arg9[%c0_24, %c0_25, %c0_26] : memref<2x1x64xf32, #tpu.memory_space<vmem>>, vector<1x1x64xf32>
    %15 = vector.shape_cast %14 : vector<1x1x64xf32> to vector<1x64xf32>
    %c0_27 = arith.constant 0 : index
    %c0_28 = arith.constant 0 : index
    %c0_29 = arith.constant 0 : index
    %16 = vector.load %arg10[%c0_27, %c0_28, %c0_29] : memref<2x64x32xf32, #tpu.memory_space<vmem>>, vector<1x64x32xf32>
    %17 = vector.shape_cast %16 : vector<1x64x32xf32> to vector<64x32xf32>
    %c0_30 = arith.constant 0 : index
    %c0_31 = arith.constant 0 : index
    %c0_32 = arith.constant 0 : index
    %18 = vector.load %arg11[%c0_30, %c0_31, %c0_32] : memref<2x1x32xf32, #tpu.memory_space<vmem>>, vector<1x1x32xf32>
    %19 = vector.shape_cast %18 : vector<1x1x32xf32> to vector<1x32xf32>
    %20 = vector.extract_strided_slice %5 {offsets = [0, 0, 0], sizes = [1, 32, 128], strides = [1, 1, 1]} : vector<2x32x128xf32> to vector<1x32x128xf32>
    %21 = vector.shape_cast %20 : vector<1x32x128xf32> to vector<32x128xf32>
    %22 = vector.extract_strided_slice %7 {offsets = [0, 0, 0], sizes = [1, 1, 128], strides = [1, 1, 1]} : vector<2x1x128xf32> to vector<1x1x128xf32>
    %23 = vector.shape_cast %22 : vector<1x1x128xf32> to vector<1x128xf32>
    %24 = vector.extract_strided_slice %21 {offsets = [0, 0], sizes = [32, 32], strides = [1, 1]} : vector<32x128xf32> to vector<32x32xf32>
    %cst = arith.constant dense<0.000000e+00> : vector<16x32xf32>
    %25 = tpu.matmul %0, %24, %cst {dimension_numbers = #tpu.dot_dimension_numbers<[1], [0], [0], [1], [0, 0, 1, 1], [], []>} : vector<16x32xf32>, vector<32x32xf32>, vector<16x32xf32> -> vector<16x32xf32>
    %26 = vector.extract_strided_slice %23 {offsets = [0, 0], sizes = [1, 32], strides = [1, 1]} : vector<1x128xf32> to vector<1x32xf32>
    %27 = vector.broadcast %26 : vector<1x32xf32> to vector<16x32xf32>
    %28 = arith.addf %25, %27 : vector<16x32xf32>
    %29 = vector.extract_strided_slice %21 {offsets = [0, 32], sizes = [32, 32], strides = [1, 1]} : vector<32x128xf32> to vector<32x32xf32>
    %cst_33 = arith.constant dense<0.000000e+00> : vector<16x32xf32>
    %30 = tpu.matmul %0, %29, %cst_33 {dimension_numbers = #tpu.dot_dimension_numbers<[1], [0], [0], [1], [0, 0, 1, 1], [], []>} : vector<16x32xf32>, vector<32x32xf32>, vector<16x32xf32> -> vector<16x32xf32>
    %31 = vector.extract_strided_slice %23 {offsets = [0, 32], sizes = [1, 32], strides = [1, 1]} : vector<1x128xf32> to vector<1x32xf32>
    %32 = vector.broadcast %31 : vector<1x32xf32> to vector<16x32xf32>
    %33 = arith.addf %30, %32 : vector<16x32xf32>
    %34 = vector.extract_strided_slice %21 {offsets = [0, 64], sizes = [32, 32], strides = [1, 1]} : vector<32x128xf32> to vector<32x32xf32>
    %cst_34 = arith.constant dense<0.000000e+00> : vector<16x32xf32>
    %35 = tpu.matmul %0, %34, %cst_34 {dimension_numbers = #tpu.dot_dimension_numbers<[1], [0], [0], [1], [0, 0, 1, 1], [], []>} : vector<16x32xf32>, vector<32x32xf32>, vector<16x32xf32> -> vector<16x32xf32>
    %36 = vector.extract_strided_slice %23 {offsets = [0, 64], sizes = [1, 32], strides = [1, 1]} : vector<1x128xf32> to vector<1x32xf32>
    %37 = vector.broadcast %36 : vector<1x32xf32> to vector<16x32xf32>
    %38 = arith.addf %35, %37 : vector<16x32xf32>
    %39 = vector.extract_strided_slice %28 {offsets = [0, 0], sizes = [16, 8], strides = [1, 1]} : vector<16x32xf32> to vector<16x8xf32>
    %40 = vector.extract_strided_slice %33 {offsets = [0, 0], sizes = [16, 8], strides = [1, 1]} : vector<16x32xf32> to vector<16x8xf32>
    %41 = vector.extract_strided_slice %38 {offsets = [0, 0], sizes = [16, 8], strides = [1, 1]} : vector<16x32xf32> to vector<16x8xf32>
    %cst_35 = arith.constant dense<0.000000e+00> : vector<16x16xf32>
    %42 = tpu.matmul %39, %40, %cst_35 {dimension_numbers = #tpu.dot_dimension_numbers<[1], [1], [0], [0], [0, 0, 1, 0], [], []>} : vector<16x8xf32>, vector<16x8xf32>, vector<16x16xf32> -> vector<16x16xf32>
    %cst_36 = arith.constant 0.353553385 : f32
    %43 = vector.broadcast %cst_36 : f32 to vector<16x16xf32>
    %44 = arith.mulf %42, %43 : vector<16x16xf32>
    %45 = arith.addf %44, %2 : vector<16x16xf32>
    %cst_37 = arith.constant dense<0xFF800000> : vector<16xf32>
    %46 = vector.multi_reduction <maximumf>, %45, %cst_37 [1] : vector<16x16xf32> to vector<16xf32>
    %47 = vector.shape_cast %46 : vector<16xf32> to vector<16x1xf32>
    %48 = vector.broadcast %47 : vector<16x1xf32> to vector<16x16xf32>
    %49 = arith.subf %45, %48 : vector<16x16xf32>
    %50 = math.exp %49 : vector<16x16xf32>
    %cst_38 = arith.constant dense<0.000000e+00> : vector<16xf32>
    %51 = vector.multi_reduction <add>, %50, %cst_38 [1] : vector<16x16xf32> to vector<16xf32>
    %52 = vector.shape_cast %51 : vector<16xf32> to vector<16x1xf32>
    %53 = tpu.reciprocal %52 {approx = true} : vector<16x1xf32> -> vector<16x1xf32>
    %54 = vector.broadcast %53 : vector<16x1xf32> to vector<16x16xf32>
    %55 = arith.mulf %50, %54 : vector<16x16xf32>
    %cst_39 = arith.constant dense<0.000000e+00> : vector<16x8xf32>
    %56 = tpu.matmul %55, %41, %cst_39 {dimension_numbers = #tpu.dot_dimension_numbers<[1], [0], [0], [1], [0, 0, 1, 1], [], []>} : vector<16x16xf32>, vector<16x8xf32>, vector<16x8xf32> -> vector<16x8xf32>
    %57 = vector.extract_strided_slice %28 {offsets = [0, 8], sizes = [16, 8], strides = [1, 1]} : vector<16x32xf32> to vector<16x8xf32>
    %58 = vector.extract_strided_slice %33 {offsets = [0, 8], sizes = [16, 8], strides = [1, 1]} : vector<16x32xf32> to vector<16x8xf32>
    %59 = vector.extract_strided_slice %38 {offsets = [0, 8], sizes = [16, 8], strides = [1, 1]} : vector<16x32xf32> to vector<16x8xf32>
    %cst_40 = arith.constant dense<0.000000e+00> : vector<16x16xf32>
    %60 = tpu.matmul %57, %58, %cst_40 {dimension_numbers = #tpu.dot_dimension_numbers<[1], [1], [0], [0], [0, 0, 1, 0], [], []>} : vector<16x8xf32>, vector<16x8xf32>, vector<16x16xf32> -> vector<16x16xf32>
    %cst_41 = arith.constant 0.353553385 : f32
    %61 = vector.broadcast %cst_41 : f32 to vector<16x16xf32>
    %62 = arith.mulf %60, %61 : vector<16x16xf32>
    %63 = arith.addf %62, %2 : vector<16x16xf32>
    %cst_42 = arith.constant dense<0xFF800000> : vector<16xf32>
    %64 = vector.multi_reduction <maximumf>, %63, %cst_42 [1] : vector<16x16xf32> to vector<16xf32>
    %65 = vector.shape_cast %64 : vector<16xf32> to vector<16x1xf32>
    %66 = vector.broadcast %65 : vector<16x1xf32> to vector<16x16xf32>
    %67 = arith.subf %63, %66 : vector<16x16xf32>
    %68 = math.exp %67 : vector<16x16xf32>
    %cst_43 = arith.constant dense<0.000000e+00> : vector<16xf32>
    %69 = vector.multi_reduction <add>, %68, %cst_43 [1] : vector<16x16xf32> to vector<16xf32>
    %70 = vector.shape_cast %69 : vector<16xf32> to vector<16x1xf32>
    %71 = tpu.reciprocal %70 {approx = true} : vector<16x1xf32> -> vector<16x1xf32>
    %72 = vector.broadcast %71 : vector<16x1xf32> to vector<16x16xf32>
    %73 = arith.mulf %68, %72 : vector<16x16xf32>
    %cst_44 = arith.constant dense<0.000000e+00> : vector<16x8xf32>
    %74 = tpu.matmul %73, %59, %cst_44 {dimension_numbers = #tpu.dot_dimension_numbers<[1], [0], [0], [1], [0, 0, 1, 1], [], []>} : vector<16x16xf32>, vector<16x8xf32>, vector<16x8xf32> -> vector<16x8xf32>
    %75 = vector.extract_strided_slice %28 {offsets = [0, 16], sizes = [16, 8], strides = [1, 1]} : vector<16x32xf32> to vector<16x8xf32>
    %76 = vector.extract_strided_slice %33 {offsets = [0, 16], sizes = [16, 8], strides = [1, 1]} : vector<16x32xf32> to vector<16x8xf32>
    %77 = vector.extract_strided_slice %38 {offsets = [0, 16], sizes = [16, 8], strides = [1, 1]} : vector<16x32xf32> to vector<16x8xf32>
    %cst_45 = arith.constant dense<0.000000e+00> : vector<16x16xf32>
    %78 = tpu.matmul %75, %76, %cst_45 {dimension_numbers = #tpu.dot_dimension_numbers<[1], [1], [0], [0], [0, 0, 1, 0], [], []>} : vector<16x8xf32>, vector<16x8xf32>, vector<16x16xf32> -> vector<16x16xf32>
    %cst_46 = arith.constant 0.353553385 : f32
    %79 = vector.broadcast %cst_46 : f32 to vector<16x16xf32>
    %80 = arith.mulf %78, %79 : vector<16x16xf32>
    %81 = arith.addf %80, %2 : vector<16x16xf32>
    %cst_47 = arith.constant dense<0xFF800000> : vector<16xf32>
    %82 = vector.multi_reduction <maximumf>, %81, %cst_47 [1] : vector<16x16xf32> to vector<16xf32>
    %83 = vector.shape_cast %82 : vector<16xf32> to vector<16x1xf32>
    %84 = vector.broadcast %83 : vector<16x1xf32> to vector<16x16xf32>
    %85 = arith.subf %81, %84 : vector<16x16xf32>
    %86 = math.exp %85 : vector<16x16xf32>
    %cst_48 = arith.constant dense<0.000000e+00> : vector<16xf32>
    %87 = vector.multi_reduction <add>, %86, %cst_48 [1] : vector<16x16xf32> to vector<16xf32>
    %88 = vector.shape_cast %87 : vector<16xf32> to vector<16x1xf32>
    %89 = tpu.reciprocal %88 {approx = true} : vector<16x1xf32> -> vector<16x1xf32>
    %90 = vector.broadcast %89 : vector<16x1xf32> to vector<16x16xf32>
    %91 = arith.mulf %86, %90 : vector<16x16xf32>
    %cst_49 = arith.constant dense<0.000000e+00> : vector<16x8xf32>
    %92 = tpu.matmul %91, %77, %cst_49 {dimension_numbers = #tpu.dot_dimension_numbers<[1], [0], [0], [1], [0, 0, 1, 1], [], []>} : vector<16x16xf32>, vector<16x8xf32>, vector<16x8xf32> -> vector<16x8xf32>
    %93 = vector.extract_strided_slice %28 {offsets = [0, 24], sizes = [16, 8], strides = [1, 1]} : vector<16x32xf32> to vector<16x8xf32>
    %94 = vector.extract_strided_slice %33 {offsets = [0, 24], sizes = [16, 8], strides = [1, 1]} : vector<16x32xf32> to vector<16x8xf32>
    %95 = vector.extract_strided_slice %38 {offsets = [0, 24], sizes = [16, 8], strides = [1, 1]} : vector<16x32xf32> to vector<16x8xf32>
    %cst_50 = arith.constant dense<0.000000e+00> : vector<16x16xf32>
    %96 = tpu.matmul %93, %94, %cst_50 {dimension_numbers = #tpu.dot_dimension_numbers<[1], [1], [0], [0], [0, 0, 1, 0], [], []>} : vector<16x8xf32>, vector<16x8xf32>, vector<16x16xf32> -> vector<16x16xf32>
    %cst_51 = arith.constant 0.353553385 : f32
    %97 = vector.broadcast %cst_51 : f32 to vector<16x16xf32>
    %98 = arith.mulf %96, %97 : vector<16x16xf32>
    %99 = arith.addf %98, %2 : vector<16x16xf32>
    %cst_52 = arith.constant dense<0xFF800000> : vector<16xf32>
    %100 = vector.multi_reduction <maximumf>, %99, %cst_52 [1] : vector<16x16xf32> to vector<16xf32>
    %101 = vector.shape_cast %100 : vector<16xf32> to vector<16x1xf32>
    %102 = vector.broadcast %101 : vector<16x1xf32> to vector<16x16xf32>
    %103 = arith.subf %99, %102 : vector<16x16xf32>
    %104 = math.exp %103 : vector<16x16xf32>
    %cst_53 = arith.constant dense<0.000000e+00> : vector<16xf32>
    %105 = vector.multi_reduction <add>, %104, %cst_53 [1] : vector<16x16xf32> to vector<16xf32>
    %106 = vector.shape_cast %105 : vector<16xf32> to vector<16x1xf32>
    %107 = tpu.reciprocal %106 {approx = true} : vector<16x1xf32> -> vector<16x1xf32>
    %108 = vector.broadcast %107 : vector<16x1xf32> to vector<16x16xf32>
    %109 = arith.mulf %104, %108 : vector<16x16xf32>
    %cst_54 = arith.constant dense<0.000000e+00> : vector<16x8xf32>
    %110 = tpu.matmul %109, %95, %cst_54 {dimension_numbers = #tpu.dot_dimension_numbers<[1], [0], [0], [1], [0, 0, 1, 1], [], []>} : vector<16x16xf32>, vector<16x8xf32>, vector<16x8xf32> -> vector<16x8xf32>
    %111 = tpu.concatenate %56, %74, %92, %110 in 1 : vector<16x8xf32>, vector<16x8xf32>, vector<16x8xf32>, vector<16x8xf32> -> vector<16x32xf32>
    %112 = vector.extract_strided_slice %21 {offsets = [0, 96], sizes = [32, 32], strides = [1, 1]} : vector<32x128xf32> to vector<32x32xf32>
    %cst_55 = arith.constant dense<0.000000e+00> : vector<16x32xf32>
    %113 = tpu.matmul %111, %112, %cst_55 {dimension_numbers = #tpu.dot_dimension_numbers<[1], [0], [0], [1], [0, 0, 1, 1], [], []>} : vector<16x32xf32>, vector<32x32xf32>, vector<16x32xf32> -> vector<16x32xf32>
    %114 = vector.extract_strided_slice %23 {offsets = [0, 96], sizes = [1, 32], strides = [1, 1]} : vector<1x128xf32> to vector<1x32xf32>
    %115 = vector.broadcast %114 : vector<1x32xf32> to vector<16x32xf32>
    %116 = arith.addf %113, %115 : vector<16x32xf32>
    %117 = arith.addf %0, %116 : vector<16x32xf32>
    %118 = vector.extract_strided_slice %9 {offsets = [0, 0], sizes = [1, 32], strides = [1, 1]} : vector<3x32xf32> to vector<1x32xf32>
    %119 = vector.extract_strided_slice %11 {offsets = [0, 0], sizes = [1, 32], strides = [1, 1]} : vector<3x32xf32> to vector<1x32xf32>
    %cst_56 = arith.constant dense<0.000000e+00> : vector<16xf32>
    %120 = vector.multi_reduction <add>, %117, %cst_56 [1] : vector<16x32xf32> to vector<16xf32>
    %121 = vector.shape_cast %120 : vector<16xf32> to vector<16x1xf32>
    %cst_57 = arith.constant 3.200000e+01 : f32
    %122 = vector.broadcast %cst_57 : f32 to vector<16x1xf32>
    %123 = arith.divf %121, %122 : vector<16x1xf32>
    %124 = vector.broadcast %123 : vector<16x1xf32> to vector<16x32xf32>
    %125 = arith.subf %117, %124 : vector<16x32xf32>
    %126 = arith.mulf %125, %125 : vector<16x32xf32>
    %cst_58 = arith.constant dense<0.000000e+00> : vector<16xf32>
    %127 = vector.multi_reduction <add>, %126, %cst_58 [1] : vector<16x32xf32> to vector<16xf32>
    %128 = vector.shape_cast %127 : vector<16xf32> to vector<16x1xf32>
    %cst_59 = arith.constant 3.200000e+01 : f32
    %129 = vector.broadcast %cst_59 : f32 to vector<16x1xf32>
    %130 = arith.divf %128, %129 : vector<16x1xf32>
    %131 = vector.broadcast %123 : vector<16x1xf32> to vector<16x32xf32>
    %132 = arith.subf %117, %131 : vector<16x32xf32>
    %cst_60 = arith.constant 9.99999974E-6 : f32
    %133 = vector.broadcast %cst_60 : f32 to vector<16x1xf32>
    %134 = arith.addf %130, %133 : vector<16x1xf32>
    %135 = math.rsqrt %134 : vector<16x1xf32>
    %136 = vector.broadcast %135 : vector<16x1xf32> to vector<16x32xf32>
    %137 = arith.mulf %132, %136 : vector<16x32xf32>
    %138 = vector.broadcast %118 : vector<1x32xf32> to vector<16x32xf32>
    %139 = arith.mulf %137, %138 : vector<16x32xf32>
    %140 = vector.broadcast %119 : vector<1x32xf32> to vector<16x32xf32>
    %141 = arith.addf %139, %140 : vector<16x32xf32>
    %142 = vector.extract_strided_slice %5 {offsets = [1, 0, 0], sizes = [1, 32, 128], strides = [1, 1, 1]} : vector<2x32x128xf32> to vector<1x32x128xf32>
    %143 = vector.shape_cast %142 : vector<1x32x128xf32> to vector<32x128xf32>
    %144 = vector.extract_strided_slice %7 {offsets = [1, 0, 0], sizes = [1, 1, 128], strides = [1, 1, 1]} : vector<2x1x128xf32> to vector<1x1x128xf32>
    %145 = vector.shape_cast %144 : vector<1x1x128xf32> to vector<1x128xf32>
    %146 = vector.extract_strided_slice %143 {offsets = [0, 0], sizes = [32, 32], strides = [1, 1]} : vector<32x128xf32> to vector<32x32xf32>
    %cst_61 = arith.constant dense<0.000000e+00> : vector<16x32xf32>
    %147 = tpu.matmul %141, %146, %cst_61 {dimension_numbers = #tpu.dot_dimension_numbers<[1], [0], [0], [1], [0, 0, 1, 1], [], []>} : vector<16x32xf32>, vector<32x32xf32>, vector<16x32xf32> -> vector<16x32xf32>
    %148 = vector.extract_strided_slice %145 {offsets = [0, 0], sizes = [1, 32], strides = [1, 1]} : vector<1x128xf32> to vector<1x32xf32>
    %149 = vector.broadcast %148 : vector<1x32xf32> to vector<16x32xf32>
    %150 = arith.addf %147, %149 : vector<16x32xf32>
    %151 = vector.extract_strided_slice %143 {offsets = [0, 32], sizes = [32, 32], strides = [1, 1]} : vector<32x128xf32> to vector<32x32xf32>
    %cst_62 = arith.constant dense<0.000000e+00> : vector<16x32xf32>
    %152 = tpu.matmul %1, %151, %cst_62 {dimension_numbers = #tpu.dot_dimension_numbers<[1], [0], [0], [1], [0, 0, 1, 1], [], []>} : vector<16x32xf32>, vector<32x32xf32>, vector<16x32xf32> -> vector<16x32xf32>
    %153 = vector.extract_strided_slice %145 {offsets = [0, 32], sizes = [1, 32], strides = [1, 1]} : vector<1x128xf32> to vector<1x32xf32>
    %154 = vector.broadcast %153 : vector<1x32xf32> to vector<16x32xf32>
    %155 = arith.addf %152, %154 : vector<16x32xf32>
    %156 = vector.extract_strided_slice %143 {offsets = [0, 64], sizes = [32, 32], strides = [1, 1]} : vector<32x128xf32> to vector<32x32xf32>
    %cst_63 = arith.constant dense<0.000000e+00> : vector<16x32xf32>
    %157 = tpu.matmul %1, %156, %cst_63 {dimension_numbers = #tpu.dot_dimension_numbers<[1], [0], [0], [1], [0, 0, 1, 1], [], []>} : vector<16x32xf32>, vector<32x32xf32>, vector<16x32xf32> -> vector<16x32xf32>
    %158 = vector.extract_strided_slice %145 {offsets = [0, 64], sizes = [1, 32], strides = [1, 1]} : vector<1x128xf32> to vector<1x32xf32>
    %159 = vector.broadcast %158 : vector<1x32xf32> to vector<16x32xf32>
    %160 = arith.addf %157, %159 : vector<16x32xf32>
    %161 = vector.extract_strided_slice %150 {offsets = [0, 0], sizes = [16, 8], strides = [1, 1]} : vector<16x32xf32> to vector<16x8xf32>
    %162 = vector.extract_strided_slice %155 {offsets = [0, 0], sizes = [16, 8], strides = [1, 1]} : vector<16x32xf32> to vector<16x8xf32>
    %163 = vector.extract_strided_slice %160 {offsets = [0, 0], sizes = [16, 8], strides = [1, 1]} : vector<16x32xf32> to vector<16x8xf32>
    %cst_64 = arith.constant dense<0.000000e+00> : vector<16x16xf32>
    %164 = tpu.matmul %161, %162, %cst_64 {dimension_numbers = #tpu.dot_dimension_numbers<[1], [1], [0], [0], [0, 0, 1, 0], [], []>} : vector<16x8xf32>, vector<16x8xf32>, vector<16x16xf32> -> vector<16x16xf32>
    %cst_65 = arith.constant 0.353553385 : f32
    %165 = vector.broadcast %cst_65 : f32 to vector<16x16xf32>
    %166 = arith.mulf %164, %165 : vector<16x16xf32>
    %167 = arith.addf %166, %3 : vector<16x16xf32>
    %cst_66 = arith.constant dense<0xFF800000> : vector<16xf32>
    %168 = vector.multi_reduction <maximumf>, %167, %cst_66 [1] : vector<16x16xf32> to vector<16xf32>
    %169 = vector.shape_cast %168 : vector<16xf32> to vector<16x1xf32>
    %170 = vector.broadcast %169 : vector<16x1xf32> to vector<16x16xf32>
    %171 = arith.subf %167, %170 : vector<16x16xf32>
    %172 = math.exp %171 : vector<16x16xf32>
    %cst_67 = arith.constant dense<0.000000e+00> : vector<16xf32>
    %173 = vector.multi_reduction <add>, %172, %cst_67 [1] : vector<16x16xf32> to vector<16xf32>
    %174 = vector.shape_cast %173 : vector<16xf32> to vector<16x1xf32>
    %175 = tpu.reciprocal %174 {approx = true} : vector<16x1xf32> -> vector<16x1xf32>
    %176 = vector.broadcast %175 : vector<16x1xf32> to vector<16x16xf32>
    %177 = arith.mulf %172, %176 : vector<16x16xf32>
    %cst_68 = arith.constant dense<0.000000e+00> : vector<16x8xf32>
    %178 = tpu.matmul %177, %163, %cst_68 {dimension_numbers = #tpu.dot_dimension_numbers<[1], [0], [0], [1], [0, 0, 1, 1], [], []>} : vector<16x16xf32>, vector<16x8xf32>, vector<16x8xf32> -> vector<16x8xf32>
    %179 = vector.extract_strided_slice %150 {offsets = [0, 8], sizes = [16, 8], strides = [1, 1]} : vector<16x32xf32> to vector<16x8xf32>
    %180 = vector.extract_strided_slice %155 {offsets = [0, 8], sizes = [16, 8], strides = [1, 1]} : vector<16x32xf32> to vector<16x8xf32>
    %181 = vector.extract_strided_slice %160 {offsets = [0, 8], sizes = [16, 8], strides = [1, 1]} : vector<16x32xf32> to vector<16x8xf32>
    %cst_69 = arith.constant dense<0.000000e+00> : vector<16x16xf32>
    %182 = tpu.matmul %179, %180, %cst_69 {dimension_numbers = #tpu.dot_dimension_numbers<[1], [1], [0], [0], [0, 0, 1, 0], [], []>} : vector<16x8xf32>, vector<16x8xf32>, vector<16x16xf32> -> vector<16x16xf32>
    %cst_70 = arith.constant 0.353553385 : f32
    %183 = vector.broadcast %cst_70 : f32 to vector<16x16xf32>
    %184 = arith.mulf %182, %183 : vector<16x16xf32>
    %185 = arith.addf %184, %3 : vector<16x16xf32>
    %cst_71 = arith.constant dense<0xFF800000> : vector<16xf32>
    %186 = vector.multi_reduction <maximumf>, %185, %cst_71 [1] : vector<16x16xf32> to vector<16xf32>
    %187 = vector.shape_cast %186 : vector<16xf32> to vector<16x1xf32>
    %188 = vector.broadcast %187 : vector<16x1xf32> to vector<16x16xf32>
    %189 = arith.subf %185, %188 : vector<16x16xf32>
    %190 = math.exp %189 : vector<16x16xf32>
    %cst_72 = arith.constant dense<0.000000e+00> : vector<16xf32>
    %191 = vector.multi_reduction <add>, %190, %cst_72 [1] : vector<16x16xf32> to vector<16xf32>
    %192 = vector.shape_cast %191 : vector<16xf32> to vector<16x1xf32>
    %193 = tpu.reciprocal %192 {approx = true} : vector<16x1xf32> -> vector<16x1xf32>
    %194 = vector.broadcast %193 : vector<16x1xf32> to vector<16x16xf32>
    %195 = arith.mulf %190, %194 : vector<16x16xf32>
    %cst_73 = arith.constant dense<0.000000e+00> : vector<16x8xf32>
    %196 = tpu.matmul %195, %181, %cst_73 {dimension_numbers = #tpu.dot_dimension_numbers<[1], [0], [0], [1], [0, 0, 1, 1], [], []>} : vector<16x16xf32>, vector<16x8xf32>, vector<16x8xf32> -> vector<16x8xf32>
    %197 = vector.extract_strided_slice %150 {offsets = [0, 16], sizes = [16, 8], strides = [1, 1]} : vector<16x32xf32> to vector<16x8xf32>
    %198 = vector.extract_strided_slice %155 {offsets = [0, 16], sizes = [16, 8], strides = [1, 1]} : vector<16x32xf32> to vector<16x8xf32>
    %199 = vector.extract_strided_slice %160 {offsets = [0, 16], sizes = [16, 8], strides = [1, 1]} : vector<16x32xf32> to vector<16x8xf32>
    %cst_74 = arith.constant dense<0.000000e+00> : vector<16x16xf32>
    %200 = tpu.matmul %197, %198, %cst_74 {dimension_numbers = #tpu.dot_dimension_numbers<[1], [1], [0], [0], [0, 0, 1, 0], [], []>} : vector<16x8xf32>, vector<16x8xf32>, vector<16x16xf32> -> vector<16x16xf32>
    %cst_75 = arith.constant 0.353553385 : f32
    %201 = vector.broadcast %cst_75 : f32 to vector<16x16xf32>
    %202 = arith.mulf %200, %201 : vector<16x16xf32>
    %203 = arith.addf %202, %3 : vector<16x16xf32>
    %cst_76 = arith.constant dense<0xFF800000> : vector<16xf32>
    %204 = vector.multi_reduction <maximumf>, %203, %cst_76 [1] : vector<16x16xf32> to vector<16xf32>
    %205 = vector.shape_cast %204 : vector<16xf32> to vector<16x1xf32>
    %206 = vector.broadcast %205 : vector<16x1xf32> to vector<16x16xf32>
    %207 = arith.subf %203, %206 : vector<16x16xf32>
    %208 = math.exp %207 : vector<16x16xf32>
    %cst_77 = arith.constant dense<0.000000e+00> : vector<16xf32>
    %209 = vector.multi_reduction <add>, %208, %cst_77 [1] : vector<16x16xf32> to vector<16xf32>
    %210 = vector.shape_cast %209 : vector<16xf32> to vector<16x1xf32>
    %211 = tpu.reciprocal %210 {approx = true} : vector<16x1xf32> -> vector<16x1xf32>
    %212 = vector.broadcast %211 : vector<16x1xf32> to vector<16x16xf32>
    %213 = arith.mulf %208, %212 : vector<16x16xf32>
    %cst_78 = arith.constant dense<0.000000e+00> : vector<16x8xf32>
    %214 = tpu.matmul %213, %199, %cst_78 {dimension_numbers = #tpu.dot_dimension_numbers<[1], [0], [0], [1], [0, 0, 1, 1], [], []>} : vector<16x16xf32>, vector<16x8xf32>, vector<16x8xf32> -> vector<16x8xf32>
    %215 = vector.extract_strided_slice %150 {offsets = [0, 24], sizes = [16, 8], strides = [1, 1]} : vector<16x32xf32> to vector<16x8xf32>
    %216 = vector.extract_strided_slice %155 {offsets = [0, 24], sizes = [16, 8], strides = [1, 1]} : vector<16x32xf32> to vector<16x8xf32>
    %217 = vector.extract_strided_slice %160 {offsets = [0, 24], sizes = [16, 8], strides = [1, 1]} : vector<16x32xf32> to vector<16x8xf32>
    %cst_79 = arith.constant dense<0.000000e+00> : vector<16x16xf32>
    %218 = tpu.matmul %215, %216, %cst_79 {dimension_numbers = #tpu.dot_dimension_numbers<[1], [1], [0], [0], [0, 0, 1, 0], [], []>} : vector<16x8xf32>, vector<16x8xf32>, vector<16x16xf32> -> vector<16x16xf32>
    %cst_80 = arith.constant 0.353553385 : f32
    %219 = vector.broadcast %cst_80 : f32 to vector<16x16xf32>
    %220 = arith.mulf %218, %219 : vector<16x16xf32>
    %221 = arith.addf %220, %3 : vector<16x16xf32>
    %cst_81 = arith.constant dense<0xFF800000> : vector<16xf32>
    %222 = vector.multi_reduction <maximumf>, %221, %cst_81 [1] : vector<16x16xf32> to vector<16xf32>
    %223 = vector.shape_cast %222 : vector<16xf32> to vector<16x1xf32>
    %224 = vector.broadcast %223 : vector<16x1xf32> to vector<16x16xf32>
    %225 = arith.subf %221, %224 : vector<16x16xf32>
    %226 = math.exp %225 : vector<16x16xf32>
    %cst_82 = arith.constant dense<0.000000e+00> : vector<16xf32>
    %227 = vector.multi_reduction <add>, %226, %cst_82 [1] : vector<16x16xf32> to vector<16xf32>
    %228 = vector.shape_cast %227 : vector<16xf32> to vector<16x1xf32>
    %229 = tpu.reciprocal %228 {approx = true} : vector<16x1xf32> -> vector<16x1xf32>
    %230 = vector.broadcast %229 : vector<16x1xf32> to vector<16x16xf32>
    %231 = arith.mulf %226, %230 : vector<16x16xf32>
    %cst_83 = arith.constant dense<0.000000e+00> : vector<16x8xf32>
    %232 = tpu.matmul %231, %217, %cst_83 {dimension_numbers = #tpu.dot_dimension_numbers<[1], [0], [0], [1], [0, 0, 1, 1], [], []>} : vector<16x16xf32>, vector<16x8xf32>, vector<16x8xf32> -> vector<16x8xf32>
    %233 = tpu.concatenate %178, %196, %214, %232 in 1 : vector<16x8xf32>, vector<16x8xf32>, vector<16x8xf32>, vector<16x8xf32> -> vector<16x32xf32>
    %234 = vector.extract_strided_slice %143 {offsets = [0, 96], sizes = [32, 32], strides = [1, 1]} : vector<32x128xf32> to vector<32x32xf32>
    %cst_84 = arith.constant dense<0.000000e+00> : vector<16x32xf32>
    %235 = tpu.matmul %233, %234, %cst_84 {dimension_numbers = #tpu.dot_dimension_numbers<[1], [0], [0], [1], [0, 0, 1, 1], [], []>} : vector<16x32xf32>, vector<32x32xf32>, vector<16x32xf32> -> vector<16x32xf32>
    %236 = vector.extract_strided_slice %145 {offsets = [0, 96], sizes = [1, 32], strides = [1, 1]} : vector<1x128xf32> to vector<1x32xf32>
    %237 = vector.broadcast %236 : vector<1x32xf32> to vector<16x32xf32>
    %238 = arith.addf %235, %237 : vector<16x32xf32>
    %239 = arith.addf %141, %238 : vector<16x32xf32>
    %240 = vector.extract_strided_slice %9 {offsets = [1, 0], sizes = [1, 32], strides = [1, 1]} : vector<3x32xf32> to vector<1x32xf32>
    %241 = vector.extract_strided_slice %11 {offsets = [1, 0], sizes = [1, 32], strides = [1, 1]} : vector<3x32xf32> to vector<1x32xf32>
    %cst_85 = arith.constant dense<0.000000e+00> : vector<16xf32>
    %242 = vector.multi_reduction <add>, %239, %cst_85 [1] : vector<16x32xf32> to vector<16xf32>
    %243 = vector.shape_cast %242 : vector<16xf32> to vector<16x1xf32>
    %cst_86 = arith.constant 3.200000e+01 : f32
    %244 = vector.broadcast %cst_86 : f32 to vector<16x1xf32>
    %245 = arith.divf %243, %244 : vector<16x1xf32>
    %246 = vector.broadcast %245 : vector<16x1xf32> to vector<16x32xf32>
    %247 = arith.subf %239, %246 : vector<16x32xf32>
    %248 = arith.mulf %247, %247 : vector<16x32xf32>
    %cst_87 = arith.constant dense<0.000000e+00> : vector<16xf32>
    %249 = vector.multi_reduction <add>, %248, %cst_87 [1] : vector<16x32xf32> to vector<16xf32>
    %250 = vector.shape_cast %249 : vector<16xf32> to vector<16x1xf32>
    %cst_88 = arith.constant 3.200000e+01 : f32
    %251 = vector.broadcast %cst_88 : f32 to vector<16x1xf32>
    %252 = arith.divf %250, %251 : vector<16x1xf32>
    %253 = vector.broadcast %245 : vector<16x1xf32> to vector<16x32xf32>
    %254 = arith.subf %239, %253 : vector<16x32xf32>
    %cst_89 = arith.constant 9.99999974E-6 : f32
    %255 = vector.broadcast %cst_89 : f32 to vector<16x1xf32>
    %256 = arith.addf %252, %255 : vector<16x1xf32>
    %257 = math.rsqrt %256 : vector<16x1xf32>
    %258 = vector.broadcast %257 : vector<16x1xf32> to vector<16x32xf32>
    %259 = arith.mulf %254, %258 : vector<16x32xf32>
    %260 = vector.broadcast %240 : vector<1x32xf32> to vector<16x32xf32>
    %261 = arith.mulf %259, %260 : vector<16x32xf32>
    %262 = vector.broadcast %241 : vector<1x32xf32> to vector<16x32xf32>
    %263 = arith.addf %261, %262 : vector<16x32xf32>
    %cst_90 = arith.constant dense<0.000000e+00> : vector<16x64xf32>
    %264 = tpu.matmul %263, %13, %cst_90 {dimension_numbers = #tpu.dot_dimension_numbers<[1], [0], [0], [1], [0, 0, 1, 1], [], []>} : vector<16x32xf32>, vector<32x64xf32>, vector<16x64xf32> -> vector<16x64xf32>
    %265 = vector.broadcast %15 : vector<1x64xf32> to vector<16x64xf32>
    %266 = arith.addf %264, %265 : vector<16x64xf32>
    %cst_91 = arith.constant 0.000000e+00 : f32
    %267 = vector.broadcast %cst_91 : f32 to vector<16x64xf32>
    %268 = arith.maximumf %266, %267 : vector<16x64xf32>
    %cst_92 = arith.constant dense<0.000000e+00> : vector<16x32xf32>
    %269 = tpu.matmul %268, %17, %cst_92 {dimension_numbers = #tpu.dot_dimension_numbers<[1], [0], [0], [1], [0, 0, 1, 1], [], []>} : vector<16x64xf32>, vector<64x32xf32>, vector<16x32xf32> -> vector<16x32xf32>
    %270 = vector.broadcast %19 : vector<1x32xf32> to vector<16x32xf32>
    %271 = arith.addf %269, %270 : vector<16x32xf32>
    %272 = arith.addf %263, %271 : vector<16x32xf32>
    %273 = vector.extract_strided_slice %9 {offsets = [2, 0], sizes = [1, 32], strides = [1, 1]} : vector<3x32xf32> to vector<1x32xf32>
    %274 = vector.extract_strided_slice %11 {offsets = [2, 0], sizes = [1, 32], strides = [1, 1]} : vector<3x32xf32> to vector<1x32xf32>
    %cst_93 = arith.constant dense<0.000000e+00> : vector<16xf32>
    %275 = vector.multi_reduction <add>, %272, %cst_93 [1] : vector<16x32xf32> to vector<16xf32>
    %276 = vector.shape_cast %275 : vector<16xf32> to vector<16x1xf32>
    %cst_94 = arith.constant 3.200000e+01 : f32
    %277 = vector.broadcast %cst_94 : f32 to vector<16x1xf32>
    %278 = arith.divf %276, %277 : vector<16x1xf32>
    %279 = vector.broadcast %278 : vector<16x1xf32> to vector<16x32xf32>
    %280 = arith.subf %272, %279 : vector<16x32xf32>
    %281 = arith.mulf %280, %280 : vector<16x32xf32>
    %cst_95 = arith.constant dense<0.000000e+00> : vector<16xf32>
    %282 = vector.multi_reduction <add>, %281, %cst_95 [1] : vector<16x32xf32> to vector<16xf32>
    %283 = vector.shape_cast %282 : vector<16xf32> to vector<16x1xf32>
    %cst_96 = arith.constant 3.200000e+01 : f32
    %284 = vector.broadcast %cst_96 : f32 to vector<16x1xf32>
    %285 = arith.divf %283, %284 : vector<16x1xf32>
    %286 = vector.broadcast %278 : vector<16x1xf32> to vector<16x32xf32>
    %287 = arith.subf %272, %286 : vector<16x32xf32>
    %cst_97 = arith.constant 9.99999974E-6 : f32
    %288 = vector.broadcast %cst_97 : f32 to vector<16x1xf32>
    %289 = arith.addf %285, %288 : vector<16x1xf32>
    %290 = math.rsqrt %289 : vector<16x1xf32>
    %291 = vector.broadcast %290 : vector<16x1xf32> to vector<16x32xf32>
    %292 = arith.mulf %287, %291 : vector<16x32xf32>
    %293 = vector.broadcast %273 : vector<1x32xf32> to vector<16x32xf32>
    %294 = arith.mulf %292, %293 : vector<16x32xf32>
    %295 = vector.broadcast %274 : vector<1x32xf32> to vector<16x32xf32>
    %296 = arith.addf %294, %295 : vector<16x32xf32>
    %c1 = arith.constant 1 : index
    %c0_98 = arith.constant 0 : index
    %c0_99 = arith.constant 0 : index
    %c0_100 = arith.constant 0 : index
    %297 = vector.load %arg4[%c1, %c0_98, %c0_99, %c0_100] : memref<2x2x32x128xf32, #tpu.memory_space<vmem>>, vector<1x2x32x128xf32>
    %298 = vector.shape_cast %297 : vector<1x2x32x128xf32> to vector<2x32x128xf32>
    %c1_101 = arith.constant 1 : index
    %c0_102 = arith.constant 0 : index
    %c0_103 = arith.constant 0 : index
    %c0_104 = arith.constant 0 : index
    %299 = vector.load %arg5[%c1_101, %c0_102, %c0_103, %c0_104] : memref<2x2x1x128xf32, #tpu.memory_space<vmem>>, vector<1x2x1x128xf32>
    %300 = vector.shape_cast %299 : vector<1x2x1x128xf32> to vector<2x1x128xf32>
    %c1_105 = arith.constant 1 : index
    %c0_106 = arith.constant 0 : index
    %c0_107 = arith.constant 0 : index
    %301 = vector.load %arg6[%c1_105, %c0_106, %c0_107] : memref<2x3x32xf32, #tpu.memory_space<vmem>>, vector<1x3x32xf32>
    %302 = vector.shape_cast %301 : vector<1x3x32xf32> to vector<3x32xf32>
    %c1_108 = arith.constant 1 : index
    %c0_109 = arith.constant 0 : index
    %c0_110 = arith.constant 0 : index
    %303 = vector.load %arg7[%c1_108, %c0_109, %c0_110] : memref<2x3x32xf32, #tpu.memory_space<vmem>>, vector<1x3x32xf32>
    %304 = vector.shape_cast %303 : vector<1x3x32xf32> to vector<3x32xf32>
    %c1_111 = arith.constant 1 : index
    %c0_112 = arith.constant 0 : index
    %c0_113 = arith.constant 0 : index
    %305 = vector.load %arg8[%c1_111, %c0_112, %c0_113] : memref<2x32x64xf32, #tpu.memory_space<vmem>>, vector<1x32x64xf32>
    %306 = vector.shape_cast %305 : vector<1x32x64xf32> to vector<32x64xf32>
    %c1_114 = arith.constant 1 : index
    %c0_115 = arith.constant 0 : index
    %c0_116 = arith.constant 0 : index
    %307 = vector.load %arg9[%c1_114, %c0_115, %c0_116] : memref<2x1x64xf32, #tpu.memory_space<vmem>>, vector<1x1x64xf32>
    %308 = vector.shape_cast %307 : vector<1x1x64xf32> to vector<1x64xf32>
    %c1_117 = arith.constant 1 : index
    %c0_118 = arith.constant 0 : index
    %c0_119 = arith.constant 0 : index
    %309 = vector.load %arg10[%c1_117, %c0_118, %c0_119] : memref<2x64x32xf32, #tpu.memory_space<vmem>>, vector<1x64x32xf32>
    %310 = vector.shape_cast %309 : vector<1x64x32xf32> to vector<64x32xf32>
    %c1_120 = arith.constant 1 : index
    %c0_121 = arith.constant 0 : index
    %c0_122 = arith.constant 0 : index
    %311 = vector.load %arg11[%c1_120, %c0_121, %c0_122] : memref<2x1x32xf32, #tpu.memory_space<vmem>>, vector<1x1x32xf32>
    %312 = vector.shape_cast %311 : vector<1x1x32xf32> to vector<1x32xf32>
    %313 = vector.extract_strided_slice %298 {offsets = [0, 0, 0], sizes = [1, 32, 128], strides = [1, 1, 1]} : vector<2x32x128xf32> to vector<1x32x128xf32>
    %314 = vector.shape_cast %313 : vector<1x32x128xf32> to vector<32x128xf32>
    %315 = vector.extract_strided_slice %300 {offsets = [0, 0, 0], sizes = [1, 1, 128], strides = [1, 1, 1]} : vector<2x1x128xf32> to vector<1x1x128xf32>
    %316 = vector.shape_cast %315 : vector<1x1x128xf32> to vector<1x128xf32>
    %317 = vector.extract_strided_slice %314 {offsets = [0, 0], sizes = [32, 32], strides = [1, 1]} : vector<32x128xf32> to vector<32x32xf32>
    %cst_123 = arith.constant dense<0.000000e+00> : vector<16x32xf32>
    %318 = tpu.matmul %296, %317, %cst_123 {dimension_numbers = #tpu.dot_dimension_numbers<[1], [0], [0], [1], [0, 0, 1, 1], [], []>} : vector<16x32xf32>, vector<32x32xf32>, vector<16x32xf32> -> vector<16x32xf32>
    %319 = vector.extract_strided_slice %316 {offsets = [0, 0], sizes = [1, 32], strides = [1, 1]} : vector<1x128xf32> to vector<1x32xf32>
    %320 = vector.broadcast %319 : vector<1x32xf32> to vector<16x32xf32>
    %321 = arith.addf %318, %320 : vector<16x32xf32>
    %322 = vector.extract_strided_slice %314 {offsets = [0, 32], sizes = [32, 32], strides = [1, 1]} : vector<32x128xf32> to vector<32x32xf32>
    %cst_124 = arith.constant dense<0.000000e+00> : vector<16x32xf32>
    %323 = tpu.matmul %296, %322, %cst_124 {dimension_numbers = #tpu.dot_dimension_numbers<[1], [0], [0], [1], [0, 0, 1, 1], [], []>} : vector<16x32xf32>, vector<32x32xf32>, vector<16x32xf32> -> vector<16x32xf32>
    %324 = vector.extract_strided_slice %316 {offsets = [0, 32], sizes = [1, 32], strides = [1, 1]} : vector<1x128xf32> to vector<1x32xf32>
    %325 = vector.broadcast %324 : vector<1x32xf32> to vector<16x32xf32>
    %326 = arith.addf %323, %325 : vector<16x32xf32>
    %327 = vector.extract_strided_slice %314 {offsets = [0, 64], sizes = [32, 32], strides = [1, 1]} : vector<32x128xf32> to vector<32x32xf32>
    %cst_125 = arith.constant dense<0.000000e+00> : vector<16x32xf32>
    %328 = tpu.matmul %296, %327, %cst_125 {dimension_numbers = #tpu.dot_dimension_numbers<[1], [0], [0], [1], [0, 0, 1, 1], [], []>} : vector<16x32xf32>, vector<32x32xf32>, vector<16x32xf32> -> vector<16x32xf32>
    %329 = vector.extract_strided_slice %316 {offsets = [0, 64], sizes = [1, 32], strides = [1, 1]} : vector<1x128xf32> to vector<1x32xf32>
    %330 = vector.broadcast %329 : vector<1x32xf32> to vector<16x32xf32>
    %331 = arith.addf %328, %330 : vector<16x32xf32>
    %332 = vector.extract_strided_slice %321 {offsets = [0, 0], sizes = [16, 8], strides = [1, 1]} : vector<16x32xf32> to vector<16x8xf32>
    %333 = vector.extract_strided_slice %326 {offsets = [0, 0], sizes = [16, 8], strides = [1, 1]} : vector<16x32xf32> to vector<16x8xf32>
    %334 = vector.extract_strided_slice %331 {offsets = [0, 0], sizes = [16, 8], strides = [1, 1]} : vector<16x32xf32> to vector<16x8xf32>
    %cst_126 = arith.constant dense<0.000000e+00> : vector<16x16xf32>
    %335 = tpu.matmul %332, %333, %cst_126 {dimension_numbers = #tpu.dot_dimension_numbers<[1], [1], [0], [0], [0, 0, 1, 0], [], []>} : vector<16x8xf32>, vector<16x8xf32>, vector<16x16xf32> -> vector<16x16xf32>
    %cst_127 = arith.constant 0.353553385 : f32
    %336 = vector.broadcast %cst_127 : f32 to vector<16x16xf32>
    %337 = arith.mulf %335, %336 : vector<16x16xf32>
    %338 = arith.addf %337, %2 : vector<16x16xf32>
    %cst_128 = arith.constant dense<0xFF800000> : vector<16xf32>
    %339 = vector.multi_reduction <maximumf>, %338, %cst_128 [1] : vector<16x16xf32> to vector<16xf32>
    %340 = vector.shape_cast %339 : vector<16xf32> to vector<16x1xf32>
    %341 = vector.broadcast %340 : vector<16x1xf32> to vector<16x16xf32>
    %342 = arith.subf %338, %341 : vector<16x16xf32>
    %343 = math.exp %342 : vector<16x16xf32>
    %cst_129 = arith.constant dense<0.000000e+00> : vector<16xf32>
    %344 = vector.multi_reduction <add>, %343, %cst_129 [1] : vector<16x16xf32> to vector<16xf32>
    %345 = vector.shape_cast %344 : vector<16xf32> to vector<16x1xf32>
    %346 = tpu.reciprocal %345 {approx = true} : vector<16x1xf32> -> vector<16x1xf32>
    %347 = vector.broadcast %346 : vector<16x1xf32> to vector<16x16xf32>
    %348 = arith.mulf %343, %347 : vector<16x16xf32>
    %cst_130 = arith.constant dense<0.000000e+00> : vector<16x8xf32>
    %349 = tpu.matmul %348, %334, %cst_130 {dimension_numbers = #tpu.dot_dimension_numbers<[1], [0], [0], [1], [0, 0, 1, 1], [], []>} : vector<16x16xf32>, vector<16x8xf32>, vector<16x8xf32> -> vector<16x8xf32>
    %350 = vector.extract_strided_slice %321 {offsets = [0, 8], sizes = [16, 8], strides = [1, 1]} : vector<16x32xf32> to vector<16x8xf32>
    %351 = vector.extract_strided_slice %326 {offsets = [0, 8], sizes = [16, 8], strides = [1, 1]} : vector<16x32xf32> to vector<16x8xf32>
    %352 = vector.extract_strided_slice %331 {offsets = [0, 8], sizes = [16, 8], strides = [1, 1]} : vector<16x32xf32> to vector<16x8xf32>
    %cst_131 = arith.constant dense<0.000000e+00> : vector<16x16xf32>
    %353 = tpu.matmul %350, %351, %cst_131 {dimension_numbers = #tpu.dot_dimension_numbers<[1], [1], [0], [0], [0, 0, 1, 0], [], []>} : vector<16x8xf32>, vector<16x8xf32>, vector<16x16xf32> -> vector<16x16xf32>
    %cst_132 = arith.constant 0.353553385 : f32
    %354 = vector.broadcast %cst_132 : f32 to vector<16x16xf32>
    %355 = arith.mulf %353, %354 : vector<16x16xf32>
    %356 = arith.addf %355, %2 : vector<16x16xf32>
    %cst_133 = arith.constant dense<0xFF800000> : vector<16xf32>
    %357 = vector.multi_reduction <maximumf>, %356, %cst_133 [1] : vector<16x16xf32> to vector<16xf32>
    %358 = vector.shape_cast %357 : vector<16xf32> to vector<16x1xf32>
    %359 = vector.broadcast %358 : vector<16x1xf32> to vector<16x16xf32>
    %360 = arith.subf %356, %359 : vector<16x16xf32>
    %361 = math.exp %360 : vector<16x16xf32>
    %cst_134 = arith.constant dense<0.000000e+00> : vector<16xf32>
    %362 = vector.multi_reduction <add>, %361, %cst_134 [1] : vector<16x16xf32> to vector<16xf32>
    %363 = vector.shape_cast %362 : vector<16xf32> to vector<16x1xf32>
    %364 = tpu.reciprocal %363 {approx = true} : vector<16x1xf32> -> vector<16x1xf32>
    %365 = vector.broadcast %364 : vector<16x1xf32> to vector<16x16xf32>
    %366 = arith.mulf %361, %365 : vector<16x16xf32>
    %cst_135 = arith.constant dense<0.000000e+00> : vector<16x8xf32>
    %367 = tpu.matmul %366, %352, %cst_135 {dimension_numbers = #tpu.dot_dimension_numbers<[1], [0], [0], [1], [0, 0, 1, 1], [], []>} : vector<16x16xf32>, vector<16x8xf32>, vector<16x8xf32> -> vector<16x8xf32>
    %368 = vector.extract_strided_slice %321 {offsets = [0, 16], sizes = [16, 8], strides = [1, 1]} : vector<16x32xf32> to vector<16x8xf32>
    %369 = vector.extract_strided_slice %326 {offsets = [0, 16], sizes = [16, 8], strides = [1, 1]} : vector<16x32xf32> to vector<16x8xf32>
    %370 = vector.extract_strided_slice %331 {offsets = [0, 16], sizes = [16, 8], strides = [1, 1]} : vector<16x32xf32> to vector<16x8xf32>
    %cst_136 = arith.constant dense<0.000000e+00> : vector<16x16xf32>
    %371 = tpu.matmul %368, %369, %cst_136 {dimension_numbers = #tpu.dot_dimension_numbers<[1], [1], [0], [0], [0, 0, 1, 0], [], []>} : vector<16x8xf32>, vector<16x8xf32>, vector<16x16xf32> -> vector<16x16xf32>
    %cst_137 = arith.constant 0.353553385 : f32
    %372 = vector.broadcast %cst_137 : f32 to vector<16x16xf32>
    %373 = arith.mulf %371, %372 : vector<16x16xf32>
    %374 = arith.addf %373, %2 : vector<16x16xf32>
    %cst_138 = arith.constant dense<0xFF800000> : vector<16xf32>
    %375 = vector.multi_reduction <maximumf>, %374, %cst_138 [1] : vector<16x16xf32> to vector<16xf32>
    %376 = vector.shape_cast %375 : vector<16xf32> to vector<16x1xf32>
    %377 = vector.broadcast %376 : vector<16x1xf32> to vector<16x16xf32>
    %378 = arith.subf %374, %377 : vector<16x16xf32>
    %379 = math.exp %378 : vector<16x16xf32>
    %cst_139 = arith.constant dense<0.000000e+00> : vector<16xf32>
    %380 = vector.multi_reduction <add>, %379, %cst_139 [1] : vector<16x16xf32> to vector<16xf32>
    %381 = vector.shape_cast %380 : vector<16xf32> to vector<16x1xf32>
    %382 = tpu.reciprocal %381 {approx = true} : vector<16x1xf32> -> vector<16x1xf32>
    %383 = vector.broadcast %382 : vector<16x1xf32> to vector<16x16xf32>
    %384 = arith.mulf %379, %383 : vector<16x16xf32>
    %cst_140 = arith.constant dense<0.000000e+00> : vector<16x8xf32>
    %385 = tpu.matmul %384, %370, %cst_140 {dimension_numbers = #tpu.dot_dimension_numbers<[1], [0], [0], [1], [0, 0, 1, 1], [], []>} : vector<16x16xf32>, vector<16x8xf32>, vector<16x8xf32> -> vector<16x8xf32>
    %386 = vector.extract_strided_slice %321 {offsets = [0, 24], sizes = [16, 8], strides = [1, 1]} : vector<16x32xf32> to vector<16x8xf32>
    %387 = vector.extract_strided_slice %326 {offsets = [0, 24], sizes = [16, 8], strides = [1, 1]} : vector<16x32xf32> to vector<16x8xf32>
    %388 = vector.extract_strided_slice %331 {offsets = [0, 24], sizes = [16, 8], strides = [1, 1]} : vector<16x32xf32> to vector<16x8xf32>
    %cst_141 = arith.constant dense<0.000000e+00> : vector<16x16xf32>
    %389 = tpu.matmul %386, %387, %cst_141 {dimension_numbers = #tpu.dot_dimension_numbers<[1], [1], [0], [0], [0, 0, 1, 0], [], []>} : vector<16x8xf32>, vector<16x8xf32>, vector<16x16xf32> -> vector<16x16xf32>
    %cst_142 = arith.constant 0.353553385 : f32
    %390 = vector.broadcast %cst_142 : f32 to vector<16x16xf32>
    %391 = arith.mulf %389, %390 : vector<16x16xf32>
    %392 = arith.addf %391, %2 : vector<16x16xf32>
    %cst_143 = arith.constant dense<0xFF800000> : vector<16xf32>
    %393 = vector.multi_reduction <maximumf>, %392, %cst_143 [1] : vector<16x16xf32> to vector<16xf32>
    %394 = vector.shape_cast %393 : vector<16xf32> to vector<16x1xf32>
    %395 = vector.broadcast %394 : vector<16x1xf32> to vector<16x16xf32>
    %396 = arith.subf %392, %395 : vector<16x16xf32>
    %397 = math.exp %396 : vector<16x16xf32>
    %cst_144 = arith.constant dense<0.000000e+00> : vector<16xf32>
    %398 = vector.multi_reduction <add>, %397, %cst_144 [1] : vector<16x16xf32> to vector<16xf32>
    %399 = vector.shape_cast %398 : vector<16xf32> to vector<16x1xf32>
    %400 = tpu.reciprocal %399 {approx = true} : vector<16x1xf32> -> vector<16x1xf32>
    %401 = vector.broadcast %400 : vector<16x1xf32> to vector<16x16xf32>
    %402 = arith.mulf %397, %401 : vector<16x16xf32>
    %cst_145 = arith.constant dense<0.000000e+00> : vector<16x8xf32>
    %403 = tpu.matmul %402, %388, %cst_145 {dimension_numbers = #tpu.dot_dimension_numbers<[1], [0], [0], [1], [0, 0, 1, 1], [], []>} : vector<16x16xf32>, vector<16x8xf32>, vector<16x8xf32> -> vector<16x8xf32>
    %404 = tpu.concatenate %349, %367, %385, %403 in 1 : vector<16x8xf32>, vector<16x8xf32>, vector<16x8xf32>, vector<16x8xf32> -> vector<16x32xf32>
    %405 = vector.extract_strided_slice %314 {offsets = [0, 96], sizes = [32, 32], strides = [1, 1]} : vector<32x128xf32> to vector<32x32xf32>
    %cst_146 = arith.constant dense<0.000000e+00> : vector<16x32xf32>
    %406 = tpu.matmul %404, %405, %cst_146 {dimension_numbers = #tpu.dot_dimension_numbers<[1], [0], [0], [1], [0, 0, 1, 1], [], []>} : vector<16x32xf32>, vector<32x32xf32>, vector<16x32xf32> -> vector<16x32xf32>
    %407 = vector.extract_strided_slice %316 {offsets = [0, 96], sizes = [1, 32], strides = [1, 1]} : vector<1x128xf32> to vector<1x32xf32>
    %408 = vector.broadcast %407 : vector<1x32xf32> to vector<16x32xf32>
    %409 = arith.addf %406, %408 : vector<16x32xf32>
    %410 = arith.addf %296, %409 : vector<16x32xf32>
    %411 = vector.extract_strided_slice %302 {offsets = [0, 0], sizes = [1, 32], strides = [1, 1]} : vector<3x32xf32> to vector<1x32xf32>
    %412 = vector.extract_strided_slice %304 {offsets = [0, 0], sizes = [1, 32], strides = [1, 1]} : vector<3x32xf32> to vector<1x32xf32>
    %cst_147 = arith.constant dense<0.000000e+00> : vector<16xf32>
    %413 = vector.multi_reduction <add>, %410, %cst_147 [1] : vector<16x32xf32> to vector<16xf32>
    %414 = vector.shape_cast %413 : vector<16xf32> to vector<16x1xf32>
    %cst_148 = arith.constant 3.200000e+01 : f32
    %415 = vector.broadcast %cst_148 : f32 to vector<16x1xf32>
    %416 = arith.divf %414, %415 : vector<16x1xf32>
    %417 = vector.broadcast %416 : vector<16x1xf32> to vector<16x32xf32>
    %418 = arith.subf %410, %417 : vector<16x32xf32>
    %419 = arith.mulf %418, %418 : vector<16x32xf32>
    %cst_149 = arith.constant dense<0.000000e+00> : vector<16xf32>
    %420 = vector.multi_reduction <add>, %419, %cst_149 [1] : vector<16x32xf32> to vector<16xf32>
    %421 = vector.shape_cast %420 : vector<16xf32> to vector<16x1xf32>
    %cst_150 = arith.constant 3.200000e+01 : f32
    %422 = vector.broadcast %cst_150 : f32 to vector<16x1xf32>
    %423 = arith.divf %421, %422 : vector<16x1xf32>
    %424 = vector.broadcast %416 : vector<16x1xf32> to vector<16x32xf32>
    %425 = arith.subf %410, %424 : vector<16x32xf32>
    %cst_151 = arith.constant 9.99999974E-6 : f32
    %426 = vector.broadcast %cst_151 : f32 to vector<16x1xf32>
    %427 = arith.addf %423, %426 : vector<16x1xf32>
    %428 = math.rsqrt %427 : vector<16x1xf32>
    %429 = vector.broadcast %428 : vector<16x1xf32> to vector<16x32xf32>
    %430 = arith.mulf %425, %429 : vector<16x32xf32>
    %431 = vector.broadcast %411 : vector<1x32xf32> to vector<16x32xf32>
    %432 = arith.mulf %430, %431 : vector<16x32xf32>
    %433 = vector.broadcast %412 : vector<1x32xf32> to vector<16x32xf32>
    %434 = arith.addf %432, %433 : vector<16x32xf32>
    %435 = vector.extract_strided_slice %298 {offsets = [1, 0, 0], sizes = [1, 32, 128], strides = [1, 1, 1]} : vector<2x32x128xf32> to vector<1x32x128xf32>
    %436 = vector.shape_cast %435 : vector<1x32x128xf32> to vector<32x128xf32>
    %437 = vector.extract_strided_slice %300 {offsets = [1, 0, 0], sizes = [1, 1, 128], strides = [1, 1, 1]} : vector<2x1x128xf32> to vector<1x1x128xf32>
    %438 = vector.shape_cast %437 : vector<1x1x128xf32> to vector<1x128xf32>
    %439 = vector.extract_strided_slice %436 {offsets = [0, 0], sizes = [32, 32], strides = [1, 1]} : vector<32x128xf32> to vector<32x32xf32>
    %cst_152 = arith.constant dense<0.000000e+00> : vector<16x32xf32>
    %440 = tpu.matmul %434, %439, %cst_152 {dimension_numbers = #tpu.dot_dimension_numbers<[1], [0], [0], [1], [0, 0, 1, 1], [], []>} : vector<16x32xf32>, vector<32x32xf32>, vector<16x32xf32> -> vector<16x32xf32>
    %441 = vector.extract_strided_slice %438 {offsets = [0, 0], sizes = [1, 32], strides = [1, 1]} : vector<1x128xf32> to vector<1x32xf32>
    %442 = vector.broadcast %441 : vector<1x32xf32> to vector<16x32xf32>
    %443 = arith.addf %440, %442 : vector<16x32xf32>
    %444 = vector.extract_strided_slice %436 {offsets = [0, 32], sizes = [32, 32], strides = [1, 1]} : vector<32x128xf32> to vector<32x32xf32>
    %cst_153 = arith.constant dense<0.000000e+00> : vector<16x32xf32>
    %445 = tpu.matmul %1, %444, %cst_153 {dimension_numbers = #tpu.dot_dimension_numbers<[1], [0], [0], [1], [0, 0, 1, 1], [], []>} : vector<16x32xf32>, vector<32x32xf32>, vector<16x32xf32> -> vector<16x32xf32>
    %446 = vector.extract_strided_slice %438 {offsets = [0, 32], sizes = [1, 32], strides = [1, 1]} : vector<1x128xf32> to vector<1x32xf32>
    %447 = vector.broadcast %446 : vector<1x32xf32> to vector<16x32xf32>
    %448 = arith.addf %445, %447 : vector<16x32xf32>
    %449 = vector.extract_strided_slice %436 {offsets = [0, 64], sizes = [32, 32], strides = [1, 1]} : vector<32x128xf32> to vector<32x32xf32>
    %cst_154 = arith.constant dense<0.000000e+00> : vector<16x32xf32>
    %450 = tpu.matmul %1, %449, %cst_154 {dimension_numbers = #tpu.dot_dimension_numbers<[1], [0], [0], [1], [0, 0, 1, 1], [], []>} : vector<16x32xf32>, vector<32x32xf32>, vector<16x32xf32> -> vector<16x32xf32>
    %451 = vector.extract_strided_slice %438 {offsets = [0, 64], sizes = [1, 32], strides = [1, 1]} : vector<1x128xf32> to vector<1x32xf32>
    %452 = vector.broadcast %451 : vector<1x32xf32> to vector<16x32xf32>
    %453 = arith.addf %450, %452 : vector<16x32xf32>
    %454 = vector.extract_strided_slice %443 {offsets = [0, 0], sizes = [16, 8], strides = [1, 1]} : vector<16x32xf32> to vector<16x8xf32>
    %455 = vector.extract_strided_slice %448 {offsets = [0, 0], sizes = [16, 8], strides = [1, 1]} : vector<16x32xf32> to vector<16x8xf32>
    %456 = vector.extract_strided_slice %453 {offsets = [0, 0], sizes = [16, 8], strides = [1, 1]} : vector<16x32xf32> to vector<16x8xf32>
    %cst_155 = arith.constant dense<0.000000e+00> : vector<16x16xf32>
    %457 = tpu.matmul %454, %455, %cst_155 {dimension_numbers = #tpu.dot_dimension_numbers<[1], [1], [0], [0], [0, 0, 1, 0], [], []>} : vector<16x8xf32>, vector<16x8xf32>, vector<16x16xf32> -> vector<16x16xf32>
    %cst_156 = arith.constant 0.353553385 : f32
    %458 = vector.broadcast %cst_156 : f32 to vector<16x16xf32>
    %459 = arith.mulf %457, %458 : vector<16x16xf32>
    %460 = arith.addf %459, %3 : vector<16x16xf32>
    %cst_157 = arith.constant dense<0xFF800000> : vector<16xf32>
    %461 = vector.multi_reduction <maximumf>, %460, %cst_157 [1] : vector<16x16xf32> to vector<16xf32>
    %462 = vector.shape_cast %461 : vector<16xf32> to vector<16x1xf32>
    %463 = vector.broadcast %462 : vector<16x1xf32> to vector<16x16xf32>
    %464 = arith.subf %460, %463 : vector<16x16xf32>
    %465 = math.exp %464 : vector<16x16xf32>
    %cst_158 = arith.constant dense<0.000000e+00> : vector<16xf32>
    %466 = vector.multi_reduction <add>, %465, %cst_158 [1] : vector<16x16xf32> to vector<16xf32>
    %467 = vector.shape_cast %466 : vector<16xf32> to vector<16x1xf32>
    %468 = tpu.reciprocal %467 {approx = true} : vector<16x1xf32> -> vector<16x1xf32>
    %469 = vector.broadcast %468 : vector<16x1xf32> to vector<16x16xf32>
    %470 = arith.mulf %465, %469 : vector<16x16xf32>
    %cst_159 = arith.constant dense<0.000000e+00> : vector<16x8xf32>
    %471 = tpu.matmul %470, %456, %cst_159 {dimension_numbers = #tpu.dot_dimension_numbers<[1], [0], [0], [1], [0, 0, 1, 1], [], []>} : vector<16x16xf32>, vector<16x8xf32>, vector<16x8xf32> -> vector<16x8xf32>
    %472 = vector.extract_strided_slice %443 {offsets = [0, 8], sizes = [16, 8], strides = [1, 1]} : vector<16x32xf32> to vector<16x8xf32>
    %473 = vector.extract_strided_slice %448 {offsets = [0, 8], sizes = [16, 8], strides = [1, 1]} : vector<16x32xf32> to vector<16x8xf32>
    %474 = vector.extract_strided_slice %453 {offsets = [0, 8], sizes = [16, 8], strides = [1, 1]} : vector<16x32xf32> to vector<16x8xf32>
    %cst_160 = arith.constant dense<0.000000e+00> : vector<16x16xf32>
    %475 = tpu.matmul %472, %473, %cst_160 {dimension_numbers = #tpu.dot_dimension_numbers<[1], [1], [0], [0], [0, 0, 1, 0], [], []>} : vector<16x8xf32>, vector<16x8xf32>, vector<16x16xf32> -> vector<16x16xf32>
    %cst_161 = arith.constant 0.353553385 : f32
    %476 = vector.broadcast %cst_161 : f32 to vector<16x16xf32>
    %477 = arith.mulf %475, %476 : vector<16x16xf32>
    %478 = arith.addf %477, %3 : vector<16x16xf32>
    %cst_162 = arith.constant dense<0xFF800000> : vector<16xf32>
    %479 = vector.multi_reduction <maximumf>, %478, %cst_162 [1] : vector<16x16xf32> to vector<16xf32>
    %480 = vector.shape_cast %479 : vector<16xf32> to vector<16x1xf32>
    %481 = vector.broadcast %480 : vector<16x1xf32> to vector<16x16xf32>
    %482 = arith.subf %478, %481 : vector<16x16xf32>
    %483 = math.exp %482 : vector<16x16xf32>
    %cst_163 = arith.constant dense<0.000000e+00> : vector<16xf32>
    %484 = vector.multi_reduction <add>, %483, %cst_163 [1] : vector<16x16xf32> to vector<16xf32>
    %485 = vector.shape_cast %484 : vector<16xf32> to vector<16x1xf32>
    %486 = tpu.reciprocal %485 {approx = true} : vector<16x1xf32> -> vector<16x1xf32>
    %487 = vector.broadcast %486 : vector<16x1xf32> to vector<16x16xf32>
    %488 = arith.mulf %483, %487 : vector<16x16xf32>
    %cst_164 = arith.constant dense<0.000000e+00> : vector<16x8xf32>
    %489 = tpu.matmul %488, %474, %cst_164 {dimension_numbers = #tpu.dot_dimension_numbers<[1], [0], [0], [1], [0, 0, 1, 1], [], []>} : vector<16x16xf32>, vector<16x8xf32>, vector<16x8xf32> -> vector<16x8xf32>
    %490 = vector.extract_strided_slice %443 {offsets = [0, 16], sizes = [16, 8], strides = [1, 1]} : vector<16x32xf32> to vector<16x8xf32>
    %491 = vector.extract_strided_slice %448 {offsets = [0, 16], sizes = [16, 8], strides = [1, 1]} : vector<16x32xf32> to vector<16x8xf32>
    %492 = vector.extract_strided_slice %453 {offsets = [0, 16], sizes = [16, 8], strides = [1, 1]} : vector<16x32xf32> to vector<16x8xf32>
    %cst_165 = arith.constant dense<0.000000e+00> : vector<16x16xf32>
    %493 = tpu.matmul %490, %491, %cst_165 {dimension_numbers = #tpu.dot_dimension_numbers<[1], [1], [0], [0], [0, 0, 1, 0], [], []>} : vector<16x8xf32>, vector<16x8xf32>, vector<16x16xf32> -> vector<16x16xf32>
    %cst_166 = arith.constant 0.353553385 : f32
    %494 = vector.broadcast %cst_166 : f32 to vector<16x16xf32>
    %495 = arith.mulf %493, %494 : vector<16x16xf32>
    %496 = arith.addf %495, %3 : vector<16x16xf32>
    %cst_167 = arith.constant dense<0xFF800000> : vector<16xf32>
    %497 = vector.multi_reduction <maximumf>, %496, %cst_167 [1] : vector<16x16xf32> to vector<16xf32>
    %498 = vector.shape_cast %497 : vector<16xf32> to vector<16x1xf32>
    %499 = vector.broadcast %498 : vector<16x1xf32> to vector<16x16xf32>
    %500 = arith.subf %496, %499 : vector<16x16xf32>
    %501 = math.exp %500 : vector<16x16xf32>
    %cst_168 = arith.constant dense<0.000000e+00> : vector<16xf32>
    %502 = vector.multi_reduction <add>, %501, %cst_168 [1] : vector<16x16xf32> to vector<16xf32>
    %503 = vector.shape_cast %502 : vector<16xf32> to vector<16x1xf32>
    %504 = tpu.reciprocal %503 {approx = true} : vector<16x1xf32> -> vector<16x1xf32>
    %505 = vector.broadcast %504 : vector<16x1xf32> to vector<16x16xf32>
    %506 = arith.mulf %501, %505 : vector<16x16xf32>
    %cst_169 = arith.constant dense<0.000000e+00> : vector<16x8xf32>
    %507 = tpu.matmul %506, %492, %cst_169 {dimension_numbers = #tpu.dot_dimension_numbers<[1], [0], [0], [1], [0, 0, 1, 1], [], []>} : vector<16x16xf32>, vector<16x8xf32>, vector<16x8xf32> -> vector<16x8xf32>
    %508 = vector.extract_strided_slice %443 {offsets = [0, 24], sizes = [16, 8], strides = [1, 1]} : vector<16x32xf32> to vector<16x8xf32>
    %509 = vector.extract_strided_slice %448 {offsets = [0, 24], sizes = [16, 8], strides = [1, 1]} : vector<16x32xf32> to vector<16x8xf32>
    %510 = vector.extract_strided_slice %453 {offsets = [0, 24], sizes = [16, 8], strides = [1, 1]} : vector<16x32xf32> to vector<16x8xf32>
    %cst_170 = arith.constant dense<0.000000e+00> : vector<16x16xf32>
    %511 = tpu.matmul %508, %509, %cst_170 {dimension_numbers = #tpu.dot_dimension_numbers<[1], [1], [0], [0], [0, 0, 1, 0], [], []>} : vector<16x8xf32>, vector<16x8xf32>, vector<16x16xf32> -> vector<16x16xf32>
    %cst_171 = arith.constant 0.353553385 : f32
    %512 = vector.broadcast %cst_171 : f32 to vector<16x16xf32>
    %513 = arith.mulf %511, %512 : vector<16x16xf32>
    %514 = arith.addf %513, %3 : vector<16x16xf32>
    %cst_172 = arith.constant dense<0xFF800000> : vector<16xf32>
    %515 = vector.multi_reduction <maximumf>, %514, %cst_172 [1] : vector<16x16xf32> to vector<16xf32>
    %516 = vector.shape_cast %515 : vector<16xf32> to vector<16x1xf32>
    %517 = vector.broadcast %516 : vector<16x1xf32> to vector<16x16xf32>
    %518 = arith.subf %514, %517 : vector<16x16xf32>
    %519 = math.exp %518 : vector<16x16xf32>
    %cst_173 = arith.constant dense<0.000000e+00> : vector<16xf32>
    %520 = vector.multi_reduction <add>, %519, %cst_173 [1] : vector<16x16xf32> to vector<16xf32>
    %521 = vector.shape_cast %520 : vector<16xf32> to vector<16x1xf32>
    %522 = tpu.reciprocal %521 {approx = true} : vector<16x1xf32> -> vector<16x1xf32>
    %523 = vector.broadcast %522 : vector<16x1xf32> to vector<16x16xf32>
    %524 = arith.mulf %519, %523 : vector<16x16xf32>
    %cst_174 = arith.constant dense<0.000000e+00> : vector<16x8xf32>
    %525 = tpu.matmul %524, %510, %cst_174 {dimension_numbers = #tpu.dot_dimension_numbers<[1], [0], [0], [1], [0, 0, 1, 1], [], []>} : vector<16x16xf32>, vector<16x8xf32>, vector<16x8xf32> -> vector<16x8xf32>
    %526 = tpu.concatenate %471, %489, %507, %525 in 1 : vector<16x8xf32>, vector<16x8xf32>, vector<16x8xf32>, vector<16x8xf32> -> vector<16x32xf32>
    %527 = vector.extract_strided_slice %436 {offsets = [0, 96], sizes = [32, 32], strides = [1, 1]} : vector<32x128xf32> to vector<32x32xf32>
    %cst_175 = arith.constant dense<0.000000e+00> : vector<16x32xf32>
    %528 = tpu.matmul %526, %527, %cst_175 {dimension_numbers = #tpu.dot_dimension_numbers<[1], [0], [0], [1], [0, 0, 1, 1], [], []>} : vector<16x32xf32>, vector<32x32xf32>, vector<16x32xf32> -> vector<16x32xf32>
    %529 = vector.extract_strided_slice %438 {offsets = [0, 96], sizes = [1, 32], strides = [1, 1]} : vector<1x128xf32> to vector<1x32xf32>
    %530 = vector.broadcast %529 : vector<1x32xf32> to vector<16x32xf32>
    %531 = arith.addf %528, %530 : vector<16x32xf32>
    %532 = arith.addf %434, %531 : vector<16x32xf32>
    %533 = vector.extract_strided_slice %302 {offsets = [1, 0], sizes = [1, 32], strides = [1, 1]} : vector<3x32xf32> to vector<1x32xf32>
    %534 = vector.extract_strided_slice %304 {offsets = [1, 0], sizes = [1, 32], strides = [1, 1]} : vector<3x32xf32> to vector<1x32xf32>
    %cst_176 = arith.constant dense<0.000000e+00> : vector<16xf32>
    %535 = vector.multi_reduction <add>, %532, %cst_176 [1] : vector<16x32xf32> to vector<16xf32>
    %536 = vector.shape_cast %535 : vector<16xf32> to vector<16x1xf32>
    %cst_177 = arith.constant 3.200000e+01 : f32
    %537 = vector.broadcast %cst_177 : f32 to vector<16x1xf32>
    %538 = arith.divf %536, %537 : vector<16x1xf32>
    %539 = vector.broadcast %538 : vector<16x1xf32> to vector<16x32xf32>
    %540 = arith.subf %532, %539 : vector<16x32xf32>
    %541 = arith.mulf %540, %540 : vector<16x32xf32>
    %cst_178 = arith.constant dense<0.000000e+00> : vector<16xf32>
    %542 = vector.multi_reduction <add>, %541, %cst_178 [1] : vector<16x32xf32> to vector<16xf32>
    %543 = vector.shape_cast %542 : vector<16xf32> to vector<16x1xf32>
    %cst_179 = arith.constant 3.200000e+01 : f32
    %544 = vector.broadcast %cst_179 : f32 to vector<16x1xf32>
    %545 = arith.divf %543, %544 : vector<16x1xf32>
    %546 = vector.broadcast %538 : vector<16x1xf32> to vector<16x32xf32>
    %547 = arith.subf %532, %546 : vector<16x32xf32>
    %cst_180 = arith.constant 9.99999974E-6 : f32
    %548 = vector.broadcast %cst_180 : f32 to vector<16x1xf32>
    %549 = arith.addf %545, %548 : vector<16x1xf32>
    %550 = math.rsqrt %549 : vector<16x1xf32>
    %551 = vector.broadcast %550 : vector<16x1xf32> to vector<16x32xf32>
    %552 = arith.mulf %547, %551 : vector<16x32xf32>
    %553 = vector.broadcast %533 : vector<1x32xf32> to vector<16x32xf32>
    %554 = arith.mulf %552, %553 : vector<16x32xf32>
    %555 = vector.broadcast %534 : vector<1x32xf32> to vector<16x32xf32>
    %556 = arith.addf %554, %555 : vector<16x32xf32>
    %cst_181 = arith.constant dense<0.000000e+00> : vector<16x64xf32>
    %557 = tpu.matmul %556, %306, %cst_181 {dimension_numbers = #tpu.dot_dimension_numbers<[1], [0], [0], [1], [0, 0, 1, 1], [], []>} : vector<16x32xf32>, vector<32x64xf32>, vector<16x64xf32> -> vector<16x64xf32>
    %558 = vector.broadcast %308 : vector<1x64xf32> to vector<16x64xf32>
    %559 = arith.addf %557, %558 : vector<16x64xf32>
    %cst_182 = arith.constant 0.000000e+00 : f32
    %560 = vector.broadcast %cst_182 : f32 to vector<16x64xf32>
    %561 = arith.maximumf %559, %560 : vector<16x64xf32>
    %cst_183 = arith.constant dense<0.000000e+00> : vector<16x32xf32>
    %562 = tpu.matmul %561, %310, %cst_183 {dimension_numbers = #tpu.dot_dimension_numbers<[1], [0], [0], [1], [0, 0, 1, 1], [], []>} : vector<16x64xf32>, vector<64x32xf32>, vector<16x32xf32> -> vector<16x32xf32>
    %563 = vector.broadcast %312 : vector<1x32xf32> to vector<16x32xf32>
    %564 = arith.addf %562, %563 : vector<16x32xf32>
    %565 = arith.addf %556, %564 : vector<16x32xf32>
    %566 = vector.extract_strided_slice %302 {offsets = [2, 0], sizes = [1, 32], strides = [1, 1]} : vector<3x32xf32> to vector<1x32xf32>
    %567 = vector.extract_strided_slice %304 {offsets = [2, 0], sizes = [1, 32], strides = [1, 1]} : vector<3x32xf32> to vector<1x32xf32>
    %cst_184 = arith.constant dense<0.000000e+00> : vector<16xf32>
    %568 = vector.multi_reduction <add>, %565, %cst_184 [1] : vector<16x32xf32> to vector<16xf32>
    %569 = vector.shape_cast %568 : vector<16xf32> to vector<16x1xf32>
    %cst_185 = arith.constant 3.200000e+01 : f32
    %570 = vector.broadcast %cst_185 : f32 to vector<16x1xf32>
    %571 = arith.divf %569, %570 : vector<16x1xf32>
    %572 = vector.broadcast %571 : vector<16x1xf32> to vector<16x32xf32>
    %573 = arith.subf %565, %572 : vector<16x32xf32>
    %574 = arith.mulf %573, %573 : vector<16x32xf32>
    %cst_186 = arith.constant dense<0.000000e+00> : vector<16xf32>
    %575 = vector.multi_reduction <add>, %574, %cst_186 [1] : vector<16x32xf32> to vector<16xf32>
    %576 = vector.shape_cast %575 : vector<16xf32> to vector<16x1xf32>
    %cst_187 = arith.constant 3.200000e+01 : f32
    %577 = vector.broadcast %cst_187 : f32 to vector<16x1xf32>
    %578 = arith.divf %576, %577 : vector<16x1xf32>
    %579 = vector.broadcast %571 : vector<16x1xf32> to vector<16x32xf32>
    %580 = arith.subf %565, %579 : vector<16x32xf32>
    %cst_188 = arith.constant 9.99999974E-6 : f32
    %581 = vector.broadcast %cst_188 : f32 to vector<16x1xf32>
    %582 = arith.addf %578, %581 : vector<16x1xf32>
    %583 = math.rsqrt %582 : vector<16x1xf32>
    %584 = vector.broadcast %583 : vector<16x1xf32> to vector<16x32xf32>
    %585 = arith.mulf %580, %584 : vector<16x32xf32>
    %586 = vector.broadcast %566 : vector<1x32xf32> to vector<16x32xf32>
    %587 = arith.mulf %585, %586 : vector<16x32xf32>
    %588 = vector.broadcast %567 : vector<1x32xf32> to vector<16x32xf32>
    %589 = arith.addf %587, %588 : vector<16x32xf32>
    %c0_189 = arith.constant 0 : index
    %c0_190 = arith.constant 0 : index
    %590 = vector.load %arg12[%c0_189, %c0_190] : memref<16x32xf32, #tpu.memory_space<vmem>>, vector<16x32xf32>
    tpu.vector_store %arg12[%c0_189, %c0_190], %589 {strides = array<i32>} : memref<16x32xf32, #tpu.memory_space<vmem>>, vector<16x32xf32>,
    return
  }
}

</mosaic_0001>

<llo_original>
// kernel: decoder_model_forward.1
$region0: #{decoder_model_forward.1}
  #allocation0 [shape = 'u32[]', space=smem, size = 0x4, offset = 0x4, fixed_abs, tag = 'smem constant byte address 0x4 - core index']
  #allocation1 [shape = 'u32[72,128]{1,0:T(1,128)}', space=vmem, size = 0x9000, scoped, tag = 'internal scratch']
  %s0 = inlined_call_operand.vmem [shape: f32[16,32], index: 0, kind: input, shape index: {}]
  %s1 = inlined_call_operand.vmem [shape: f32[16,32], index: 1, kind: input, shape index: {}]
  %s2 = inlined_call_operand.vmem [shape: f32[16,16], index: 2, kind: input, shape index: {}]
  %s3 = inlined_call_operand.vmem [shape: f32[16,16], index: 3, kind: input, shape index: {}]
  %s4 = inlined_call_operand.vmem [shape: f32[2,2,32,128], index: 4, kind: input, shape index: {}]
  %s5 = inlined_call_operand.vmem [shape: f32[2,2,1,128], index: 5, kind: input, shape index: {}]
  %s6 = inlined_call_operand.vmem [shape: f32[2,3,32], index: 6, kind: input, shape index: {}]
  %s7 = inlined_call_operand.vmem [shape: f32[2,3,32], index: 7, kind: input, shape index: {}]
  %s8 = inlined_call_operand.vmem [shape: f32[2,32,64], index: 8, kind: input, shape index: {}]
  %s9 = inlined_call_operand.vmem [shape: f32[2,1,64], index: 9, kind: input, shape index: {}]
  %s10 = inlined_call_operand.vmem [shape: f32[2,64,32], index: 10, kind: input, shape index: {}]
  %s11 = inlined_call_operand.vmem [shape: f32[2,1,32], index: 11, kind: input, shape index: {}]
  %s12 = inlined_call_operand.hbm [shape: f32[16,32], index: 12, kind: output, shape index: {}]
  %s13 = sld [smem:[#allocation0]]
  $region58: #{decoder_model_forward.1} parent=0
    _
  %s15 = ssub.s32 1, %s13
  %s16 = scalar_select 0, %s15, %s13
  $region1: #{decoder_model_forward.1} parent=0
    #allocation2 [shape = 'u8[8192]{0}', space=vmem, size = 0x2000, scoped, tag = 'output window, operand 0, single buffered']
    #allocation3 [shape = 's32[1]{0}', space=sflag, size = 0x4, scoped, tag = 'scoped memory for decoder_model_forward.1']
    %17 = vsyncpa [#allocation3], 0
    // Predicated region
    $region2: #{decoder_model_forward.1} parent=1 // pred_check
      _
    $region3: #{decoder_model_forward.1} parent=1 // pred_check_branch
      %19 = sbr.rel (0) target = $region5
    $region4: #{decoder_model_forward.1} parent=1 // pred_region
      _
    $region5: #{decoder_model_forward.1} parent=1 // pred_fallthru
      _
    // Predicated region
    $region6: #{decoder_model_forward.1} parent=1 // pred_check
      _
    $region7: #{decoder_model_forward.1} parent=1 // pred_check_branch
      %21 = sbr.rel (0) target = $region9
    $region8: #{decoder_model_forward.1} parent=1 // pred_region
      _
    $region9: #{decoder_model_forward.1} parent=1 // pred_fallthru
      _
    // Predicated region
    $region10: #{decoder_model_forward.1} parent=1 // pred_check
      _
    $region11: #{decoder_model_forward.1} parent=1 // pred_check_branch
      %23 = sbr.rel (0) target = $region13
    $region12: #{decoder_model_forward.1} parent=1 // pred_region
      _
    $region13: #{decoder_model_forward.1} parent=1 // pred_fallthru
      _
    // Predicated region
    $region14: #{decoder_model_forward.1} parent=1 // pred_check
      _
    $region15: #{decoder_model_forward.1} parent=1 // pred_check_branch
      %25 = sbr.rel (0) target = $region17
    $region16: #{decoder_model_forward.1} parent=1 // pred_region
      _
    $region17: #{decoder_model_forward.1} parent=1 // pred_fallthru
      _
    // Predicated region
    $region18: #{decoder_model_forward.1} parent=1 // pred_check
      _
    $region19: #{decoder_model_forward.1} parent=1 // pred_check_branch
      %27 = sbr.rel (0) target = $region21
    $region20: #{decoder_model_forward.1} parent=1 // pred_region
      _
    $region21: #{decoder_model_forward.1} parent=1 // pred_fallthru
      _
    // Predicated region
    $region22: #{decoder_model_forward.1} parent=1 // pred_check
      _
    $region23: #{decoder_model_forward.1} parent=1 // pred_check_branch
      %29 = sbr.rel (0) target = $region25
    $region24: #{decoder_model_forward.1} parent=1 // pred_region
      _
    $region25: #{decoder_model_forward.1} parent=1 // pred_fallthru
      _
    // Predicated region
    $region26: #{decoder_model_forward.1} parent=1 // pred_check
      _
    $region27: #{decoder_model_forward.1} parent=1 // pred_check_branch
      %31 = sbr.rel (0) target = $region29
    $region28: #{decoder_model_forward.1} parent=1 // pred_region
      _
    $region29: #{decoder_model_forward.1} parent=1 // pred_fallthru
      _
    // Predicated region
    $region30: #{decoder_model_forward.1} parent=1 // pred_check
      _
    $region31: #{decoder_model_forward.1} parent=1 // pred_check_branch
      %33 = sbr.rel (0) target = $region33
    $region32: #{decoder_model_forward.1} parent=1 // pred_region
      _
    $region33: #{decoder_model_forward.1} parent=1 // pred_fallthru
      _
    // Predicated region
    $region34: #{decoder_model_forward.1} parent=1 // pred_check
      _
    $region35: #{decoder_model_forward.1} parent=1 // pred_check_branch
      %35 = sbr.rel (0) target = $region37
    $region36: #{decoder_model_forward.1} parent=1 // pred_region
      _
    $region37: #{decoder_model_forward.1} parent=1 // pred_fallthru
      _
    // Predicated region
    $region38: #{decoder_model_forward.1} parent=1 // pred_check
      _
    $region39: #{decoder_model_forward.1} parent=1 // pred_check_branch
      %37 = sbr.rel (0) target = $region41
    $region40: #{decoder_model_forward.1} parent=1 // pred_region
      _
    $region41: #{decoder_model_forward.1} parent=1 // pred_fallthru
      _
    // Predicated region
    $region42: #{decoder_model_forward.1} parent=1 // pred_check
      _
    $region43: #{decoder_model_forward.1} parent=1 // pred_check_branch
      %39 = sbr.rel (0) target = $region45
    $region44: #{decoder_model_forward.1} parent=1 // pred_region
      _
    $region45: #{decoder_model_forward.1} parent=1 // pred_fallthru
      _
    // Predicated region
    $region46: #{decoder_model_forward.1} parent=1 // pred_check
      _
    $region47: #{decoder_model_forward.1} parent=1 // pred_check_branch
      %41 = sbr.rel (0) target = $region49
    $region48: #{decoder_model_forward.1} parent=1 // pred_region
      _
    $region49: #{decoder_model_forward.1} parent=1 // pred_fallthru
      _
    %v42 = vld [vmem:[%s0] sm:$0xff]
    %v43 = vld [vmem:[%s0 + $0x8] sm:$0xff]
    %v44 = vld [vmem:[%s1] sm:$0xff]
    %v45 = vld [vmem:[%s1 + $0x8] sm:$0xff]
    %v46 = vld [vmem:[%s2] sm:$0xff]
    %v47 = vld [vmem:[%s2 + $0x8] sm:$0xff]
    %v48 = vld [vmem:[%s3] sm:$0xff]
    %v49 = vld [vmem:[%s3 + $0x8] sm:$0xff]
    %v50 = vld [vmem:[%s4] sm:$0xff]
    %v51 = vld [vmem:[%s4 + $0x8] sm:$0xff]
    %v52 = vld [vmem:[%s4 + $0x10] sm:$0xff]
    %v53 = vld [vmem:[%s4 + $0x18] sm:$0xff]
    %v54 = vld [vmem:[%s4 + $0x20] sm:$0xff]
    %v55 = vld [vmem:[%s4 + $0x28] sm:$0xff]
    %v56 = vld [vmem:[%s4 + $0x30] sm:$0xff]
    %v57 = vld [vmem:[%s4 + $0x38] sm:$0xff]
    %v58 = vld [vmem:[%s5] sm:$0x1]
    %v59 = vld [vmem:[%s5 + $0x1] sm:$0x1]
    %v60 = vld [vmem:[%s6] sm:$0x7]
    %v61 = vld [vmem:[%s7] sm:$0x7]
    %v62 = vld [vmem:[%s8] sm:$0xff]
    %v63 = vld [vmem:[%s8 + $0x8] sm:$0xff]
    %v64 = vld [vmem:[%s8 + $0x10] sm:$0xff]
    %v65 = vld [vmem:[%s8 + $0x18] sm:$0xff]
    %v66 = vld [vmem:[%s9] sm:$0x1]
    %v67 = vld [vmem:[%s10] sm:$0xff]
    %v68 = vld [vmem:[%s10 + $0x8] sm:$0xff]
    %v69 = vld [vmem:[%s10 + $0x10] sm:$0xff]
    %v70 = vld [vmem:[%s10 + $0x18] sm:$0xff]
    %v71 = vld [vmem:[%s10 + $0x20] sm:$0xff]
    %v72 = vld [vmem:[%s10 + $0x28] sm:$0xff]
    %v73 = vld [vmem:[%s10 + $0x30] sm:$0xff]
    %v74 = vld [vmem:[%s10 + $0x38] sm:$0xff]
    %v75 = vld [vmem:[%s11] sm:$0x1]
    %v77 = vperm.slane %v58, 0
    %vm79 = vcmask 261120
    %v81 = vsel %vm79, %v42, 0
    %v84 = vsel %vm79, %v43, 0
    %86 = vmatpush.msra.mxu0 0.0
    %87 = vmatpush.msra.mxu0 0.0
    %88 = vmatpush.msra.mxu0 0.0
    %89 = vmatpush.msra.mxu0 0.0
    %90 = vmatpush.msra.mxu0 0.0
    %91 = vmatpush.msra.mxu0 0.0
    %92 = vmatpush.msra.mxu0 0.0
    %93 = vmatpush.msra.mxu0 0.0
    %94 = vmatpush.msra.mxu0 0.0
    %95 = vmatpush.msra.mxu0 0.0
    %96 = vmatpush.msra.mxu0 0.0
    %97 = vmatpush.msra.mxu0 0.0
    %98 = vmatpush.msra.mxu0 %v53
    %99 = vmatpush.msra.mxu0 %v52
    %100 = vmatpush.msra.mxu0 %v51
    %101 = vmatpush.msra.mxu0 %v50
    %102 = vmatmul.f32.gmra.mxu0 %v81
    %v103 = vpop.f32.mrf.mxu0
    %v104 = vadd.f32 %v77, %v103
    %105 = vmatmul.f32.gmra.mxu0 %v84
    %v106 = vpop.f32.mrf.mxu0
    %v107 = vadd.f32 %v77, %v106
    %108 = vdwg.mxu0
    %113 = vrot.lane.b32.xlu0 %v50, 96
    %v114 = vpop.permute.xlu0 %113
    %115 = vrot.lane.b32.xlu0 %v51, 96
    %v116 = vpop.permute.xlu0 %115
    %117 = vrot.lane.b32.xlu0 %v52, 96
    %v118 = vpop.permute.xlu0 %117
    %119 = vrot.lane.b32.xlu0 %v53, 96
    %v120 = vpop.permute.xlu0 %119
    %125 = vrot.lane.b32.xlu0 %v77, 96
    %v126 = vpop.permute.xlu0 %125
    %128 = vmatpush.msra.mxu0 0.0
    %129 = vmatpush.msra.mxu0 0.0
    %130 = vmatpush.msra.mxu0 0.0
    %131 = vmatpush.msra.mxu0 0.0
    %132 = vmatpush.msra.mxu0 0.0
    %133 = vmatpush.msra.mxu0 0.0
    %134 = vmatpush.msra.mxu0 0.0
    %135 = vmatpush.msra.mxu0 0.0
    %136 = vmatpush.msra.mxu0 0.0
    %137 = vmatpush.msra.mxu0 0.0
    %138 = vmatpush.msra.mxu0 0.0
    %139 = vmatpush.msra.mxu0 0.0
    %140 = vmatpush.msra.mxu0 %v120
    %141 = vmatpush.msra.mxu0 %v118
    %142 = vmatpush.msra.mxu0 %v116
    %143 = vmatpush.msra.mxu0 %v114
    %144 = vmatmul.f32.gmra.mxu0 %v81
    %v145 = vpop.f32.mrf.mxu0
    %v146 = vadd.f32 %v126, %v145
    %147 = vmatmul.f32.gmra.mxu0 %v84
    %v148 = vpop.f32.mrf.mxu0
    %v149 = vadd.f32 %v126, %v148
    %150 = vdwg.mxu0
    %151 = vrot.lane.b32.xlu0 %v50, 64
    %v152 = vpop.permute.xlu0 %151
    %153 = vrot.lane.b32.xlu0 %v51, 64
    %v154 = vpop.permute.xlu0 %153
    %155 = vrot.lane.b32.xlu0 %v52, 64
    %v156 = vpop.permute.xlu0 %155
    %157 = vrot.lane.b32.xlu0 %v53, 64
    %v158 = vpop.permute.xlu0 %157
    %163 = vrot.lane.b32.xlu0 %v77, 64
    %v164 = vpop.permute.xlu0 %163
    %166 = vmatpush.msra.mxu0 0.0
    %167 = vmatpush.msra.mxu0 0.0
    %168 = vmatpush.msra.mxu0 0.0
    %169 = vmatpush.msra.mxu0 0.0
    %170 = vmatpush.msra.mxu0 0.0
    %171 = vmatpush.msra.mxu0 0.0
    %172 = vmatpush.msra.mxu0 0.0
    %173 = vmatpush.msra.mxu0 0.0
    %174 = vmatpush.msra.mxu0 0.0
    %175 = vmatpush.msra.mxu0 0.0
    %176 = vmatpush.msra.mxu0 0.0
    %177 = vmatpush.msra.mxu0 0.0
    %178 = vmatpush.msra.mxu0 %v158
    %179 = vmatpush.msra.mxu0 %v156
    %180 = vmatpush.msra.mxu0 %v154
    %181 = vmatpush.msra.mxu0 %v152
    %182 = vmatmul.f32.gmra.mxu0 %v81
    %v183 = vpop.f32.mrf.mxu0
    %v184 = vadd.f32 %v164, %v183
    %185 = vmatmul.f32.gmra.mxu0 %v84
    %v186 = vpop.f32.mrf.mxu0
    %v187 = vadd.f32 %v164, %v186
    %188 = vdwg.mxu0
    %vm189 = vcmask 64512
    %v191 = vsel %vm189, %v104, 0
    %v194 = vsel %vm189, %v107, 0
    %v197 = vsel %vm189, %v146, 0
    %v200 = vsel %vm189, %v149, 0
    %202 = vmatpush.xpose.msra.mxu0 0.0
    %203 = vmatpush.xpose.msra.mxu0 0.0
    %204 = vmatpush.xpose.msra.mxu0 0.0
    %205 = vmatpush.xpose.msra.mxu0 0.0
    %206 = vmatpush.xpose.msra.mxu0 0.0
    %207 = vmatpush.xpose.msra.mxu0 0.0
    %208 = vmatpush.xpose.msra.mxu0 0.0
    %209 = vmatpush.xpose.msra.mxu0 0.0
    %210 = vmatpush.xpose.msra.mxu0 0.0
    %211 = vmatpush.xpose.msra.mxu0 0.0
    %212 = vmatpush.xpose.msra.mxu0 0.0
    %213 = vmatpush.xpose.msra.mxu0 0.0
    %214 = vmatpush.xpose.msra.mxu0 0.0
    %215 = vmatpush.xpose.msra.mxu0 0.0
    %216 = vmatpush.xpose.msra.mxu0 %v200
    %217 = vmatpush.xpose.msra.mxu0 %v197
    %218 = vmatmul.f32.gmra.mxu0 %v191
    %v219 = vpop.f32.mrf.mxu0
    %v220 = vadd.f32 0.0, %v219
    %221 = vmatmul.f32.gmra.mxu0 %v194
    %v222 = vpop.f32.mrf.mxu0
    %v223 = vadd.f32 0.0, %v222
    %224 = vdwg.mxu0
    %v225 = vmul.f32 %v220, 0.35355338
    %v226 = vmul.f32 %v223, 0.35355338
    %v227 = vadd.f32 %v225, %v46
    %v228 = vadd.f32 %v226, %v47
    %vm229 = vcmask 130048
    %v230 = vsel %vm229, %v227, -inf
    %231 = vmax.xlane.f32.xlu0 %v230
    %v232 = vpop.xlane.xlu0 %231
    %v233 = vsel %vm229, %v228, -inf
    %234 = vmax.xlane.f32.xlu0 %v233
    %v235 = vpop.xlane.xlu0 %234
    %v236 = vsub.f32 %v227, %v232
    %v237 = vsub.f32 %v228, %v235
    %v238 = vmul.f32 %v236, 1.442695
    %v239 = vpow.pop %v238
    %v240 = vmul.f32 %v237, 1.442695
    %v241 = vpow.pop %v240
    %v242 = vsel %vm229, %v239, 0.0
    %243 = vadd.xlane.f32.xlu0 %v242
    %v244 = vpop.xlane.xlu0 %243
    %v245 = vsel %vm229, %v241, 0.0
    %246 = vadd.xlane.f32.xlu0 %v245
    %v247 = vpop.xlane.xlu0 %246
    %v248 = vrcp.pop %v244
    %v249 = vrcp.pop %v247
    %v250 = vmul.f32 %v239, %v248
    %v251 = vmul.f32 %v241, %v249
    %v253 = vsel %vm229, %v250, 0
    %v256 = vsel %vm229, %v251, 0
    %258 = vmatpush.msra.mxu0 0.0
    %259 = vmatpush.msra.mxu0 0.0
    %260 = vmatpush.msra.mxu0 0.0
    %261 = vmatpush.msra.mxu0 0.0
    %262 = vmatpush.msra.mxu0 0.0
    %263 = vmatpush.msra.mxu0 0.0
    %264 = vmatpush.msra.mxu0 0.0
    %265 = vmatpush.msra.mxu0 0.0
    %266 = vmatpush.msra.mxu0 0.0
    %267 = vmatpush.msra.mxu0 0.0
    %268 = vmatpush.msra.mxu0 0.0
    %269 = vmatpush.msra.mxu0 0.0
    %270 = vmatpush.msra.mxu0 0.0
    %271 = vmatpush.msra.mxu0 0.0
    %272 = vmatpush.msra.mxu0 %v187
    %273 = vmatpush.msra.mxu0 %v184
    %274 = vmatmul.f32.gmra.mxu0 %v253
    %v275 = vpop.f32.mrf.mxu0
    %v276 = vadd.f32 0.0, %v275
    %277 = vmatmul.f32.gmra.mxu0 %v256
    %v278 = vpop.f32.mrf.mxu0
    %v279 = vadd.f32 0.0, %v278
    %280 = vdwg.mxu0
    %281 = vrot.lane.b32.xlu0 %v104, 120
    %v282 = vpop.permute.xlu0 %281
    %283 = vrot.lane.b32.xlu0 %v107, 120
    %v284 = vpop.permute.xlu0 %283
    %285 = vrot.lane.b32.xlu0 %v146, 120
    %v286 = vpop.permute.xlu0 %285
    %287 = vrot.lane.b32.xlu0 %v149, 120
    %v288 = vpop.permute.xlu0 %287
    %v289 = vsel %vm189, %v282, 0
    %v291 = vsel %vm189, %v284, 0
    %v293 = vsel %vm189, %v286, 0
    %v295 = vsel %vm189, %v288, 0
    %297 = vmatpush.xpose.msra.mxu0 0.0
    %298 = vmatpush.xpose.msra.mxu0 0.0
    %299 = vmatpush.xpose.msra.mxu0 0.0
    %300 = vmatpush.xpose.msra.mxu0 0.0
    %301 = vmatpush.xpose.msra.mxu0 0.0
    %302 = vmatpush.xpose.msra.mxu0 0.0
    %303 = vmatpush.xpose.msra.mxu0 0.0
    %304 = vmatpush.xpose.msra.mxu0 0.0
    %305 = vmatpush.xpose.msra.mxu0 0.0
    %306 = vmatpush.xpose.msra.mxu0 0.0
    %307 = vmatpush.xpose.msra.mxu0 0.0
    %308 = vmatpush.xpose.msra.mxu0 0.0
    %309 = vmatpush.xpose.msra.mxu0 0.0
    %310 = vmatpush.xpose.msra.mxu0 0.0
    %311 = vmatpush.xpose.msra.mxu0 %v295
    %312 = vmatpush.xpose.msra.mxu0 %v293
    %313 = vmatmul.f32.gmra.mxu0 %v289
    %v314 = vpop.f32.mrf.mxu0
    %v315 = vadd.f32 0.0, %v314
    %316 = vmatmul.f32.gmra.mxu0 %v291
    %v317 = vpop.f32.mrf.mxu0
    %v318 = vadd.f32 0.0, %v317
    %319 = vdwg.mxu0
    %v320 = vmul.f32 %v315, 0.35355338
    %v321 = vmul.f32 %v318, 0.35355338
    %v322 = vadd.f32 %v320, %v46
    %v323 = vadd.f32 %v321, %v47
    %v324 = vsel %vm229, %v322, -inf
    %325 = vmax.xlane.f32.xlu0 %v324
    %v326 = vpop.xlane.xlu0 %325
    %v327 = vsel %vm229, %v323, -inf
    %328 = vmax.xlane.f32.xlu0 %v327
    %v329 = vpop.xlane.xlu0 %328
    %v330 = vsub.f32 %v322, %v326
    %v331 = vsub.f32 %v323, %v329
    %v332 = vmul.f32 %v330, 1.442695
    %v333 = vpow.pop %v332
    %v334 = vmul.f32 %v331, 1.442695
    %v335 = vpow.pop %v334
    %v336 = vsel %vm229, %v333, 0.0
    %337 = vadd.xlane.f32.xlu0 %v336
    %v338 = vpop.xlane.xlu0 %337
    %v339 = vsel %vm229, %v335, 0.0
    %340 = vadd.xlane.f32.xlu0 %v339
    %v341 = vpop.xlane.xlu0 %340
    %v342 = vrcp.pop %v338
    %v343 = vrcp.pop %v341
    %v344 = vmul.f32 %v333, %v342
    %v345 = vmul.f32 %v335, %v343
    %348 = vrot.lane.b32.xlu0 %v184, 120
    %v349 = vpop.permute.xlu0 %348
    %350 = vrot.lane.b32.xlu0 %v187, 120
    %v351 = vpop.permute.xlu0 %350
    %v355 = vsel %vm229, %v344, 0
    %v358 = vsel %vm229, %v345, 0
    %360 = vmatpush.msra.mxu0 0.0
    %361 = vmatpush.msra.mxu0 0.0
    %362 = vmatpush.msra.mxu0 0.0
    %363 = vmatpush.msra.mxu0 0.0
    %364 = vmatpush.msra.mxu0 0.0
    %365 = vmatpush.msra.mxu0 0.0
    %366 = vmatpush.msra.mxu0 0.0
    %367 = vmatpush.msra.mxu0 0.0
    %368 = vmatpush.msra.mxu0 0.0
    %369 = vmatpush.msra.mxu0 0.0
    %370 = vmatpush.msra.mxu0 0.0
    %371 = vmatpush.msra.mxu0 0.0
    %372 = vmatpush.msra.mxu0 0.0
    %373 = vmatpush.msra.mxu0 0.0
    %374 = vmatpush.msra.mxu0 %v351
    %375 = vmatpush.msra.mxu0 %v349
    %376 = vmatmul.f32.gmra.mxu0 %v355
    %v377 = vpop.f32.mrf.mxu0
    %v378 = vadd.f32 0.0, %v377
    %379 = vmatmul.f32.gmra.mxu0 %v358
    %v380 = vpop.f32.mrf.mxu0
    %v381 = vadd.f32 0.0, %v380
    %382 = vdwg.mxu0
    %383 = vrot.lane.b32.xlu0 %v104, 112
    %v384 = vpop.permute.xlu0 %383
    %385 = vrot.lane.b32.xlu0 %v107, 112
    %v386 = vpop.permute.xlu0 %385
    %387 = vrot.lane.b32.xlu0 %v146, 112
    %v388 = vpop.permute.xlu0 %387
    %389 = vrot.lane.b32.xlu0 %v149, 112
    %v390 = vpop.permute.xlu0 %389
    %v391 = vsel %vm189, %v384, 0
    %v393 = vsel %vm189, %v386, 0
    %v395 = vsel %vm189, %v388, 0
    %v397 = vsel %vm189, %v390, 0
    %399 = vmatpush.xpose.msra.mxu0 0.0
    %400 = vmatpush.xpose.msra.mxu0 0.0
    %401 = vmatpush.xpose.msra.mxu0 0.0
    %402 = vmatpush.xpose.msra.mxu0 0.0
    %403 = vmatpush.xpose.msra.mxu0 0.0
    %404 = vmatpush.xpose.msra.mxu0 0.0
    %405 = vmatpush.xpose.msra.mxu0 0.0
    %406 = vmatpush.xpose.msra.mxu0 0.0
    %407 = vmatpush.xpose.msra.mxu0 0.0
    %408 = vmatpush.xpose.msra.mxu0 0.0
    %409 = vmatpush.xpose.msra.mxu0 0.0
    %410 = vmatpush.xpose.msra.mxu0 0.0
    %411 = vmatpush.xpose.msra.mxu0 0.0
    %412 = vmatpush.xpose.msra.mxu0 0.0
    %413 = vmatpush.xpose.msra.mxu0 %v397
    %414 = vmatpush.xpose.msra.mxu0 %v395
    %415 = vmatmul.f32.gmra.mxu0 %v391
    %v416 = vpop.f32.mrf.mxu0
    %v417 = vadd.f32 0.0, %v416
    %418 = vmatmul.f32.gmra.mxu0 %v393
    %v419 = vpop.f32.mrf.mxu0
    %v420 = vadd.f32 0.0, %v419
    %421 = vdwg.mxu0
    %v422 = vmul.f32 %v417, 0.35355338
    %v423 = vmul.f32 %v420, 0.35355338
    %v424 = vadd.f32 %v422, %v46
    %v425 = vadd.f32 %v423, %v47
    %v426 = vsel %vm229, %v424, -inf
    %427 = vmax.xlane.f32.xlu0 %v426
    %v428 = vpop.xlane.xlu0 %427
    %v429 = vsel %vm229, %v425, -inf
    %430 = vmax.xlane.f32.xlu0 %v429
    %v431 = vpop.xlane.xlu0 %430
    %v432 = vsub.f32 %v424, %v428
    %v433 = vsub.f32 %v425, %v431
    %v434 = vmul.f32 %v432, 1.442695
    %v435 = vpow.pop %v434
    %v436 = vmul.f32 %v433, 1.442695
    %v437 = vpow.pop %v436
    %v438 = vsel %vm229, %v435, 0.0
    %439 = vadd.xlane.f32.xlu0 %v438
    %v440 = vpop.xlane.xlu0 %439
    %v441 = vsel %vm229, %v437, 0.0
    %442 = vadd.xlane.f32.xlu0 %v441
    %v443 = vpop.xlane.xlu0 %442
    %v444 = vrcp.pop %v440
    %v445 = vrcp.pop %v443
    %v446 = vmul.f32 %v435, %v444
    %v447 = vmul.f32 %v437, %v445
    %448 = vrot.lane.b32.xlu0 %v184, 112
    %v449 = vpop.permute.xlu0 %448
    %450 = vrot.lane.b32.xlu0 %v187, 112
    %v451 = vpop.permute.xlu0 %450
    %v455 = vsel %vm229, %v446, 0
    %v458 = vsel %vm229, %v447, 0
    %460 = vmatpush.msra.mxu0 0.0
    %461 = vmatpush.msra.mxu0 0.0
    %462 = vmatpush.msra.mxu0 0.0
    %463 = vmatpush.msra.mxu0 0.0
    %464 = vmatpush.msra.mxu0 0.0
    %465 = vmatpush.msra.mxu0 0.0
    %466 = vmatpush.msra.mxu0 0.0
    %467 = vmatpush.msra.mxu0 0.0
    %468 = vmatpush.msra.mxu0 0.0
    %469 = vmatpush.msra.mxu0 0.0
    %470 = vmatpush.msra.mxu0 0.0
    %471 = vmatpush.msra.mxu0 0.0
    %472 = vmatpush.msra.mxu0 0.0
    %473 = vmatpush.msra.mxu0 0.0
    %474 = vmatpush.msra.mxu0 %v451
    %475 = vmatpush.msra.mxu0 %v449
    %476 = vmatmul.f32.gmra.mxu0 %v455
    %v477 = vpop.f32.mrf.mxu0
    %v478 = vadd.f32 0.0, %v477
    %479 = vmatmul.f32.gmra.mxu0 %v458
    %v480 = vpop.f32.mrf.mxu0
    %v481 = vadd.f32 0.0, %v480
    %482 = vdwg.mxu0
    %483 = vrot.lane.b32.xlu0 %v104, 104
    %v484 = vpop.permute.xlu0 %483
    %485 = vrot.lane.b32.xlu0 %v107, 104
    %v486 = vpop.permute.xlu0 %485
    %487 = vrot.lane.b32.xlu0 %v146, 104
    %v488 = vpop.permute.xlu0 %487
    %489 = vrot.lane.b32.xlu0 %v149, 104
    %v490 = vpop.permute.xlu0 %489
    %v491 = vsel %vm189, %v484, 0
    %v493 = vsel %vm189, %v486, 0
    %v495 = vsel %vm189, %v488, 0
    %v497 = vsel %vm189, %v490, 0
    %499 = vmatpush.xpose.msra.mxu0 0.0
    %500 = vmatpush.xpose.msra.mxu0 0.0
    %501 = vmatpush.xpose.msra.mxu0 0.0
    %502 = vmatpush.xpose.msra.mxu0 0.0
    %503 = vmatpush.xpose.msra.mxu0 0.0
    %504 = vmatpush.xpose.msra.mxu0 0.0
    %505 = vmatpush.xpose.msra.mxu0 0.0
    %506 = vmatpush.xpose.msra.mxu0 0.0
    %507 = vmatpush.xpose.msra.mxu0 0.0
    %508 = vmatpush.xpose.msra.mxu0 0.0
    %509 = vmatpush.xpose.msra.mxu0 0.0
    %510 = vmatpush.xpose.msra.mxu0 0.0
    %511 = vmatpush.xpose.msra.mxu0 0.0
    %512 = vmatpush.xpose.msra.mxu0 0.0
    %513 = vmatpush.xpose.msra.mxu0 %v497
    %514 = vmatpush.xpose.msra.mxu0 %v495
    %515 = vmatmul.f32.gmra.mxu0 %v491
    %v516 = vpop.f32.mrf.mxu0
    %v517 = vadd.f32 0.0, %v516
    %518 = vmatmul.f32.gmra.mxu0 %v493
    %v519 = vpop.f32.mrf.mxu0
    %v520 = vadd.f32 0.0, %v519
    %521 = vdwg.mxu0
    %v522 = vmul.f32 %v517, 0.35355338
    %v523 = vmul.f32 %v520, 0.35355338
    %v524 = vadd.f32 %v522, %v46
    %v525 = vadd.f32 %v523, %v47
    %v526 = vsel %vm229, %v524, -inf
    %527 = vmax.xlane.f32.xlu0 %v526
    %v528 = vpop.xlane.xlu0 %527
    %v529 = vsel %vm229, %v525, -inf
    %530 = vmax.xlane.f32.xlu0 %v529
    %v531 = vpop.xlane.xlu0 %530
    %v532 = vsub.f32 %v524, %v528
    %v533 = vsub.f32 %v525, %v531
    %v534 = vmul.f32 %v532, 1.442695
    %v535 = vpow.pop %v534
    %v536 = vmul.f32 %v533, 1.442695
    %v537 = vpow.pop %v536
    %v538 = vsel %vm229, %v535, 0.0
    %539 = vadd.xlane.f32.xlu0 %v538
    %v540 = vpop.xlane.xlu0 %539
    %v541 = vsel %vm229, %v537, 0.0
    %542 = vadd.xlane.f32.xlu0 %v541
    %v543 = vpop.xlane.xlu0 %542
    %v544 = vrcp.pop %v540
    %v545 = vrcp.pop %v543
    %v546 = vmul.f32 %v535, %v544
    %v547 = vmul.f32 %v537, %v545
    %548 = vrot.lane.b32.xlu0 %v184, 104
    %v549 = vpop.permute.xlu0 %548
    %550 = vrot.lane.b32.xlu0 %v187, 104
    %v551 = vpop.permute.xlu0 %550
    %v555 = vsel %vm229, %v546, 0
    %v558 = vsel %vm229, %v547, 0
    %560 = vmatpush.msra.mxu0 0.0
    %561 = vmatpush.msra.mxu0 0.0
    %562 = vmatpush.msra.mxu0 0.0
    %563 = vmatpush.msra.mxu0 0.0
    %564 = vmatpush.msra.mxu0 0.0
    %565 = vmatpush.msra.mxu0 0.0
    %566 = vmatpush.msra.mxu0 0.0
    %567 = vmatpush.msra.mxu0 0.0
    %568 = vmatpush.msra.mxu0 0.0
    %569 = vmatpush.msra.mxu0 0.0
    %570 = vmatpush.msra.mxu0 0.0
    %571 = vmatpush.msra.mxu0 0.0
    %572 = vmatpush.msra.mxu0 0.0
    %573 = vmatpush.msra.mxu0 0.0
    %574 = vmatpush.msra.mxu0 %v551
    %575 = vmatpush.msra.mxu0 %v549
    %576 = vmatmul.f32.gmra.mxu0 %v555
    %v577 = vpop.f32.mrf.mxu0
    %v578 = vadd.f32 0.0, %v577
    %579 = vmatmul.f32.gmra.mxu0 %v558
    %v580 = vpop.f32.mrf.mxu0
    %v581 = vadd.f32 0.0, %v580
    %582 = vdwg.mxu0
    %585 = vrot.lane.b32.xlu0 %v378, 8
    %v586 = vpop.permute.xlu0 %585
    %587 = vrot.lane.b32.xlu0 %v381, 8
    %v588 = vpop.permute.xlu0 %587
    %593 = vrot.lane.b32.xlu0 %v478, 16
    %v594 = vpop.permute.xlu0 %593
    %595 = vrot.lane.b32.xlu0 %v481, 16
    %v596 = vpop.permute.xlu0 %595
    %601 = vrot.lane.b32.xlu0 %v578, 24
    %v602 = vpop.permute.xlu0 %601
    %603 = vrot.lane.b32.xlu0 %v581, 24
    %v604 = vpop.permute.xlu0 %603
    %v607 = vsel %vm189, %v276, %v586
    %v608 = vsel %vm189, %v279, %v588
    %v609 = vsel %vm229, %v607, %v594
    %v610 = vsel %vm229, %v608, %v596
    %vm611 = vcmask 195584
    %v612 = vsel %vm611, %v609, %v602
    %v613 = vsel %vm611, %v610, %v604
    %614 = vrot.lane.b32.xlu0 %v50, 32
    %v615 = vpop.permute.xlu0 %614
    %616 = vrot.lane.b32.xlu0 %v51, 32
    %v617 = vpop.permute.xlu0 %616
    %618 = vrot.lane.b32.xlu0 %v52, 32
    %v619 = vpop.permute.xlu0 %618
    %620 = vrot.lane.b32.xlu0 %v53, 32
    %v621 = vpop.permute.xlu0 %620
    %626 = vrot.lane.b32.xlu0 %v77, 32
    %v627 = vpop.permute.xlu0 %626
    %v630 = vsel %vm79, %v612, 0
    %v633 = vsel %vm79, %v613, 0
    %635 = vmatpush.msra.mxu0 0.0
    %636 = vmatpush.msra.mxu0 0.0
    %637 = vmatpush.msra.mxu0 0.0
    %638 = vmatpush.msra.mxu0 0.0
    %639 = vmatpush.msra.mxu0 0.0
    %640 = vmatpush.msra.mxu0 0.0
    %641 = vmatpush.msra.mxu0 0.0
    %642 = vmatpush.msra.mxu0 0.0
    %643 = vmatpush.msra.mxu0 0.0
    %644 = vmatpush.msra.mxu0 0.0
    %645 = vmatpush.msra.mxu0 0.0
    %646 = vmatpush.msra.mxu0 0.0
    %647 = vmatpush.msra.mxu0 %v621
    %648 = vmatpush.msra.mxu0 %v619
    %649 = vmatpush.msra.mxu0 %v617
    %650 = vmatpush.msra.mxu0 %v615
    %651 = vmatmul.f32.gmra.mxu0 %v630
    %v652 = vpop.f32.mrf.mxu0
    %v653 = vadd.f32 %v627, %v652
    %654 = vmatmul.f32.gmra.mxu0 %v633
    %v655 = vpop.f32.mrf.mxu0
    %v656 = vadd.f32 %v627, %v655
    %657 = vdwg.mxu0
    %v658 = vadd.f32 %v42, %v653
    %v659 = vadd.f32 %v43, %v656
    %v660 = vsel %vm79, %v658, 0.0
    %661 = vadd.xlane.f32.xlu0 %v660
    %v662 = vpop.xlane.xlu0 %661
    %v663 = vsel %vm79, %v659, 0.0
    %664 = vadd.xlane.f32.xlu0 %v663
    %v665 = vpop.xlane.xlu0 %664
    %v666 = vrcp.pop 32.0
    %v667 = vmul.f32 32.0, %v666
    %v668 = vsub.f32 1.0, %v667
    %v669 = vmul.f32 %v666, %v668
    %v670 = vadd.f32 %v666, %v669
    %vm671 = vweird.f32 %v666
    %v672 = vsel %vm671, %v666, %v670
    %v673 = vmul.f32 %v662, %v672
    %v674 = vmul.f32 %v665, %v672
    %v675 = vsub.f32 %v658, %v673
    %v676 = vsub.f32 %v659, %v674
    %v677 = vmul.f32 %v675, %v675
    %v678 = vmul.f32 %v676, %v676
    %v679 = vsel %vm79, %v677, 0.0
    %680 = vadd.xlane.f32.xlu0 %v679
    %v681 = vpop.xlane.xlu0 %680
    %v682 = vsel %vm79, %v678, 0.0
    %683 = vadd.xlane.f32.xlu0 %v682
    %v684 = vpop.xlane.xlu0 %683
    %v685 = vmul.f32 %v681, %v672
    %v686 = vmul.f32 %v684, %v672
    %v687 = vadd.f32 %v685, 1e-05
    %v688 = vadd.f32 %v686, 1e-05
    %v689 = vrsqrt.pop %v687
    %v690 = vmul.f32 %v689, %v687
    %v691 = vmul.f32 %v690, %v689
    %v692 = vmul.f32 0.5, %v691
    %v693 = vsub.f32 1.5, %v692
    %v694 = vmul.f32 %v689, %v693
    %vm695 = vweird.f32 %v687
    %vm696 = vweird.f32 %v689
    %vm697 = vmor %vm695, %vm696
    %v698 = vsel %vm697, %v689, %v694
    %v699 = vrsqrt.pop %v688
    %v700 = vmul.f32 %v699, %v688
    %v701 = vmul.f32 %v700, %v699
    %v702 = vmul.f32 0.5, %v701
    %v703 = vsub.f32 1.5, %v702
    %v704 = vmul.f32 %v699, %v703
    %vm705 = vweird.f32 %v688
    %vm706 = vweird.f32 %v699
    %vm707 = vmor %vm705, %vm706
    %v708 = vsel %vm707, %v699, %v704
    %v709 = vmul.f32 %v675, %v698
    %v710 = vmul.f32 %v676, %v708
    %v711 = vperm.slane %v60, 0
    %v712 = vmul.f32 %v709, %v711
    %v713 = vmul.f32 %v710, %v711
    %v714 = vperm.slane %v61, 0
    %v715 = vadd.f32 %v712, %v714
    %v716 = vadd.f32 %v713, %v714
    %v718 = vperm.slane %v59, 0
    %v721 = vsel %vm79, %v715, 0
    %v724 = vsel %vm79, %v716, 0
    %726 = vmatpush.msra.mxu0 0.0
    %727 = vmatpush.msra.mxu0 0.0
    %728 = vmatpush.msra.mxu0 0.0
    %729 = vmatpush.msra.mxu0 0.0
    %730 = vmatpush.msra.mxu0 0.0
    %731 = vmatpush.msra.mxu0 0.0
    %732 = vmatpush.msra.mxu0 0.0
    %733 = vmatpush.msra.mxu0 0.0
    %734 = vmatpush.msra.mxu0 0.0
    %735 = vmatpush.msra.mxu0 0.0
    %736 = vmatpush.msra.mxu0 0.0
    %737 = vmatpush.msra.mxu0 0.0
    %738 = vmatpush.msra.mxu0 %v57
    %739 = vmatpush.msra.mxu0 %v56
    %740 = vmatpush.msra.mxu0 %v55
    %741 = vmatpush.msra.mxu0 %v54
    %742 = vmatmul.f32.gmra.mxu0 %v721
    %v743 = vpop.f32.mrf.mxu0
    %v744 = vadd.f32 %v718, %v743
    %745 = vmatmul.f32.gmra.mxu0 %v724
    %v746 = vpop.f32.mrf.mxu0
    %v747 = vadd.f32 %v718, %v746
    %748 = vdwg.mxu0
    %753 = vrot.lane.b32.xlu0 %v54, 96
    %v754 = vpop.permute.xlu0 %753
    %755 = vrot.lane.b32.xlu0 %v55, 96
    %v756 = vpop.permute.xlu0 %755
    %757 = vrot.lane.b32.xlu0 %v56, 96
    %v758 = vpop.permute.xlu0 %757
    %759 = vrot.lane.b32.xlu0 %v57, 96
    %v760 = vpop.permute.xlu0 %759
    %765 = vrot.lane.b32.xlu0 %v718, 96
    %v766 = vpop.permute.xlu0 %765
    %v769 = vsel %vm79, %v44, 0
    %v772 = vsel %vm79, %v45, 0
    %774 = vmatpush.msra.mxu0 0.0
    %775 = vmatpush.msra.mxu0 0.0
    %776 = vmatpush.msra.mxu0 0.0
    %777 = vmatpush.msra.mxu0 0.0
    %778 = vmatpush.msra.mxu0 0.0
    %779 = vmatpush.msra.mxu0 0.0
    %780 = vmatpush.msra.mxu0 0.0
    %781 = vmatpush.msra.mxu0 0.0
    %782 = vmatpush.msra.mxu0 0.0
    %783 = vmatpush.msra.mxu0 0.0
    %784 = vmatpush.msra.mxu0 0.0
    %785 = vmatpush.msra.mxu0 0.0
    %786 = vmatpush.msra.mxu0 %v760
    %787 = vmatpush.msra.mxu0 %v758
    %788 = vmatpush.msra.mxu0 %v756
    %789 = vmatpush.msra.mxu0 %v754
    %790 = vmatmul.f32.gmra.mxu0 %v769
    %v791 = vpop.f32.mrf.mxu0
    %v792 = vadd.f32 %v766, %v791
    %793 = vmatmul.f32.gmra.mxu0 %v772
    %v794 = vpop.f32.mrf.mxu0
    %v795 = vadd.f32 %v766, %v794
    %796 = vdwg.mxu0
    %797 = vrot.lane.b32.xlu0 %v54, 64
    %v798 = vpop.permute.xlu0 %797
    %799 = vrot.lane.b32.xlu0 %v55, 64
    %v800 = vpop.permute.xlu0 %799
    %801 = vrot.lane.b32.xlu0 %v56, 64
    %v802 = vpop.permute.xlu0 %801
    %803 = vrot.lane.b32.xlu0 %v57, 64
    %v804 = vpop.permute.xlu0 %803
    %809 = vrot.lane.b32.xlu0 %v718, 64
    %v810 = vpop.permute.xlu0 %809
    %812 = vmatpush.msra.mxu0 0.0
    %813 = vmatpush.msra.mxu0 0.0
    %814 = vmatpush.msra.mxu0 0.0
    %815 = vmatpush.msra.mxu0 0.0
    %816 = vmatpush.msra.mxu0 0.0
    %817 = vmatpush.msra.mxu0 0.0
    %818 = vmatpush.msra.mxu0 0.0
    %819 = vmatpush.msra.mxu0 0.0
    %820 = vmatpush.msra.mxu0 0.0
    %821 = vmatpush.msra.mxu0 0.0
    %822 = vmatpush.msra.mxu0 0.0
    %823 = vmatpush.msra.mxu0 0.0
    %824 = vmatpush.msra.mxu0 %v804
    %825 = vmatpush.msra.mxu0 %v802
    %826 = vmatpush.msra.mxu0 %v800
    %827 = vmatpush.msra.mxu0 %v798
    %828 = vmatmul.f32.gmra.mxu0 %v769
    %v829 = vpop.f32.mrf.mxu0
    %v830 = vadd.f32 %v810, %v829
    %831 = vmatmul.f32.gmra.mxu0 %v772
    %v832 = vpop.f32.mrf.mxu0
    %v833 = vadd.f32 %v810, %v832
    %834 = vdwg.mxu0
    %v836 = vsel %vm189, %v744, 0
    %v839 = vsel %vm189, %v747, 0
    %v842 = vsel %vm189, %v792, 0
    %v845 = vsel %vm189, %v795, 0
    %847 = vmatpush.xpose.msra.mxu0 0.0
    %848 = vmatpush.xpose.msra.mxu0 0.0
    %849 = vmatpush.xpose.msra.mxu0 0.0
    %850 = vmatpush.xpose.msra.mxu0 0.0
    %851 = vmatpush.xpose.msra.mxu0 0.0
    %852 = vmatpush.xpose.msra.mxu0 0.0
    %853 = vmatpush.xpose.msra.mxu0 0.0
    %854 = vmatpush.xpose.msra.mxu0 0.0
    %855 = vmatpush.xpose.msra.mxu0 0.0
    %856 = vmatpush.xpose.msra.mxu0 0.0
    %857 = vmatpush.xpose.msra.mxu0 0.0
    %858 = vmatpush.xpose.msra.mxu0 0.0
    %859 = vmatpush.xpose.msra.mxu0 0.0
    %860 = vmatpush.xpose.msra.mxu0 0.0
    %861 = vmatpush.xpose.msra.mxu0 %v845
    %862 = vmatpush.xpose.msra.mxu0 %v842
    %863 = vmatmul.f32.gmra.mxu0 %v836
    %v864 = vpop.f32.mrf.mxu0
    %v865 = vadd.f32 0.0, %v864
    %866 = vmatmul.f32.gmra.mxu0 %v839
    %v867 = vpop.f32.mrf.mxu0
    %v868 = vadd.f32 0.0, %v867
    %869 = vdwg.mxu0
    %v870 = vmul.f32 %v865, 0.35355338
    %v871 = vmul.f32 %v868, 0.35355338
    %v872 = vadd.f32 %v870, %v48
    %v873 = vadd.f32 %v871, %v49
    %v874 = vsel %vm229, %v872, -inf
    %875 = vmax.xlane.f32.xlu0 %v874
    %v876 = vpop.xlane.xlu0 %875
    %v877 = vsel %vm229, %v873, -inf
    %878 = vmax.xlane.f32.xlu0 %v877
    %v879 = vpop.xlane.xlu0 %878
    %v880 = vsub.f32 %v872, %v876
    %v881 = vsub.f32 %v873, %v879
    %v882 = vmul.f32 %v880, 1.442695
    %v883 = vpow.pop %v882
    %v884 = vmul.f32 %v881, 1.442695
    %v885 = vpow.pop %v884
    %v886 = vsel %vm229, %v883, 0.0
    %887 = vadd.xlane.f32.xlu0 %v886
    %v888 = vpop.xlane.xlu0 %887
    %v889 = vsel %vm229, %v885, 0.0
    %890 = vadd.xlane.f32.xlu0 %v889
    %v891 = vpop.xlane.xlu0 %890
    %v892 = vrcp.pop %v888
    %v893 = vrcp.pop %v891
    %v894 = vmul.f32 %v883, %v892
    %v895 = vmul.f32 %v885, %v893
    %v897 = vsel %vm229, %v894, 0
    %v900 = vsel %vm229, %v895, 0
    %902 = vmatpush.msra.mxu0 0.0
    %903 = vmatpush.msra.mxu0 0.0
    %904 = vmatpush.msra.mxu0 0.0
    %905 = vmatpush.msra.mxu0 0.0
    %906 = vmatpush.msra.mxu0 0.0
    %907 = vmatpush.msra.mxu0 0.0
    %908 = vmatpush.msra.mxu0 0.0
    %909 = vmatpush.msra.mxu0 0.0
    %910 = vmatpush.msra.mxu0 0.0
    %911 = vmatpush.msra.mxu0 0.0
    %912 = vmatpush.msra.mxu0 0.0
    %913 = vmatpush.msra.mxu0 0.0
    %914 = vmatpush.msra.mxu0 0.0
    %915 = vmatpush.msra.mxu0 0.0
    %916 = vmatpush.msra.mxu0 %v833
    %917 = vmatpush.msra.mxu0 %v830
    %918 = vmatmul.f32.gmra.mxu0 %v897
    %v919 = vpop.f32.mrf.mxu0
    %v920 = vadd.f32 0.0, %v919
    %921 = vmatmul.f32.gmra.mxu0 %v900
    %v922 = vpop.f32.mrf.mxu0
    %v923 = vadd.f32 0.0, %v922
    %924 = vdwg.mxu0
    %925 = vrot.lane.b32.xlu0 %v744, 120
    %v926 = vpop.permute.xlu0 %925
    %927 = vrot.lane.b32.xlu0 %v747, 120
    %v928 = vpop.permute.xlu0 %927
    %929 = vrot.lane.b32.xlu0 %v792, 120
    %v930 = vpop.permute.xlu0 %929
    %931 = vrot.lane.b32.xlu0 %v795, 120
    %v932 = vpop.permute.xlu0 %931
    %v933 = vsel %vm189, %v926, 0
    %v935 = vsel %vm189, %v928, 0
    %v937 = vsel %vm189, %v930, 0
    %v939 = vsel %vm189, %v932, 0
    %941 = vmatpush.xpose.msra.mxu0 0.0
    %942 = vmatpush.xpose.msra.mxu0 0.0
    %943 = vmatpush.xpose.msra.mxu0 0.0
    %944 = vmatpush.xpose.msra.mxu0 0.0
    %945 = vmatpush.xpose.msra.mxu0 0.0
    %946 = vmatpush.xpose.msra.mxu0 0.0
    %947 = vmatpush.xpose.msra.mxu0 0.0
    %948 = vmatpush.xpose.msra.mxu0 0.0
    %949 = vmatpush.xpose.msra.mxu0 0.0
    %950 = vmatpush.xpose.msra.mxu0 0.0
    %951 = vmatpush.xpose.msra.mxu0 0.0
    %952 = vmatpush.xpose.msra.mxu0 0.0
    %953 = vmatpush.xpose.msra.mxu0 0.0
    %954 = vmatpush.xpose.msra.mxu0 0.0
    %955 = vmatpush.xpose.msra.mxu0 %v939
    %956 = vmatpush.xpose.msra.mxu0 %v937
    %957 = vmatmul.f32.gmra.mxu0 %v933
    %v958 = vpop.f32.mrf.mxu0
    %v959 = vadd.f32 0.0, %v958
    %960 = vmatmul.f32.gmra.mxu0 %v935
    %v961 = vpop.f32.mrf.mxu0
    %v962 = vadd.f32 0.0, %v961
    %963 = vdwg.mxu0
    %v964 = vmul.f32 %v959, 0.35355338
    %v965 = vmul.f32 %v962, 0.35355338
    %v966 = vadd.f32 %v964, %v48
    %v967 = vadd.f32 %v965, %v49
    %v968 = vsel %vm229, %v966, -inf
    %969 = vmax.xlane.f32.xlu0 %v968
    %v970 = vpop.xlane.xlu0 %969
    %v971 = vsel %vm229, %v967, -inf
    %972 = vmax.xlane.f32.xlu0 %v971
    %v973 = vpop.xlane.xlu0 %972
    %v974 = vsub.f32 %v966, %v970
    %v975 = vsub.f32 %v967, %v973
    %v976 = vmul.f32 %v974, 1.442695
    %v977 = vpow.pop %v976
    %v978 = vmul.f32 %v975, 1.442695
    %v979 = vpow.pop %v978
    %v980 = vsel %vm229, %v977, 0.0
    %981 = vadd.xlane.f32.xlu0 %v980
    %v982 = vpop.xlane.xlu0 %981
    %v983 = vsel %vm229, %v979, 0.0
    %984 = vadd.xlane.f32.xlu0 %v983
    %v985 = vpop.xlane.xlu0 %984
    %v986 = vrcp.pop %v982
    %v987 = vrcp.pop %v985
    %v988 = vmul.f32 %v977, %v986
    %v989 = vmul.f32 %v979, %v987
    %992 = vrot.lane.b32.xlu0 %v830, 120
    %v993 = vpop.permute.xlu0 %992
    %994 = vrot.lane.b32.xlu0 %v833, 120
    %v995 = vpop.permute.xlu0 %994
    %v999 = vsel %vm229, %v988, 0
    %v1002 = vsel %vm229, %v989, 0
    %1004 = vmatpush.msra.mxu0 0.0
    %1005 = vmatpush.msra.mxu0 0.0
    %1006 = vmatpush.msra.mxu0 0.0
    %1007 = vmatpush.msra.mxu0 0.0
    %1008 = vmatpush.msra.mxu0 0.0
    %1009 = vmatpush.msra.mxu0 0.0
    %1010 = vmatpush.msra.mxu0 0.0
    %1011 = vmatpush.msra.mxu0 0.0
    %1012 = vmatpush.msra.mxu0 0.0
    %1013 = vmatpush.msra.mxu0 0.0
    %1014 = vmatpush.msra.mxu0 0.0
    %1015 = vmatpush.msra.mxu0 0.0
    %1016 = vmatpush.msra.mxu0 0.0
    %1017 = vmatpush.msra.mxu0 0.0
    %1018 = vmatpush.msra.mxu0 %v995
    %1019 = vmatpush.msra.mxu0 %v993
    %1020 = vmatmul.f32.gmra.mxu0 %v999
    %v1021 = vpop.f32.mrf.mxu0
    %v1022 = vadd.f32 0.0, %v1021
    %1023 = vmatmul.f32.gmra.mxu0 %v1002
    %v1024 = vpop.f32.mrf.mxu0
    %v1025 = vadd.f32 0.0, %v1024
    %1026 = vdwg.mxu0
    %1027 = vrot.lane.b32.xlu0 %v744, 112
    %v1028 = vpop.permute.xlu0 %1027
    %1029 = vrot.lane.b32.xlu0 %v747, 112
    %v1030 = vpop.permute.xlu0 %1029
    %1031 = vrot.lane.b32.xlu0 %v792, 112
    %v1032 = vpop.permute.xlu0 %1031
    %1033 = vrot.lane.b32.xlu0 %v795, 112
    %v1034 = vpop.permute.xlu0 %1033
    %v1035 = vsel %vm189, %v1028, 0
    %v1037 = vsel %vm189, %v1030, 0
    %v1039 = vsel %vm189, %v1032, 0
    %v1041 = vsel %vm189, %v1034, 0
    %1043 = vmatpush.xpose.msra.mxu0 0.0
    %1044 = vmatpush.xpose.msra.mxu0 0.0
    %1045 = vmatpush.xpose.msra.mxu0 0.0
    %1046 = vmatpush.xpose.msra.mxu0 0.0
    %1047 = vmatpush.xpose.msra.mxu0 0.0
    %1048 = vmatpush.xpose.msra.mxu0 0.0
    %1049 = vmatpush.xpose.msra.mxu0 0.0
    %1050 = vmatpush.xpose.msra.mxu0 0.0
    %1051 = vmatpush.xpose.msra.mxu0 0.0
    %1052 = vmatpush.xpose.msra.mxu0 0.0
    %1053 = vmatpush.xpose.msra.mxu0 0.0
    %1054 = vmatpush.xpose.msra.mxu0 0.0
    %1055 = vmatpush.xpose.msra.mxu0 0.0
    %1056 = vmatpush.xpose.msra.mxu0 0.0
    %1057 = vmatpush.xpose.msra.mxu0 %v1041
    %1058 = vmatpush.xpose.msra.mxu0 %v1039
    %1059 = vmatmul.f32.gmra.mxu0 %v1035
    %v1060 = vpop.f32.mrf.mxu0
    %v1061 = vadd.f32 0.0, %v1060
    %1062 = vmatmul.f32.gmra.mxu0 %v1037
    %v1063 = vpop.f32.mrf.mxu0
    %v1064 = vadd.f32 0.0, %v1063
    %1065 = vdwg.mxu0
    %v1066 = vmul.f32 %v1061, 0.35355338
    %v1067 = vmul.f32 %v1064, 0.35355338
    %v1068 = vadd.f32 %v1066, %v48
    %v1069 = vadd.f32 %v1067, %v49
    %v1070 = vsel %vm229, %v1068, -inf
    %1071 = vmax.xlane.f32.xlu0 %v1070
    %v1072 = vpop.xlane.xlu0 %1071
    %v1073 = vsel %vm229, %v1069, -inf
    %1074 = vmax.xlane.f32.xlu0 %v1073
    %v1075 = vpop.xlane.xlu0 %1074
    %v1076 = vsub.f32 %v1068, %v1072
    %v1077 = vsub.f32 %v1069, %v1075
    %v1078 = vmul.f32 %v1076, 1.442695
    %v1079 = vpow.pop %v1078
    %v1080 = vmul.f32 %v1077, 1.442695
    %v1081 = vpow.pop %v1080
    %v1082 = vsel %vm229, %v1079, 0.0
    %1083 = vadd.xlane.f32.xlu0 %v1082
    %v1084 = vpop.xlane.xlu0 %1083
    %v1085 = vsel %vm229, %v1081, 0.0
    %1086 = vadd.xlane.f32.xlu0 %v1085
    %v1087 = vpop.xlane.xlu0 %1086
    %v1088 = vrcp.pop %v1084
    %v1089 = vrcp.pop %v1087
    %v1090 = vmul.f32 %v1079, %v1088
    %v1091 = vmul.f32 %v1081, %v1089
    %1092 = vrot.lane.b32.xlu0 %v830, 112
    %v1093 = vpop.permute.xlu0 %1092
    %1094 = vrot.lane.b32.xlu0 %v833, 112
    %v1095 = vpop.permute.xlu0 %1094
    %v1099 = vsel %vm229, %v1090, 0
    %v1102 = vsel %vm229, %v1091, 0
    %1104 = vmatpush.msra.mxu0 0.0
    %1105 = vmatpush.msra.mxu0 0.0
    %1106 = vmatpush.msra.mxu0 0.0
    %1107 = vmatpush.msra.mxu0 0.0
    %1108 = vmatpush.msra.mxu0 0.0
    %1109 = vmatpush.msra.mxu0 0.0
    %1110 = vmatpush.msra.mxu0 0.0
    %1111 = vmatpush.msra.mxu0 0.0
    %1112 = vmatpush.msra.mxu0 0.0
    %1113 = vmatpush.msra.mxu0 0.0
    %1114 = vmatpush.msra.mxu0 0.0
    %1115 = vmatpush.msra.mxu0 0.0
    %1116 = vmatpush.msra.mxu0 0.0
    %1117 = vmatpush.msra.mxu0 0.0
    %1118 = vmatpush.msra.mxu0 %v1095
    %1119 = vmatpush.msra.mxu0 %v1093
    %1120 = vmatmul.f32.gmra.mxu0 %v1099
    %v1121 = vpop.f32.mrf.mxu0
    %v1122 = vadd.f32 0.0, %v1121
    %1123 = vmatmul.f32.gmra.mxu0 %v1102
    %v1124 = vpop.f32.mrf.mxu0
    %v1125 = vadd.f32 0.0, %v1124
    %1126 = vdwg.mxu0
    %1127 = vrot.lane.b32.xlu0 %v744, 104
    %v1128 = vpop.permute.xlu0 %1127
    %1129 = vrot.lane.b32.xlu0 %v747, 104
    %v1130 = vpop.permute.xlu0 %1129
    %1131 = vrot.lane.b32.xlu0 %v792, 104
    %v1132 = vpop.permute.xlu0 %1131
    %1133 = vrot.lane.b32.xlu0 %v795, 104
    %v1134 = vpop.permute.xlu0 %1133
    %v1135 = vsel %vm189, %v1128, 0
    %v1137 = vsel %vm189, %v1130, 0
    %v1139 = vsel %vm189, %v1132, 0
    %v1141 = vsel %vm189, %v1134, 0
    %1143 = vmatpush.xpose.msra.mxu0 0.0
    %1144 = vmatpush.xpose.msra.mxu0 0.0
    %1145 = vmatpush.xpose.msra.mxu0 0.0
    %1146 = vmatpush.xpose.msra.mxu0 0.0
    %1147 = vmatpush.xpose.msra.mxu0 0.0
    %1148 = vmatpush.xpose.msra.mxu0 0.0
    %1149 = vmatpush.xpose.msra.mxu0 0.0
    %1150 = vmatpush.xpose.msra.mxu0 0.0
    %1151 = vmatpush.xpose.msra.mxu0 0.0
    %1152 = vmatpush.xpose.msra.mxu0 0.0
    %1153 = vmatpush.xpose.msra.mxu0 0.0
    %1154 = vmatpush.xpose.msra.mxu0 0.0
    %1155 = vmatpush.xpose.msra.mxu0 0.0
    %1156 = vmatpush.xpose.msra.mxu0 0.0
    %1157 = vmatpush.xpose.msra.mxu0 %v1141
    %1158 = vmatpush.xpose.msra.mxu0 %v1139
    %1159 = vmatmul.f32.gmra.mxu0 %v1135
    %v1160 = vpop.f32.mrf.mxu0
    %v1161 = vadd.f32 0.0, %v1160
    %1162 = vmatmul.f32.gmra.mxu0 %v1137
    %v1163 = vpop.f32.mrf.mxu0
    %v1164 = vadd.f32 0.0, %v1163
    %1165 = vdwg.mxu0
    %v1166 = vmul.f32 %v1161, 0.35355338
    %v1167 = vmul.f32 %v1164, 0.35355338
    %v1168 = vadd.f32 %v1166, %v48
    %v1169 = vadd.f32 %v1167, %v49
    %v1170 = vsel %vm229, %v1168, -inf
    %1171 = vmax.xlane.f32.xlu0 %v1170
    %v1172 = vpop.xlane.xlu0 %1171
    %v1173 = vsel %vm229, %v1169, -inf
    %1174 = vmax.xlane.f32.xlu0 %v1173
    %v1175 = vpop.xlane.xlu0 %1174
    %v1176 = vsub.f32 %v1168, %v1172
    %v1177 = vsub.f32 %v1169, %v1175
    %v1178 = vmul.f32 %v1176, 1.442695
    %v1179 = vpow.pop %v1178
    %v1180 = vmul.f32 %v1177, 1.442695
    %v1181 = vpow.pop %v1180
    %v1182 = vsel %vm229, %v1179, 0.0
    %1183 = vadd.xlane.f32.xlu0 %v1182
    %v1184 = vpop.xlane.xlu0 %1183
    %v1185 = vsel %vm229, %v1181, 0.0
    %1186 = vadd.xlane.f32.xlu0 %v1185
    %v1187 = vpop.xlane.xlu0 %1186
    %v1188 = vrcp.pop %v1184
    %v1189 = vrcp.pop %v1187
    %v1190 = vmul.f32 %v1179, %v1188
    %v1191 = vmul.f32 %v1181, %v1189
    %1192 = vrot.lane.b32.xlu0 %v830, 104
    %v1193 = vpop.permute.xlu0 %1192
    %1194 = vrot.lane.b32.xlu0 %v833, 104
    %v1195 = vpop.permute.xlu0 %1194
    %v1199 = vsel %vm229, %v1190, 0
    %v1202 = vsel %vm229, %v1191, 0
    %1204 = vmatpush.msra.mxu0 0.0
    %1205 = vmatpush.msra.mxu0 0.0
    %1206 = vmatpush.msra.mxu0 0.0
    %1207 = vmatpush.msra.mxu0 0.0
    %1208 = vmatpush.msra.mxu0 0.0
    %1209 = vmatpush.msra.mxu0 0.0
    %1210 = vmatpush.msra.mxu0 0.0
    %1211 = vmatpush.msra.mxu0 0.0
    %1212 = vmatpush.msra.mxu0 0.0
    %1213 = vmatpush.msra.mxu0 0.0
    %1214 = vmatpush.msra.mxu0 0.0
    %1215 = vmatpush.msra.mxu0 0.0
    %1216 = vmatpush.msra.mxu0 0.0
    %1217 = vmatpush.msra.mxu0 0.0
    %1218 = vmatpush.msra.mxu0 %v1195
    %1219 = vmatpush.msra.mxu0 %v1193
    %1220 = vmatmul.f32.gmra.mxu0 %v1199
    %v1221 = vpop.f32.mrf.mxu0
    %v1222 = vadd.f32 0.0, %v1221
    %1223 = vmatmul.f32.gmra.mxu0 %v1202
    %v1224 = vpop.f32.mrf.mxu0
    %v1225 = vadd.f32 0.0, %v1224
    %1226 = vdwg.mxu0
    %1229 = vrot.lane.b32.xlu0 %v1022, 8
    %v1230 = vpop.permute.xlu0 %1229
    %1231 = vrot.lane.b32.xlu0 %v1025, 8
    %v1232 = vpop.permute.xlu0 %1231
    %1237 = vrot.lane.b32.xlu0 %v1122, 16
    %v1238 = vpop.permute.xlu0 %1237
    %1239 = vrot.lane.b32.xlu0 %v1125, 16
    %v1240 = vpop.permute.xlu0 %1239
    %1245 = vrot.lane.b32.xlu0 %v1222, 24
    %v1246 = vpop.permute.xlu0 %1245
    %1247 = vrot.lane.b32.xlu0 %v1225, 24
    %v1248 = vpop.permute.xlu0 %1247
    %v1251 = vsel %vm189, %v920, %v1230
    %v1252 = vsel %vm189, %v923, %v1232
    %v1253 = vsel %vm229, %v1251, %v1238
    %v1254 = vsel %vm229, %v1252, %v1240
    %v1255 = vsel %vm611, %v1253, %v1246
    %v1256 = vsel %vm611, %v1254, %v1248
    %1257 = vrot.lane.b32.xlu0 %v54, 32
    %v1258 = vpop.permute.xlu0 %1257
    %1259 = vrot.lane.b32.xlu0 %v55, 32
    %v1260 = vpop.permute.xlu0 %1259
    %1261 = vrot.lane.b32.xlu0 %v56, 32
    %v1262 = vpop.permute.xlu0 %1261
    %1263 = vrot.lane.b32.xlu0 %v57, 32
    %v1264 = vpop.permute.xlu0 %1263
    %1269 = vrot.lane.b32.xlu0 %v718, 32
    %v1270 = vpop.permute.xlu0 %1269
    %v1273 = vsel %vm79, %v1255, 0
    %v1276 = vsel %vm79, %v1256, 0
    %1278 = vmatpush.msra.mxu0 0.0
    %1279 = vmatpush.msra.mxu0 0.0
    %1280 = vmatpush.msra.mxu0 0.0
    %1281 = vmatpush.msra.mxu0 0.0
    %1282 = vmatpush.msra.mxu0 0.0
    %1283 = vmatpush.msra.mxu0 0.0
    %1284 = vmatpush.msra.mxu0 0.0
    %1285 = vmatpush.msra.mxu0 0.0
    %1286 = vmatpush.msra.mxu0 0.0
    %1287 = vmatpush.msra.mxu0 0.0
    %1288 = vmatpush.msra.mxu0 0.0
    %1289 = vmatpush.msra.mxu0 0.0
    %1290 = vmatpush.msra.mxu0 %v1264
    %1291 = vmatpush.msra.mxu0 %v1262
    %1292 = vmatpush.msra.mxu0 %v1260
    %1293 = vmatpush.msra.mxu0 %v1258
    %1294 = vmatmul.f32.gmra.mxu0 %v1273
    %v1295 = vpop.f32.mrf.mxu0
    %v1296 = vadd.f32 %v1270, %v1295
    %1297 = vmatmul.f32.gmra.mxu0 %v1276
    %v1298 = vpop.f32.mrf.mxu0
    %v1299 = vadd.f32 %v1270, %v1298
    %1300 = vdwg.mxu0
    %v1301 = vadd.f32 %v715, %v1296
    %v1302 = vadd.f32 %v716, %v1299
    %v1303 = vsel %vm79, %v1301, 0.0
    %1304 = vadd.xlane.f32.xlu0 %v1303
    %v1305 = vpop.xlane.xlu0 %1304
    %v1306 = vsel %vm79, %v1302, 0.0
    %1307 = vadd.xlane.f32.xlu0 %v1306
    %v1308 = vpop.xlane.xlu0 %1307
    %v1309 = vmul.f32 %v1305, %v672
    %v1310 = vmul.f32 %v1308, %v672
    %v1311 = vsub.f32 %v1301, %v1309
    %v1312 = vsub.f32 %v1302, %v1310
    %v1313 = vmul.f32 %v1311, %v1311
    %v1314 = vmul.f32 %v1312, %v1312
    %v1315 = vsel %vm79, %v1313, 0.0
    %1316 = vadd.xlane.f32.xlu0 %v1315
    %v1317 = vpop.xlane.xlu0 %1316
    %v1318 = vsel %vm79, %v1314, 0.0
    %1319 = vadd.xlane.f32.xlu0 %v1318
    %v1320 = vpop.xlane.xlu0 %1319
    %v1321 = vmul.f32 %v1317, %v672
    %v1322 = vmul.f32 %v1320, %v672
    %v1323 = vadd.f32 %v1321, 1e-05
    %v1324 = vadd.f32 %v1322, 1e-05
    %v1325 = vrsqrt.pop %v1323
    %v1326 = vmul.f32 %v1325, %v1323
    %v1327 = vmul.f32 %v1326, %v1325
    %v1328 = vmul.f32 0.5, %v1327
    %v1329 = vsub.f32 1.5, %v1328
    %v1330 = vmul.f32 %v1325, %v1329
    %vm1331 = vweird.f32 %v1323
    %vm1332 = vweird.f32 %v1325
    %vm1333 = vmor %vm1331, %vm1332
    %v1334 = vsel %vm1333, %v1325, %v1330
    %v1335 = vrsqrt.pop %v1324
    %v1336 = vmul.f32 %v1335, %v1324
    %v1337 = vmul.f32 %v1336, %v1335
    %v1338 = vmul.f32 0.5, %v1337
    %v1339 = vsub.f32 1.5, %v1338
    %v1340 = vmul.f32 %v1335, %v1339
    %vm1341 = vweird.f32 %v1324
    %vm1342 = vweird.f32 %v1335
    %vm1343 = vmor %vm1341, %vm1342
    %v1344 = vsel %vm1343, %v1335, %v1340
    %v1345 = vmul.f32 %v1311, %v1334
    %v1346 = vmul.f32 %v1312, %v1344
    %v1347 = vperm.slane %v60, 1
    %v1348 = vmul.f32 %v1345, %v1347
    %v1349 = vmul.f32 %v1346, %v1347
    %v1350 = vperm.slane %v61, 1
    %v1351 = vadd.f32 %v1348, %v1350
    %v1352 = vadd.f32 %v1349, %v1350
    %v1354 = vperm.slane %v66, 0
    %v1357 = vsel %vm79, %v1351, 0
    %v1360 = vsel %vm79, %v1352, 0
    %1362 = vmatpush.msra.mxu0 0.0
    %1363 = vmatpush.msra.mxu0 0.0
    %1364 = vmatpush.msra.mxu0 0.0
    %1365 = vmatpush.msra.mxu0 0.0
    %1366 = vmatpush.msra.mxu0 0.0
    %1367 = vmatpush.msra.mxu0 0.0
    %1368 = vmatpush.msra.mxu0 0.0
    %1369 = vmatpush.msra.mxu0 0.0
    %1370 = vmatpush.msra.mxu0 0.0
    %1371 = vmatpush.msra.mxu0 0.0
    %1372 = vmatpush.msra.mxu0 0.0
    %1373 = vmatpush.msra.mxu0 0.0
    %1374 = vmatpush.msra.mxu0 %v65
    %1375 = vmatpush.msra.mxu0 %v64
    %1376 = vmatpush.msra.mxu0 %v63
    %1377 = vmatpush.msra.mxu0 %v62
    %1378 = vmatmul.f32.gmra.mxu0 %v1357
    %v1379 = vpop.f32.mrf.mxu0
    %v1380 = vadd.f32 %v1354, %v1379
    %1381 = vmatmul.f32.gmra.mxu0 %v1360
    %v1382 = vpop.f32.mrf.mxu0
    %v1383 = vadd.f32 %v1354, %v1382
    %1384 = vdwg.mxu0
    %v1385 = vmax.f32 %v1380, 0.0
    %v1386 = vmax.f32 %v1383, 0.0
    %v1388 = vperm.slane %v75, 0
    %vm1390 = vcmask 523264
    %v1392 = vsel %vm1390, %v1385, 0
    %v1395 = vsel %vm1390, %v1386, 0
    %1397 = vmatpush.msra.mxu0 0.0
    %1398 = vmatpush.msra.mxu0 0.0
    %1399 = vmatpush.msra.mxu0 0.0
    %1400 = vmatpush.msra.mxu0 0.0
    %1401 = vmatpush.msra.mxu0 0.0
    %1402 = vmatpush.msra.mxu0 0.0
    %1403 = vmatpush.msra.mxu0 0.0
    %1404 = vmatpush.msra.mxu0 0.0
    %1405 = vmatpush.msra.mxu0 %v74
    %1406 = vmatpush.msra.mxu0 %v73
    %1407 = vmatpush.msra.mxu0 %v72
    %1408 = vmatpush.msra.mxu0 %v71
    %1409 = vmatpush.msra.mxu0 %v70
    %1410 = vmatpush.msra.mxu0 %v69
    %1411 = vmatpush.msra.mxu0 %v68
    %1412 = vmatpush.msra.mxu0 %v67
    %1413 = vmatmul.f32.gmra.mxu0 %v1392
    %v1414 = vpop.f32.mrf.mxu0
    %v1415 = vadd.f32 %v1388, %v1414
    %1416 = vmatmul.f32.gmra.mxu0 %v1395
    %v1417 = vpop.f32.mrf.mxu0
    %v1418 = vadd.f32 %v1388, %v1417
    %1419 = vdwg.mxu0
    %v1420 = vadd.f32 %v1351, %v1415
    %v1421 = vadd.f32 %v1352, %v1418
    %v1422 = vsel %vm79, %v1420, 0.0
    %1423 = vadd.xlane.f32.xlu0 %v1422
    %v1424 = vpop.xlane.xlu0 %1423
    %v1425 = vsel %vm79, %v1421, 0.0
    %1426 = vadd.xlane.f32.xlu0 %v1425
    %v1427 = vpop.xlane.xlu0 %1426
    %v1428 = vmul.f32 %v1424, %v672
    %v1429 = vmul.f32 %v1427, %v672
    %v1430 = vsub.f32 %v1420, %v1428
    %v1431 = vsub.f32 %v1421, %v1429
    %v1432 = vmul.f32 %v1430, %v1430
    %v1433 = vmul.f32 %v1431, %v1431
    %v1434 = vsel %vm79, %v1432, 0.0
    %1435 = vadd.xlane.f32.xlu0 %v1434
    %v1436 = vpop.xlane.xlu0 %1435
    %v1437 = vsel %vm79, %v1433, 0.0
    %1438 = vadd.xlane.f32.xlu0 %v1437
    %v1439 = vpop.xlane.xlu0 %1438
    %v1440 = vmul.f32 %v1436, %v672
    %v1441 = vmul.f32 %v1439, %v672
    %v1442 = vadd.f32 %v1440, 1e-05
    %v1443 = vadd.f32 %v1441, 1e-05
    %v1444 = vrsqrt.pop %v1442
    %v1445 = vmul.f32 %v1444, %v1442
    %v1446 = vmul.f32 %v1445, %v1444
    %v1447 = vmul.f32 0.5, %v1446
    %v1448 = vsub.f32 1.5, %v1447
    %v1449 = vmul.f32 %v1444, %v1448
    %vm1450 = vweird.f32 %v1442
    %vm1451 = vweird.f32 %v1444
    %vm1452 = vmor %vm1450, %vm1451
    %v1453 = vsel %vm1452, %v1444, %v1449
    %v1454 = vrsqrt.pop %v1443
    %v1455 = vmul.f32 %v1454, %v1443
    %v1456 = vmul.f32 %v1455, %v1454
    %v1457 = vmul.f32 0.5, %v1456
    %v1458 = vsub.f32 1.5, %v1457
    %v1459 = vmul.f32 %v1454, %v1458
    %vm1460 = vweird.f32 %v1443
    %vm1461 = vweird.f32 %v1454
    %vm1462 = vmor %vm1460, %vm1461
    %v1463 = vsel %vm1462, %v1454, %v1459
    %v1464 = vmul.f32 %v1430, %v1453
    %v1465 = vmul.f32 %v1431, %v1463
    %v1466 = vperm.slane %v60, 2
    %v1467 = vmul.f32 %v1464, %v1466
    %v1468 = vmul.f32 %v1465, %v1466
    %v1469 = vperm.slane %v61, 2
    %v1470 = vadd.f32 %v1467, %v1469
    %v1471 = vadd.f32 %v1468, %v1469
    %s1472 = scalar_lea.vmem %s4, 64
    %v1473 = vld [vmem:[%s1472] sm:$0xff]
    %v1474 = vld [vmem:[%s1472 + $0x8] sm:$0xff]
    %v1475 = vld [vmem:[%s1472 + $0x10] sm:$0xff]
    %v1476 = vld [vmem:[%s1472 + $0x18] sm:$0xff]
    %v1477 = vld [vmem:[%s1472 + $0x20] sm:$0xff]
    %v1478 = vld [vmem:[%s1472 + $0x28] sm:$0xff]
    %v1479 = vld [vmem:[%s1472 + $0x30] sm:$0xff]
    %v1480 = vld [vmem:[%s1472 + $0x38] sm:$0xff]
    %s1481 = scalar_lea.vmem %s5, 2
    %v1482 = vld [vmem:[%s1481] sm:$0x1]
    %v1483 = vld [vmem:[%s1481 + $0x1] sm:$0x1]
    %s1484 = scalar_lea.vmem %s6, 4
    %v1485 = vld [vmem:[%s1484] sm:$0x7]
    %s1486 = scalar_lea.vmem %s7, 4
    %v1487 = vld [vmem:[%s1486] sm:$0x7]
    %s1488 = scalar_lea.vmem %s8, 32
    %v1489 = vld [vmem:[%s1488] sm:$0xff]
    %v1490 = vld [vmem:[%s1488 + $0x8] sm:$0xff]
    %v1491 = vld [vmem:[%s1488 + $0x10] sm:$0xff]
    %v1492 = vld [vmem:[%s1488 + $0x18] sm:$0xff]
    %s1493 = scalar_lea.vmem %s9, 1
    %v1494 = vld [vmem:[%s1493] sm:$0x1]
    %s1495 = scalar_lea.vmem %s10, 64
    %v1496 = vld [vmem:[%s1495] sm:$0xff]
    %v1497 = vld [vmem:[%s1495 + $0x8] sm:$0xff]
    %v1498 = vld [vmem:[%s1495 + $0x10] sm:$0xff]
    %v1499 = vld [vmem:[%s1495 + $0x18] sm:$0xff]
    %v1500 = vld [vmem:[%s1495 + $0x20] sm:$0xff]
    %v1501 = vld [vmem:[%s1495 + $0x28] sm:$0xff]
    %v1502 = vld [vmem:[%s1495 + $0x30] sm:$0xff]
    %v1503 = vld [vmem:[%s1495 + $0x38] sm:$0xff]
    %s1504 = scalar_lea.vmem %s11, 1
    %v1505 = vld [vmem:[%s1504] sm:$0x1]
    %v1507 = vperm.slane %v1482, 0
    %v1510 = vsel %vm79, %v1470, 0
    %v1513 = vsel %vm79, %v1471, 0
    %1515 = vmatpush.msra.mxu0 0.0
    %1516 = vmatpush.msra.mxu0 0.0
    %1517 = vmatpush.msra.mxu0 0.0
    %1518 = vmatpush.msra.mxu0 0.0
    %1519 = vmatpush.msra.mxu0 0.0
    %1520 = vmatpush.msra.mxu0 0.0
    %1521 = vmatpush.msra.mxu0 0.0
    %1522 = vmatpush.msra.mxu0 0.0
    %1523 = vmatpush.msra.mxu0 0.0
    %1524 = vmatpush.msra.mxu0 0.0
    %1525 = vmatpush.msra.mxu0 0.0
    %1526 = vmatpush.msra.mxu0 0.0
    %1527 = vmatpush.msra.mxu0 %v1476
    %1528 = vmatpush.msra.mxu0 %v1475
    %1529 = vmatpush.msra.mxu0 %v1474
    %1530 = vmatpush.msra.mxu0 %v1473
    %1531 = vmatmul.f32.gmra.mxu0 %v1510
    %v1532 = vpop.f32.mrf.mxu0
    %v1533 = vadd.f32 %v1507, %v1532
    %1534 = vmatmul.f32.gmra.mxu0 %v1513
    %v1535 = vpop.f32.mrf.mxu0
    %v1536 = vadd.f32 %v1507, %v1535
    %1537 = vdwg.mxu0
    %1542 = vrot.lane.b32.xlu0 %v1473, 96
    %v1543 = vpop.permute.xlu0 %1542
    %1544 = vrot.lane.b32.xlu0 %v1474, 96
    %v1545 = vpop.permute.xlu0 %1544
    %1546 = vrot.lane.b32.xlu0 %v1475, 96
    %v1547 = vpop.permute.xlu0 %1546
    %1548 = vrot.lane.b32.xlu0 %v1476, 96
    %v1549 = vpop.permute.xlu0 %1548
    %1554 = vrot.lane.b32.xlu0 %v1507, 96
    %v1555 = vpop.permute.xlu0 %1554
    %1557 = vmatpush.msra.mxu0 0.0
    %1558 = vmatpush.msra.mxu0 0.0
    %1559 = vmatpush.msra.mxu0 0.0
    %1560 = vmatpush.msra.mxu0 0.0
    %1561 = vmatpush.msra.mxu0 0.0
    %1562 = vmatpush.msra.mxu0 0.0
    %1563 = vmatpush.msra.mxu0 0.0
    %1564 = vmatpush.msra.mxu0 0.0
    %1565 = vmatpush.msra.mxu0 0.0
    %1566 = vmatpush.msra.mxu0 0.0
    %1567 = vmatpush.msra.mxu0 0.0
    %1568 = vmatpush.msra.mxu0 0.0
    %1569 = vmatpush.msra.mxu0 %v1549
    %1570 = vmatpush.msra.mxu0 %v1547
    %1571 = vmatpush.msra.mxu0 %v1545
    %1572 = vmatpush.msra.mxu0 %v1543
    %1573 = vmatmul.f32.gmra.mxu0 %v1510
    %v1574 = vpop.f32.mrf.mxu0
    %v1575 = vadd.f32 %v1555, %v1574
    %1576 = vmatmul.f32.gmra.mxu0 %v1513
    %v1577 = vpop.f32.mrf.mxu0
    %v1578 = vadd.f32 %v1555, %v1577
    %1579 = vdwg.mxu0
    %1580 = vrot.lane.b32.xlu0 %v1473, 64
    %v1581 = vpop.permute.xlu0 %1580
    %1582 = vrot.lane.b32.xlu0 %v1474, 64
    %v1583 = vpop.permute.xlu0 %1582
    %1584 = vrot.lane.b32.xlu0 %v1475, 64
    %v1585 = vpop.permute.xlu0 %1584
    %1586 = vrot.lane.b32.xlu0 %v1476, 64
    %v1587 = vpop.permute.xlu0 %1586
    %1592 = vrot.lane.b32.xlu0 %v1507, 64
    %v1593 = vpop.permute.xlu0 %1592
    %1595 = vmatpush.msra.mxu0 0.0
    %1596 = vmatpush.msra.mxu0 0.0
    %1597 = vmatpush.msra.mxu0 0.0
    %1598 = vmatpush.msra.mxu0 0.0
    %1599 = vmatpush.msra.mxu0 0.0
    %1600 = vmatpush.msra.mxu0 0.0
    %1601 = vmatpush.msra.mxu0 0.0
    %1602 = vmatpush.msra.mxu0 0.0
    %1603 = vmatpush.msra.mxu0 0.0
    %1604 = vmatpush.msra.mxu0 0.0
    %1605 = vmatpush.msra.mxu0 0.0
    %1606 = vmatpush.msra.mxu0 0.0
    %1607 = vmatpush.msra.mxu0 %v1587
    %1608 = vmatpush.msra.mxu0 %v1585
    %1609 = vmatpush.msra.mxu0 %v1583
    %1610 = vmatpush.msra.mxu0 %v1581
    %1611 = vmatmul.f32.gmra.mxu0 %v1510
    %v1612 = vpop.f32.mrf.mxu0
    %v1613 = vadd.f32 %v1593, %v1612
    %1614 = vmatmul.f32.gmra.mxu0 %v1513
    %v1615 = vpop.f32.mrf.mxu0
    %v1616 = vadd.f32 %v1593, %v1615
    %1617 = vdwg.mxu0
    %v1619 = vsel %vm189, %v1533, 0
    %v1622 = vsel %vm189, %v1536, 0
    %v1625 = vsel %vm189, %v1575, 0
    %v1628 = vsel %vm189, %v1578, 0
    %1630 = vmatpush.xpose.msra.mxu0 0.0
    %1631 = vmatpush.xpose.msra.mxu0 0.0
    %1632 = vmatpush.xpose.msra.mxu0 0.0
    %1633 = vmatpush.xpose.msra.mxu0 0.0
    %1634 = vmatpush.xpose.msra.mxu0 0.0
    %1635 = vmatpush.xpose.msra.mxu0 0.0
    %1636 = vmatpush.xpose.msra.mxu0 0.0
    %1637 = vmatpush.xpose.msra.mxu0 0.0
    %1638 = vmatpush.xpose.msra.mxu0 0.0
    %1639 = vmatpush.xpose.msra.mxu0 0.0
    %1640 = vmatpush.xpose.msra.mxu0 0.0
    %1641 = vmatpush.xpose.msra.mxu0 0.0
    %1642 = vmatpush.xpose.msra.mxu0 0.0
    %1643 = vmatpush.xpose.msra.mxu0 0.0
    %1644 = vmatpush.xpose.msra.mxu0 %v1628
    %1645 = vmatpush.xpose.msra.mxu0 %v1625
    %1646 = vmatmul.f32.gmra.mxu0 %v1619
    %v1647 = vpop.f32.mrf.mxu0
    %v1648 = vadd.f32 0.0, %v1647
    %1649 = vmatmul.f32.gmra.mxu0 %v1622
    %v1650 = vpop.f32.mrf.mxu0
    %v1651 = vadd.f32 0.0, %v1650
    %1652 = vdwg.mxu0
    %v1653 = vmul.f32 %v1648, 0.35355338
    %v1654 = vmul.f32 %v1651, 0.35355338
    %v1655 = vadd.f32 %v1653, %v46
    %v1656 = vadd.f32 %v1654, %v47
    %v1657 = vsel %vm229, %v1655, -inf
    %1658 = vmax.xlane.f32.xlu0 %v1657
    %v1659 = vpop.xlane.xlu0 %1658
    %v1660 = vsel %vm229, %v1656, -inf
    %1661 = vmax.xlane.f32.xlu0 %v1660
    %v1662 = vpop.xlane.xlu0 %1661
    %v1663 = vsub.f32 %v1655, %v1659
    %v1664 = vsub.f32 %v1656, %v1662
    %v1665 = vmul.f32 %v1663, 1.442695
    %v1666 = vpow.pop %v1665
    %v1667 = vmul.f32 %v1664, 1.442695
    %v1668 = vpow.pop %v1667
    %v1669 = vsel %vm229, %v1666, 0.0
    %1670 = vadd.xlane.f32.xlu0 %v1669
    %v1671 = vpop.xlane.xlu0 %1670
    %v1672 = vsel %vm229, %v1668, 0.0
    %1673 = vadd.xlane.f32.xlu0 %v1672
    %v1674 = vpop.xlane.xlu0 %1673
    %v1675 = vrcp.pop %v1671
    %v1676 = vrcp.pop %v1674
    %v1677 = vmul.f32 %v1666, %v1675
    %v1678 = vmul.f32 %v1668, %v1676
    %v1680 = vsel %vm229, %v1677, 0
    %v1683 = vsel %vm229, %v1678, 0
    %1685 = vmatpush.msra.mxu0 0.0
    %1686 = vmatpush.msra.mxu0 0.0
    %1687 = vmatpush.msra.mxu0 0.0
    %1688 = vmatpush.msra.mxu0 0.0
    %1689 = vmatpush.msra.mxu0 0.0
    %1690 = vmatpush.msra.mxu0 0.0
    %1691 = vmatpush.msra.mxu0 0.0
    %1692 = vmatpush.msra.mxu0 0.0
    %1693 = vmatpush.msra.mxu0 0.0
    %1694 = vmatpush.msra.mxu0 0.0
    %1695 = vmatpush.msra.mxu0 0.0
    %1696 = vmatpush.msra.mxu0 0.0
    %1697 = vmatpush.msra.mxu0 0.0
    %1698 = vmatpush.msra.mxu0 0.0
    %1699 = vmatpush.msra.mxu0 %v1616
    %1700 = vmatpush.msra.mxu0 %v1613
    %1701 = vmatmul.f32.gmra.mxu0 %v1680
    %v1702 = vpop.f32.mrf.mxu0
    %v1703 = vadd.f32 0.0, %v1702
    %1704 = vmatmul.f32.gmra.mxu0 %v1683
    %v1705 = vpop.f32.mrf.mxu0
    %v1706 = vadd.f32 0.0, %v1705
    %1707 = vdwg.mxu0
    %1708 = vrot.lane.b32.xlu0 %v1533, 120
    %v1709 = vpop.permute.xlu0 %1708
    %1710 = vrot.lane.b32.xlu0 %v1536, 120
    %v1711 = vpop.permute.xlu0 %1710
    %1712 = vrot.lane.b32.xlu0 %v1575, 120
    %v1713 = vpop.permute.xlu0 %1712
    %1714 = vrot.lane.b32.xlu0 %v1578, 120
    %v1715 = vpop.permute.xlu0 %1714
    %v1716 = vsel %vm189, %v1709, 0
    %v1718 = vsel %vm189, %v1711, 0
    %v1720 = vsel %vm189, %v1713, 0
    %v1722 = vsel %vm189, %v1715, 0
    %1724 = vmatpush.xpose.msra.mxu0 0.0
    %1725 = vmatpush.xpose.msra.mxu0 0.0
    %1726 = vmatpush.xpose.msra.mxu0 0.0
    %1727 = vmatpush.xpose.msra.mxu0 0.0
    %1728 = vmatpush.xpose.msra.mxu0 0.0
    %1729 = vmatpush.xpose.msra.mxu0 0.0
    %1730 = vmatpush.xpose.msra.mxu0 0.0
    %1731 = vmatpush.xpose.msra.mxu0 0.0
    %1732 = vmatpush.xpose.msra.mxu0 0.0
    %1733 = vmatpush.xpose.msra.mxu0 0.0
    %1734 = vmatpush.xpose.msra.mxu0 0.0
    %1735 = vmatpush.xpose.msra.mxu0 0.0
    %1736 = vmatpush.xpose.msra.mxu0 0.0
    %1737 = vmatpush.xpose.msra.mxu0 0.0
    %1738 = vmatpush.xpose.msra.mxu0 %v1722
    %1739 = vmatpush.xpose.msra.mxu0 %v1720
    %1740 = vmatmul.f32.gmra.mxu0 %v1716
    %v1741 = vpop.f32.mrf.mxu0
    %v1742 = vadd.f32 0.0, %v1741
    %1743 = vmatmul.f32.gmra.mxu0 %v1718
    %v1744 = vpop.f32.mrf.mxu0
    %v1745 = vadd.f32 0.0, %v1744
    %1746 = vdwg.mxu0
    %v1747 = vmul.f32 %v1742, 0.35355338
    %v1748 = vmul.f32 %v1745, 0.35355338
    %v1749 = vadd.f32 %v1747, %v46
    %v1750 = vadd.f32 %v1748, %v47
    %v1751 = vsel %vm229, %v1749, -inf
    %1752 = vmax.xlane.f32.xlu0 %v1751
    %v1753 = vpop.xlane.xlu0 %1752
    %v1754 = vsel %vm229, %v1750, -inf
    %1755 = vmax.xlane.f32.xlu0 %v1754
    %v1756 = vpop.xlane.xlu0 %1755
    %v1757 = vsub.f32 %v1749, %v1753
    %v1758 = vsub.f32 %v1750, %v1756
    %v1759 = vmul.f32 %v1757, 1.442695
    %v1760 = vpow.pop %v1759
    %v1761 = vmul.f32 %v1758, 1.442695
    %v1762 = vpow.pop %v1761
    %v1763 = vsel %vm229, %v1760, 0.0
    %1764 = vadd.xlane.f32.xlu0 %v1763
    %v1765 = vpop.xlane.xlu0 %1764
    %v1766 = vsel %vm229, %v1762, 0.0
    %1767 = vadd.xlane.f32.xlu0 %v1766
    %v1768 = vpop.xlane.xlu0 %1767
    %v1769 = vrcp.pop %v1765
    %v1770 = vrcp.pop %v1768
    %v1771 = vmul.f32 %v1760, %v1769
    %v1772 = vmul.f32 %v1762, %v1770
    %1775 = vrot.lane.b32.xlu0 %v1613, 120
    %v1776 = vpop.permute.xlu0 %1775
    %1777 = vrot.lane.b32.xlu0 %v1616, 120
    %v1778 = vpop.permute.xlu0 %1777
    %v1782 = vsel %vm229, %v1771, 0
    %v1785 = vsel %vm229, %v1772, 0
    %1787 = vmatpush.msra.mxu0 0.0
    %1788 = vmatpush.msra.mxu0 0.0
    %1789 = vmatpush.msra.mxu0 0.0
    %1790 = vmatpush.msra.mxu0 0.0
    %1791 = vmatpush.msra.mxu0 0.0
    %1792 = vmatpush.msra.mxu0 0.0
    %1793 = vmatpush.msra.mxu0 0.0
    %1794 = vmatpush.msra.mxu0 0.0
    %1795 = vmatpush.msra.mxu0 0.0
    %1796 = vmatpush.msra.mxu0 0.0
    %1797 = vmatpush.msra.mxu0 0.0
    %1798 = vmatpush.msra.mxu0 0.0
    %1799 = vmatpush.msra.mxu0 0.0
    %1800 = vmatpush.msra.mxu0 0.0
    %1801 = vmatpush.msra.mxu0 %v1778
    %1802 = vmatpush.msra.mxu0 %v1776
    %1803 = vmatmul.f32.gmra.mxu0 %v1782
    %v1804 = vpop.f32.mrf.mxu0
    %v1805 = vadd.f32 0.0, %v1804
    %1806 = vmatmul.f32.gmra.mxu0 %v1785
    %v1807 = vpop.f32.mrf.mxu0
    %v1808 = vadd.f32 0.0, %v1807
    %1809 = vdwg.mxu0
    %1810 = vrot.lane.b32.xlu0 %v1533, 112
    %v1811 = vpop.permute.xlu0 %1810
    %1812 = vrot.lane.b32.xlu0 %v1536, 112
    %v1813 = vpop.permute.xlu0 %1812
    %1814 = vrot.lane.b32.xlu0 %v1575, 112
    %v1815 = vpop.permute.xlu0 %1814
    %1816 = vrot.lane.b32.xlu0 %v1578, 112
    %v1817 = vpop.permute.xlu0 %1816
    %v1818 = vsel %vm189, %v1811, 0
    %v1820 = vsel %vm189, %v1813, 0
    %v1822 = vsel %vm189, %v1815, 0
    %v1824 = vsel %vm189, %v1817, 0
    %1826 = vmatpush.xpose.msra.mxu0 0.0
    %1827 = vmatpush.xpose.msra.mxu0 0.0
    %1828 = vmatpush.xpose.msra.mxu0 0.0
    %1829 = vmatpush.xpose.msra.mxu0 0.0
    %1830 = vmatpush.xpose.msra.mxu0 0.0
    %1831 = vmatpush.xpose.msra.mxu0 0.0
    %1832 = vmatpush.xpose.msra.mxu0 0.0
    %1833 = vmatpush.xpose.msra.mxu0 0.0
    %1834 = vmatpush.xpose.msra.mxu0 0.0
    %1835 = vmatpush.xpose.msra.mxu0 0.0
    %1836 = vmatpush.xpose.msra.mxu0 0.0
    %1837 = vmatpush.xpose.msra.mxu0 0.0
    %1838 = vmatpush.xpose.msra.mxu0 0.0
    %1839 = vmatpush.xpose.msra.mxu0 0.0
    %1840 = vmatpush.xpose.msra.mxu0 %v1824
    %1841 = vmatpush.xpose.msra.mxu0 %v1822
    %1842 = vmatmul.f32.gmra.mxu0 %v1818
    %v1843 = vpop.f32.mrf.mxu0
    %v1844 = vadd.f32 0.0, %v1843
    %1845 = vmatmul.f32.gmra.mxu0 %v1820
    %v1846 = vpop.f32.mrf.mxu0
    %v1847 = vadd.f32 0.0, %v1846
    %1848 = vdwg.mxu0
    %v1849 = vmul.f32 %v1844, 0.35355338
    %v1850 = vmul.f32 %v1847, 0.35355338
    %v1851 = vadd.f32 %v1849, %v46
    %v1852 = vadd.f32 %v1850, %v47
    %v1853 = vsel %vm229, %v1851, -inf
    %1854 = vmax.xlane.f32.xlu0 %v1853
    %v1855 = vpop.xlane.xlu0 %1854
    %v1856 = vsel %vm229, %v1852, -inf
    %1857 = vmax.xlane.f32.xlu0 %v1856
    %v1858 = vpop.xlane.xlu0 %1857
    %v1859 = vsub.f32 %v1851, %v1855
    %v1860 = vsub.f32 %v1852, %v1858
    %v1861 = vmul.f32 %v1859, 1.442695
    %v1862 = vpow.pop %v1861
    %v1863 = vmul.f32 %v1860, 1.442695
    %v1864 = vpow.pop %v1863
    %v1865 = vsel %vm229, %v1862, 0.0
    %1866 = vadd.xlane.f32.xlu0 %v1865
    %v1867 = vpop.xlane.xlu0 %1866
    %v1868 = vsel %vm229, %v1864, 0.0
    %1869 = vadd.xlane.f32.xlu0 %v1868
    %v1870 = vpop.xlane.xlu0 %1869
    %v1871 = vrcp.pop %v1867
    %v1872 = vrcp.pop %v1870
    %v1873 = vmul.f32 %v1862, %v1871
    %v1874 = vmul.f32 %v1864, %v1872
    %1875 = vrot.lane.b32.xlu0 %v1613, 112
    %v1876 = vpop.permute.xlu0 %1875
    %1877 = vrot.lane.b32.xlu0 %v1616, 112
    %v1878 = vpop.permute.xlu0 %1877
    %v1882 = vsel %vm229, %v1873, 0
    %v1885 = vsel %vm229, %v1874, 0
    %1887 = vmatpush.msra.mxu0 0.0
    %1888 = vmatpush.msra.mxu0 0.0
    %1889 = vmatpush.msra.mxu0 0.0
    %1890 = vmatpush.msra.mxu0 0.0
    %1891 = vmatpush.msra.mxu0 0.0
    %1892 = vmatpush.msra.mxu0 0.0
    %1893 = vmatpush.msra.mxu0 0.0
    %1894 = vmatpush.msra.mxu0 0.0
    %1895 = vmatpush.msra.mxu0 0.0
    %1896 = vmatpush.msra.mxu0 0.0
    %1897 = vmatpush.msra.mxu0 0.0
    %1898 = vmatpush.msra.mxu0 0.0
    %1899 = vmatpush.msra.mxu0 0.0
    %1900 = vmatpush.msra.mxu0 0.0
    %1901 = vmatpush.msra.mxu0 %v1878
    %1902 = vmatpush.msra.mxu0 %v1876
    %1903 = vmatmul.f32.gmra.mxu0 %v1882
    %v1904 = vpop.f32.mrf.mxu0
    %v1905 = vadd.f32 0.0, %v1904
    %1906 = vmatmul.f32.gmra.mxu0 %v1885
    %v1907 = vpop.f32.mrf.mxu0
    %v1908 = vadd.f32 0.0, %v1907
    %1909 = vdwg.mxu0
    %1910 = vrot.lane.b32.xlu0 %v1533, 104
    %v1911 = vpop.permute.xlu0 %1910
    %1912 = vrot.lane.b32.xlu0 %v1536, 104
    %v1913 = vpop.permute.xlu0 %1912
    %1914 = vrot.lane.b32.xlu0 %v1575, 104
    %v1915 = vpop.permute.xlu0 %1914
    %1916 = vrot.lane.b32.xlu0 %v1578, 104
    %v1917 = vpop.permute.xlu0 %1916
    %v1918 = vsel %vm189, %v1911, 0
    %v1920 = vsel %vm189, %v1913, 0
    %v1922 = vsel %vm189, %v1915, 0
    %v1924 = vsel %vm189, %v1917, 0
    %1926 = vmatpush.xpose.msra.mxu0 0.0
    %1927 = vmatpush.xpose.msra.mxu0 0.0
    %1928 = vmatpush.xpose.msra.mxu0 0.0
    %1929 = vmatpush.xpose.msra.mxu0 0.0
    %1930 = vmatpush.xpose.msra.mxu0 0.0
    %1931 = vmatpush.xpose.msra.mxu0 0.0
    %1932 = vmatpush.xpose.msra.mxu0 0.0
    %1933 = vmatpush.xpose.msra.mxu0 0.0
    %1934 = vmatpush.xpose.msra.mxu0 0.0
    %1935 = vmatpush.xpose.msra.mxu0 0.0
    %1936 = vmatpush.xpose.msra.mxu0 0.0
    %1937 = vmatpush.xpose.msra.mxu0 0.0
    %1938 = vmatpush.xpose.msra.mxu0 0.0
    %1939 = vmatpush.xpose.msra.mxu0 0.0
    %1940 = vmatpush.xpose.msra.mxu0 %v1924
    %1941 = vmatpush.xpose.msra.mxu0 %v1922
    %1942 = vmatmul.f32.gmra.mxu0 %v1918
    %v1943 = vpop.f32.mrf.mxu0
    %v1944 = vadd.f32 0.0, %v1943
    %1945 = vmatmul.f32.gmra.mxu0 %v1920
    %v1946 = vpop.f32.mrf.mxu0
    %v1947 = vadd.f32 0.0, %v1946
    %1948 = vdwg.mxu0
    %v1949 = vmul.f32 %v1944, 0.35355338
    %v1950 = vmul.f32 %v1947, 0.35355338
    %v1951 = vadd.f32 %v1949, %v46
    %v1952 = vadd.f32 %v1950, %v47
    %v1953 = vsel %vm229, %v1951, -inf
    %1954 = vmax.xlane.f32.xlu0 %v1953
    %v1955 = vpop.xlane.xlu0 %1954
    %v1956 = vsel %vm229, %v1952, -inf
    %1957 = vmax.xlane.f32.xlu0 %v1956
    %v1958 = vpop.xlane.xlu0 %1957
    %v1959 = vsub.f32 %v1951, %v1955
    %v1960 = vsub.f32 %v1952, %v1958
    %v1961 = vmul.f32 %v1959, 1.442695
    %v1962 = vpow.pop %v1961
    %v1963 = vmul.f32 %v1960, 1.442695
    %v1964 = vpow.pop %v1963
    %v1965 = vsel %vm229, %v1962, 0.0
    %1966 = vadd.xlane.f32.xlu0 %v1965
    %v1967 = vpop.xlane.xlu0 %1966
    %v1968 = vsel %vm229, %v1964, 0.0
    %1969 = vadd.xlane.f32.xlu0 %v1968
    %v1970 = vpop.xlane.xlu0 %1969
    %v1971 = vrcp.pop %v1967
    %v1972 = vrcp.pop %v1970
    %v1973 = vmul.f32 %v1962, %v1971
    %v1974 = vmul.f32 %v1964, %v1972
    %1975 = vrot.lane.b32.xlu0 %v1613, 104
    %v1976 = vpop.permute.xlu0 %1975
    %1977 = vrot.lane.b32.xlu0 %v1616, 104
    %v1978 = vpop.permute.xlu0 %1977
    %v1982 = vsel %vm229, %v1973, 0
    %v1985 = vsel %vm229, %v1974, 0
    %1987 = vmatpush.msra.mxu0 0.0
    %1988 = vmatpush.msra.mxu0 0.0
    %1989 = vmatpush.msra.mxu0 0.0
    %1990 = vmatpush.msra.mxu0 0.0
    %1991 = vmatpush.msra.mxu0 0.0
    %1992 = vmatpush.msra.mxu0 0.0
    %1993 = vmatpush.msra.mxu0 0.0
    %1994 = vmatpush.msra.mxu0 0.0
    %1995 = vmatpush.msra.mxu0 0.0
    %1996 = vmatpush.msra.mxu0 0.0
    %1997 = vmatpush.msra.mxu0 0.0
    %1998 = vmatpush.msra.mxu0 0.0
    %1999 = vmatpush.msra.mxu0 0.0
    %2000 = vmatpush.msra.mxu0 0.0
    %2001 = vmatpush.msra.mxu0 %v1978
    %2002 = vmatpush.msra.mxu0 %v1976
    %2003 = vmatmul.f32.gmra.mxu0 %v1982
    %v2004 = vpop.f32.mrf.mxu0
    %v2005 = vadd.f32 0.0, %v2004
    %2006 = vmatmul.f32.gmra.mxu0 %v1985
    %v2007 = vpop.f32.mrf.mxu0
    %v2008 = vadd.f32 0.0, %v2007
    %2009 = vdwg.mxu0
    %2012 = vrot.lane.b32.xlu0 %v1805, 8
    %v2013 = vpop.permute.xlu0 %2012
    %2014 = vrot.lane.b32.xlu0 %v1808, 8
    %v2015 = vpop.permute.xlu0 %2014
    %2020 = vrot.lane.b32.xlu0 %v1905, 16
    %v2021 = vpop.permute.xlu0 %2020
    %2022 = vrot.lane.b32.xlu0 %v1908, 16
    %v2023 = vpop.permute.xlu0 %2022
    %2028 = vrot.lane.b32.xlu0 %v2005, 24
    %v2029 = vpop.permute.xlu0 %2028
    %2030 = vrot.lane.b32.xlu0 %v2008, 24
    %v2031 = vpop.permute.xlu0 %2030
    %v2034 = vsel %vm189, %v1703, %v2013
    %v2035 = vsel %vm189, %v1706, %v2015
    %v2036 = vsel %vm229, %v2034, %v2021
    %v2037 = vsel %vm229, %v2035, %v2023
    %v2038 = vsel %vm611, %v2036, %v2029
    %v2039 = vsel %vm611, %v2037, %v2031
    %2040 = vrot.lane.b32.xlu0 %v1473, 32
    %v2041 = vpop.permute.xlu0 %2040
    %2042 = vrot.lane.b32.xlu0 %v1474, 32
    %v2043 = vpop.permute.xlu0 %2042
    %2044 = vrot.lane.b32.xlu0 %v1475, 32
    %v2045 = vpop.permute.xlu0 %2044
    %2046 = vrot.lane.b32.xlu0 %v1476, 32
    %v2047 = vpop.permute.xlu0 %2046
    %2052 = vrot.lane.b32.xlu0 %v1507, 32
    %v2053 = vpop.permute.xlu0 %2052
    %v2056 = vsel %vm79, %v2038, 0
    %v2059 = vsel %vm79, %v2039, 0
    %2061 = vmatpush.msra.mxu0 0.0
    %2062 = vmatpush.msra.mxu0 0.0
    %2063 = vmatpush.msra.mxu0 0.0
    %2064 = vmatpush.msra.mxu0 0.0
    %2065 = vmatpush.msra.mxu0 0.0
    %2066 = vmatpush.msra.mxu0 0.0
    %2067 = vmatpush.msra.mxu0 0.0
    %2068 = vmatpush.msra.mxu0 0.0
    %2069 = vmatpush.msra.mxu0 0.0
    %2070 = vmatpush.msra.mxu0 0.0
    %2071 = vmatpush.msra.mxu0 0.0
    %2072 = vmatpush.msra.mxu0 0.0
    %2073 = vmatpush.msra.mxu0 %v2047
    %2074 = vmatpush.msra.mxu0 %v2045
    %2075 = vmatpush.msra.mxu0 %v2043
    %2076 = vmatpush.msra.mxu0 %v2041
    %2077 = vmatmul.f32.gmra.mxu0 %v2056
    %v2078 = vpop.f32.mrf.mxu0
    %v2079 = vadd.f32 %v2053, %v2078
    %2080 = vmatmul.f32.gmra.mxu0 %v2059
    %v2081 = vpop.f32.mrf.mxu0
    %v2082 = vadd.f32 %v2053, %v2081
    %2083 = vdwg.mxu0
    %v2084 = vadd.f32 %v1470, %v2079
    %v2085 = vadd.f32 %v1471, %v2082
    %v2086 = vsel %vm79, %v2084, 0.0
    %2087 = vadd.xlane.f32.xlu0 %v2086
    %v2088 = vpop.xlane.xlu0 %2087
    %v2089 = vsel %vm79, %v2085, 0.0
    %2090 = vadd.xlane.f32.xlu0 %v2089
    %v2091 = vpop.xlane.xlu0 %2090
    %v2092 = vmul.f32 %v2088, %v672
    %v2093 = vmul.f32 %v2091, %v672
    %v2094 = vsub.f32 %v2084, %v2092
    %v2095 = vsub.f32 %v2085, %v2093
    %v2096 = vmul.f32 %v2094, %v2094
    %v2097 = vmul.f32 %v2095, %v2095
    %v2098 = vsel %vm79, %v2096, 0.0
    %2099 = vadd.xlane.f32.xlu0 %v2098
    %v2100 = vpop.xlane.xlu0 %2099
    %v2101 = vsel %vm79, %v2097, 0.0
    %2102 = vadd.xlane.f32.xlu0 %v2101
    %v2103 = vpop.xlane.xlu0 %2102
    %v2104 = vmul.f32 %v2100, %v672
    %v2105 = vmul.f32 %v2103, %v672
    %v2106 = vadd.f32 %v2104, 1e-05
    %v2107 = vadd.f32 %v2105, 1e-05
    %v2108 = vrsqrt.pop %v2106
    %v2109 = vmul.f32 %v2108, %v2106
    %v2110 = vmul.f32 %v2109, %v2108
    %v2111 = vmul.f32 0.5, %v2110
    %v2112 = vsub.f32 1.5, %v2111
    %v2113 = vmul.f32 %v2108, %v2112
    %vm2114 = vweird.f32 %v2106
    %vm2115 = vweird.f32 %v2108
    %vm2116 = vmor %vm2114, %vm2115
    %v2117 = vsel %vm2116, %v2108, %v2113
    %v2118 = vrsqrt.pop %v2107
    %v2119 = vmul.f32 %v2118, %v2107
    %v2120 = vmul.f32 %v2119, %v2118
    %v2121 = vmul.f32 0.5, %v2120
    %v2122 = vsub.f32 1.5, %v2121
    %v2123 = vmul.f32 %v2118, %v2122
    %vm2124 = vweird.f32 %v2107
    %vm2125 = vweird.f32 %v2118
    %vm2126 = vmor %vm2124, %vm2125
    %v2127 = vsel %vm2126, %v2118, %v2123
    %v2128 = vmul.f32 %v2094, %v2117
    %v2129 = vmul.f32 %v2095, %v2127
    %v2130 = vperm.slane %v1485, 0
    %v2131 = vmul.f32 %v2128, %v2130
    %v2132 = vmul.f32 %v2129, %v2130
    %v2133 = vperm.slane %v1487, 0
    %v2134 = vadd.f32 %v2131, %v2133
    %v2135 = vadd.f32 %v2132, %v2133
    %v2137 = vperm.slane %v1483, 0
    %v2140 = vsel %vm79, %v2134, 0
    %v2143 = vsel %vm79, %v2135, 0
    %2145 = vmatpush.msra.mxu0 0.0
    %2146 = vmatpush.msra.mxu0 0.0
    %2147 = vmatpush.msra.mxu0 0.0
    %2148 = vmatpush.msra.mxu0 0.0
    %2149 = vmatpush.msra.mxu0 0.0
    %2150 = vmatpush.msra.mxu0 0.0
    %2151 = vmatpush.msra.mxu0 0.0
    %2152 = vmatpush.msra.mxu0 0.0
    %2153 = vmatpush.msra.mxu0 0.0
    %2154 = vmatpush.msra.mxu0 0.0
    %2155 = vmatpush.msra.mxu0 0.0
    %2156 = vmatpush.msra.mxu0 0.0
    %2157 = vmatpush.msra.mxu0 %v1480
    %2158 = vmatpush.msra.mxu0 %v1479
    %2159 = vmatpush.msra.mxu0 %v1478
    %2160 = vmatpush.msra.mxu0 %v1477
    %2161 = vmatmul.f32.gmra.mxu0 %v2140
    %v2162 = vpop.f32.mrf.mxu0
    %v2163 = vadd.f32 %v2137, %v2162
    %2164 = vmatmul.f32.gmra.mxu0 %v2143
    %v2165 = vpop.f32.mrf.mxu0
    %v2166 = vadd.f32 %v2137, %v2165
    %2167 = vdwg.mxu0
    %2172 = vrot.lane.b32.xlu0 %v1477, 96
    %v2173 = vpop.permute.xlu0 %2172
    %2174 = vrot.lane.b32.xlu0 %v1478, 96
    %v2175 = vpop.permute.xlu0 %2174
    %2176 = vrot.lane.b32.xlu0 %v1479, 96
    %v2177 = vpop.permute.xlu0 %2176
    %2178 = vrot.lane.b32.xlu0 %v1480, 96
    %v2179 = vpop.permute.xlu0 %2178
    %2184 = vrot.lane.b32.xlu0 %v2137, 96
    %v2185 = vpop.permute.xlu0 %2184
    %2187 = vmatpush.msra.mxu0 0.0
    %2188 = vmatpush.msra.mxu0 0.0
    %2189 = vmatpush.msra.mxu0 0.0
    %2190 = vmatpush.msra.mxu0 0.0
    %2191 = vmatpush.msra.mxu0 0.0
    %2192 = vmatpush.msra.mxu0 0.0
    %2193 = vmatpush.msra.mxu0 0.0
    %2194 = vmatpush.msra.mxu0 0.0
    %2195 = vmatpush.msra.mxu0 0.0
    %2196 = vmatpush.msra.mxu0 0.0
    %2197 = vmatpush.msra.mxu0 0.0
    %2198 = vmatpush.msra.mxu0 0.0
    %2199 = vmatpush.msra.mxu0 %v2179
    %2200 = vmatpush.msra.mxu0 %v2177
    %2201 = vmatpush.msra.mxu0 %v2175
    %2202 = vmatpush.msra.mxu0 %v2173
    %2203 = vmatmul.f32.gmra.mxu0 %v769
    %v2204 = vpop.f32.mrf.mxu0
    %v2205 = vadd.f32 %v2185, %v2204
    %2206 = vmatmul.f32.gmra.mxu0 %v772
    %v2207 = vpop.f32.mrf.mxu0
    %v2208 = vadd.f32 %v2185, %v2207
    %2209 = vdwg.mxu0
    %2210 = vrot.lane.b32.xlu0 %v1477, 64
    %v2211 = vpop.permute.xlu0 %2210
    %2212 = vrot.lane.b32.xlu0 %v1478, 64
    %v2213 = vpop.permute.xlu0 %2212
    %2214 = vrot.lane.b32.xlu0 %v1479, 64
    %v2215 = vpop.permute.xlu0 %2214
    %2216 = vrot.lane.b32.xlu0 %v1480, 64
    %v2217 = vpop.permute.xlu0 %2216
    %2222 = vrot.lane.b32.xlu0 %v2137, 64
    %v2223 = vpop.permute.xlu0 %2222
    %2225 = vmatpush.msra.mxu0 0.0
    %2226 = vmatpush.msra.mxu0 0.0
    %2227 = vmatpush.msra.mxu0 0.0
    %2228 = vmatpush.msra.mxu0 0.0
    %2229 = vmatpush.msra.mxu0 0.0
    %2230 = vmatpush.msra.mxu0 0.0
    %2231 = vmatpush.msra.mxu0 0.0
    %2232 = vmatpush.msra.mxu0 0.0
    %2233 = vmatpush.msra.mxu0 0.0
    %2234 = vmatpush.msra.mxu0 0.0
    %2235 = vmatpush.msra.mxu0 0.0
    %2236 = vmatpush.msra.mxu0 0.0
    %2237 = vmatpush.msra.mxu0 %v2217
    %2238 = vmatpush.msra.mxu0 %v2215
    %2239 = vmatpush.msra.mxu0 %v2213
    %2240 = vmatpush.msra.mxu0 %v2211
    %2241 = vmatmul.f32.gmra.mxu0 %v769
    %v2242 = vpop.f32.mrf.mxu0
    %v2243 = vadd.f32 %v2223, %v2242
    %2244 = vmatmul.f32.gmra.mxu0 %v772
    %v2245 = vpop.f32.mrf.mxu0
    %v2246 = vadd.f32 %v2223, %v2245
    %2247 = vdwg.mxu0
    %v2249 = vsel %vm189, %v2163, 0
    %v2252 = vsel %vm189, %v2166, 0
    %v2255 = vsel %vm189, %v2205, 0
    %v2258 = vsel %vm189, %v2208, 0
    %2260 = vmatpush.xpose.msra.mxu0 0.0
    %2261 = vmatpush.xpose.msra.mxu0 0.0
    %2262 = vmatpush.xpose.msra.mxu0 0.0
    %2263 = vmatpush.xpose.msra.mxu0 0.0
    %2264 = vmatpush.xpose.msra.mxu0 0.0
    %2265 = vmatpush.xpose.msra.mxu0 0.0
    %2266 = vmatpush.xpose.msra.mxu0 0.0
    %2267 = vmatpush.xpose.msra.mxu0 0.0
    %2268 = vmatpush.xpose.msra.mxu0 0.0
    %2269 = vmatpush.xpose.msra.mxu0 0.0
    %2270 = vmatpush.xpose.msra.mxu0 0.0
    %2271 = vmatpush.xpose.msra.mxu0 0.0
    %2272 = vmatpush.xpose.msra.mxu0 0.0
    %2273 = vmatpush.xpose.msra.mxu0 0.0
    %2274 = vmatpush.xpose.msra.mxu0 %v2258
    %2275 = vmatpush.xpose.msra.mxu0 %v2255
    %2276 = vmatmul.f32.gmra.mxu0 %v2249
    %v2277 = vpop.f32.mrf.mxu0
    %v2278 = vadd.f32 0.0, %v2277
    %2279 = vmatmul.f32.gmra.mxu0 %v2252
    %v2280 = vpop.f32.mrf.mxu0
    %v2281 = vadd.f32 0.0, %v2280
    %2282 = vdwg.mxu0
    %v2283 = vmul.f32 %v2278, 0.35355338
    %v2284 = vmul.f32 %v2281, 0.35355338
    %v2285 = vadd.f32 %v2283, %v48
    %v2286 = vadd.f32 %v2284, %v49
    %v2287 = vsel %vm229, %v2285, -inf
    %2288 = vmax.xlane.f32.xlu0 %v2287
    %v2289 = vpop.xlane.xlu0 %2288
    %v2290 = vsel %vm229, %v2286, -inf
    %2291 = vmax.xlane.f32.xlu0 %v2290
    %v2292 = vpop.xlane.xlu0 %2291
    %v2293 = vsub.f32 %v2285, %v2289
    %v2294 = vsub.f32 %v2286, %v2292
    %v2295 = vmul.f32 %v2293, 1.442695
    %v2296 = vpow.pop %v2295
    %v2297 = vmul.f32 %v2294, 1.442695
    %v2298 = vpow.pop %v2297
    %v2299 = vsel %vm229, %v2296, 0.0
    %2300 = vadd.xlane.f32.xlu0 %v2299
    %v2301 = vpop.xlane.xlu0 %2300
    %v2302 = vsel %vm229, %v2298, 0.0
    %2303 = vadd.xlane.f32.xlu0 %v2302
    %v2304 = vpop.xlane.xlu0 %2303
    %v2305 = vrcp.pop %v2301
    %v2306 = vrcp.pop %v2304
    %v2307 = vmul.f32 %v2296, %v2305
    %v2308 = vmul.f32 %v2298, %v2306
    %v2310 = vsel %vm229, %v2307, 0
    %v2313 = vsel %vm229, %v2308, 0
    %2315 = vmatpush.msra.mxu0 0.0
    %2316 = vmatpush.msra.mxu0 0.0
    %2317 = vmatpush.msra.mxu0 0.0
    %2318 = vmatpush.msra.mxu0 0.0
    %2319 = vmatpush.msra.mxu0 0.0
    %2320 = vmatpush.msra.mxu0 0.0
    %2321 = vmatpush.msra.mxu0 0.0
    %2322 = vmatpush.msra.mxu0 0.0
    %2323 = vmatpush.msra.mxu0 0.0
    %2324 = vmatpush.msra.mxu0 0.0
    %2325 = vmatpush.msra.mxu0 0.0
    %2326 = vmatpush.msra.mxu0 0.0
    %2327 = vmatpush.msra.mxu0 0.0
    %2328 = vmatpush.msra.mxu0 0.0
    %2329 = vmatpush.msra.mxu0 %v2246
    %2330 = vmatpush.msra.mxu0 %v2243
    %2331 = vmatmul.f32.gmra.mxu0 %v2310
    %v2332 = vpop.f32.mrf.mxu0
    %v2333 = vadd.f32 0.0, %v2332
    %2334 = vmatmul.f32.gmra.mxu0 %v2313
    %v2335 = vpop.f32.mrf.mxu0
    %v2336 = vadd.f32 0.0, %v2335
    %2337 = vdwg.mxu0
    %2338 = vrot.lane.b32.xlu0 %v2163, 120
    %v2339 = vpop.permute.xlu0 %2338
    %2340 = vrot.lane.b32.xlu0 %v2166, 120
    %v2341 = vpop.permute.xlu0 %2340
    %2342 = vrot.lane.b32.xlu0 %v2205, 120
    %v2343 = vpop.permute.xlu0 %2342
    %2344 = vrot.lane.b32.xlu0 %v2208, 120
    %v2345 = vpop.permute.xlu0 %2344
    %v2346 = vsel %vm189, %v2339, 0
    %v2348 = vsel %vm189, %v2341, 0
    %v2350 = vsel %vm189, %v2343, 0
    %v2352 = vsel %vm189, %v2345, 0
    %2354 = vmatpush.xpose.msra.mxu0 0.0
    %2355 = vmatpush.xpose.msra.mxu0 0.0
    %2356 = vmatpush.xpose.msra.mxu0 0.0
    %2357 = vmatpush.xpose.msra.mxu0 0.0
    %2358 = vmatpush.xpose.msra.mxu0 0.0
    %2359 = vmatpush.xpose.msra.mxu0 0.0
    %2360 = vmatpush.xpose.msra.mxu0 0.0
    %2361 = vmatpush.xpose.msra.mxu0 0.0
    %2362 = vmatpush.xpose.msra.mxu0 0.0
    %2363 = vmatpush.xpose.msra.mxu0 0.0
    %2364 = vmatpush.xpose.msra.mxu0 0.0
    %2365 = vmatpush.xpose.msra.mxu0 0.0
    %2366 = vmatpush.xpose.msra.mxu0 0.0
    %2367 = vmatpush.xpose.msra.mxu0 0.0
    %2368 = vmatpush.xpose.msra.mxu0 %v2352
    %2369 = vmatpush.xpose.msra.mxu0 %v2350
    %2370 = vmatmul.f32.gmra.mxu0 %v2346
    %v2371 = vpop.f32.mrf.mxu0
    %v2372 = vadd.f32 0.0, %v2371
    %2373 = vmatmul.f32.gmra.mxu0 %v2348
    %v2374 = vpop.f32.mrf.mxu0
    %v2375 = vadd.f32 0.0, %v2374
    %2376 = vdwg.mxu0
    %v2377 = vmul.f32 %v2372, 0.35355338
    %v2378 = vmul.f32 %v2375, 0.35355338
    %v2379 = vadd.f32 %v2377, %v48
    %v2380 = vadd.f32 %v2378, %v49
    %v2381 = vsel %vm229, %v2379, -inf
    %2382 = vmax.xlane.f32.xlu0 %v2381
    %v2383 = vpop.xlane.xlu0 %2382
    %v2384 = vsel %vm229, %v2380, -inf
    %2385 = vmax.xlane.f32.xlu0 %v2384
    %v2386 = vpop.xlane.xlu0 %2385
    %v2387 = vsub.f32 %v2379, %v2383
    %v2388 = vsub.f32 %v2380, %v2386
    %v2389 = vmul.f32 %v2387, 1.442695
    %v2390 = vpow.pop %v2389
    %v2391 = vmul.f32 %v2388, 1.442695
    %v2392 = vpow.pop %v2391
    %v2393 = vsel %vm229, %v2390, 0.0
    %2394 = vadd.xlane.f32.xlu0 %v2393
    %v2395 = vpop.xlane.xlu0 %2394
    %v2396 = vsel %vm229, %v2392, 0.0
    %2397 = vadd.xlane.f32.xlu0 %v2396
    %v2398 = vpop.xlane.xlu0 %2397
    %v2399 = vrcp.pop %v2395
    %v2400 = vrcp.pop %v2398
    %v2401 = vmul.f32 %v2390, %v2399
    %v2402 = vmul.f32 %v2392, %v2400
    %2405 = vrot.lane.b32.xlu0 %v2243, 120
    %v2406 = vpop.permute.xlu0 %2405
    %2407 = vrot.lane.b32.xlu0 %v2246, 120
    %v2408 = vpop.permute.xlu0 %2407
    %v2412 = vsel %vm229, %v2401, 0
    %v2415 = vsel %vm229, %v2402, 0
    %2417 = vmatpush.msra.mxu0 0.0
    %2418 = vmatpush.msra.mxu0 0.0
    %2419 = vmatpush.msra.mxu0 0.0
    %2420 = vmatpush.msra.mxu0 0.0
    %2421 = vmatpush.msra.mxu0 0.0
    %2422 = vmatpush.msra.mxu0 0.0
    %2423 = vmatpush.msra.mxu0 0.0
    %2424 = vmatpush.msra.mxu0 0.0
    %2425 = vmatpush.msra.mxu0 0.0
    %2426 = vmatpush.msra.mxu0 0.0
    %2427 = vmatpush.msra.mxu0 0.0
    %2428 = vmatpush.msra.mxu0 0.0
    %2429 = vmatpush.msra.mxu0 0.0
    %2430 = vmatpush.msra.mxu0 0.0
    %2431 = vmatpush.msra.mxu0 %v2408
    %2432 = vmatpush.msra.mxu0 %v2406
    %2433 = vmatmul.f32.gmra.mxu0 %v2412
    %v2434 = vpop.f32.mrf.mxu0
    %v2435 = vadd.f32 0.0, %v2434
    %2436 = vmatmul.f32.gmra.mxu0 %v2415
    %v2437 = vpop.f32.mrf.mxu0
    %v2438 = vadd.f32 0.0, %v2437
    %2439 = vdwg.mxu0
    %2440 = vrot.lane.b32.xlu0 %v2163, 112
    %v2441 = vpop.permute.xlu0 %2440
    %2442 = vrot.lane.b32.xlu0 %v2166, 112
    %v2443 = vpop.permute.xlu0 %2442
    %2444 = vrot.lane.b32.xlu0 %v2205, 112
    %v2445 = vpop.permute.xlu0 %2444
    %2446 = vrot.lane.b32.xlu0 %v2208, 112
    %v2447 = vpop.permute.xlu0 %2446
    %v2448 = vsel %vm189, %v2441, 0
    %v2450 = vsel %vm189, %v2443, 0
    %v2452 = vsel %vm189, %v2445, 0
    %v2454 = vsel %vm189, %v2447, 0
    %2456 = vmatpush.xpose.msra.mxu0 0.0
    %2457 = vmatpush.xpose.msra.mxu0 0.0
    %2458 = vmatpush.xpose.msra.mxu0 0.0
    %2459 = vmatpush.xpose.msra.mxu0 0.0
    %2460 = vmatpush.xpose.msra.mxu0 0.0
    %2461 = vmatpush.xpose.msra.mxu0 0.0
    %2462 = vmatpush.xpose.msra.mxu0 0.0
    %2463 = vmatpush.xpose.msra.mxu0 0.0
    %2464 = vmatpush.xpose.msra.mxu0 0.0
    %2465 = vmatpush.xpose.msra.mxu0 0.0
    %2466 = vmatpush.xpose.msra.mxu0 0.0
    %2467 = vmatpush.xpose.msra.mxu0 0.0
    %2468 = vmatpush.xpose.msra.mxu0 0.0
    %2469 = vmatpush.xpose.msra.mxu0 0.0
    %2470 = vmatpush.xpose.msra.mxu0 %v2454
    %2471 = vmatpush.xpose.msra.mxu0 %v2452
    %2472 = vmatmul.f32.gmra.mxu0 %v2448
    %v2473 = vpop.f32.mrf.mxu0
    %v2474 = vadd.f32 0.0, %v2473
    %2475 = vmatmul.f32.gmra.mxu0 %v2450
    %v2476 = vpop.f32.mrf.mxu0
    %v2477 = vadd.f32 0.0, %v2476
    %2478 = vdwg.mxu0
    %v2479 = vmul.f32 %v2474, 0.35355338
    %v2480 = vmul.f32 %v2477, 0.35355338
    %v2481 = vadd.f32 %v2479, %v48
    %v2482 = vadd.f32 %v2480, %v49
    %v2483 = vsel %vm229, %v2481, -inf
    %2484 = vmax.xlane.f32.xlu0 %v2483
    %v2485 = vpop.xlane.xlu0 %2484
    %v2486 = vsel %vm229, %v2482, -inf
    %2487 = vmax.xlane.f32.xlu0 %v2486
    %v2488 = vpop.xlane.xlu0 %2487
    %v2489 = vsub.f32 %v2481, %v2485
    %v2490 = vsub.f32 %v2482, %v2488
    %v2491 = vmul.f32 %v2489, 1.442695
    %v2492 = vpow.pop %v2491
    %v2493 = vmul.f32 %v2490, 1.442695
    %v2494 = vpow.pop %v2493
    %v2495 = vsel %vm229, %v2492, 0.0
    %2496 = vadd.xlane.f32.xlu0 %v2495
    %v2497 = vpop.xlane.xlu0 %2496
    %v2498 = vsel %vm229, %v2494, 0.0
    %2499 = vadd.xlane.f32.xlu0 %v2498
    %v2500 = vpop.xlane.xlu0 %2499
    %v2501 = vrcp.pop %v2497
    %v2502 = vrcp.pop %v2500
    %v2503 = vmul.f32 %v2492, %v2501
    %v2504 = vmul.f32 %v2494, %v2502
    %2505 = vrot.lane.b32.xlu0 %v2243, 112
    %v2506 = vpop.permute.xlu0 %2505
    %2507 = vrot.lane.b32.xlu0 %v2246, 112
    %v2508 = vpop.permute.xlu0 %2507
    %v2512 = vsel %vm229, %v2503, 0
    %v2515 = vsel %vm229, %v2504, 0
    %2517 = vmatpush.msra.mxu0 0.0
    %2518 = vmatpush.msra.mxu0 0.0
    %2519 = vmatpush.msra.mxu0 0.0
    %2520 = vmatpush.msra.mxu0 0.0
    %2521 = vmatpush.msra.mxu0 0.0
    %2522 = vmatpush.msra.mxu0 0.0
    %2523 = vmatpush.msra.mxu0 0.0
    %2524 = vmatpush.msra.mxu0 0.0
    %2525 = vmatpush.msra.mxu0 0.0
    %2526 = vmatpush.msra.mxu0 0.0
    %2527 = vmatpush.msra.mxu0 0.0
    %2528 = vmatpush.msra.mxu0 0.0
    %2529 = vmatpush.msra.mxu0 0.0
    %2530 = vmatpush.msra.mxu0 0.0
    %2531 = vmatpush.msra.mxu0 %v2508
    %2532 = vmatpush.msra.mxu0 %v2506
    %2533 = vmatmul.f32.gmra.mxu0 %v2512
    %v2534 = vpop.f32.mrf.mxu0
    %v2535 = vadd.f32 0.0, %v2534
    %2536 = vmatmul.f32.gmra.mxu0 %v2515
    %v2537 = vpop.f32.mrf.mxu0
    %v2538 = vadd.f32 0.0, %v2537
    %2539 = vdwg.mxu0
    %2540 = vrot.lane.b32.xlu0 %v2163, 104
    %v2541 = vpop.permute.xlu0 %2540
    %2542 = vrot.lane.b32.xlu0 %v2166, 104
    %v2543 = vpop.permute.xlu0 %2542
    %2544 = vrot.lane.b32.xlu0 %v2205, 104
    %v2545 = vpop.permute.xlu0 %2544
    %2546 = vrot.lane.b32.xlu0 %v2208, 104
    %v2547 = vpop.permute.xlu0 %2546
    %v2548 = vsel %vm189, %v2541, 0
    %v2550 = vsel %vm189, %v2543, 0
    %v2552 = vsel %vm189, %v2545, 0
    %v2554 = vsel %vm189, %v2547, 0
    %2556 = vmatpush.xpose.msra.mxu0 0.0
    %2557 = vmatpush.xpose.msra.mxu0 0.0
    %2558 = vmatpush.xpose.msra.mxu0 0.0
    %2559 = vmatpush.xpose.msra.mxu0 0.0
    %2560 = vmatpush.xpose.msra.mxu0 0.0
    %2561 = vmatpush.xpose.msra.mxu0 0.0
    %2562 = vmatpush.xpose.msra.mxu0 0.0
    %2563 = vmatpush.xpose.msra.mxu0 0.0
    %2564 = vmatpush.xpose.msra.mxu0 0.0
    %2565 = vmatpush.xpose.msra.mxu0 0.0
    %2566 = vmatpush.xpose.msra.mxu0 0.0
    %2567 = vmatpush.xpose.msra.mxu0 0.0
    %2568 = vmatpush.xpose.msra.mxu0 0.0
    %2569 = vmatpush.xpose.msra.mxu0 0.0
    %2570 = vmatpush.xpose.msra.mxu0 %v2554
    %2571 = vmatpush.xpose.msra.mxu0 %v2552
    %2572 = vmatmul.f32.gmra.mxu0 %v2548
    %v2573 = vpop.f32.mrf.mxu0
    %v2574 = vadd.f32 0.0, %v2573
    %2575 = vmatmul.f32.gmra.mxu0 %v2550
    %v2576 = vpop.f32.mrf.mxu0
    %v2577 = vadd.f32 0.0, %v2576
    %2578 = vdwg.mxu0
    %v2579 = vmul.f32 %v2574, 0.35355338
    %v2580 = vmul.f32 %v2577, 0.35355338
    %v2581 = vadd.f32 %v2579, %v48
    %v2582 = vadd.f32 %v2580, %v49
    %v2583 = vsel %vm229, %v2581, -inf
    %2584 = vmax.xlane.f32.xlu0 %v2583
    %v2585 = vpop.xlane.xlu0 %2584
    %v2586 = vsel %vm229, %v2582, -inf
    %2587 = vmax.xlane.f32.xlu0 %v2586
    %v2588 = vpop.xlane.xlu0 %2587
    %v2589 = vsub.f32 %v2581, %v2585
    %v2590 = vsub.f32 %v2582, %v2588
    %v2591 = vmul.f32 %v2589, 1.442695
    %v2592 = vpow.pop %v2591
    %v2593 = vmul.f32 %v2590, 1.442695
    %v2594 = vpow.pop %v2593
    %v2595 = vsel %vm229, %v2592, 0.0
    %2596 = vadd.xlane.f32.xlu0 %v2595
    %v2597 = vpop.xlane.xlu0 %2596
    %v2598 = vsel %vm229, %v2594, 0.0
    %2599 = vadd.xlane.f32.xlu0 %v2598
    %v2600 = vpop.xlane.xlu0 %2599
    %v2601 = vrcp.pop %v2597
    %v2602 = vrcp.pop %v2600
    %v2603 = vmul.f32 %v2592, %v2601
    %v2604 = vmul.f32 %v2594, %v2602
    %2605 = vrot.lane.b32.xlu0 %v2243, 104
    %v2606 = vpop.permute.xlu0 %2605
    %2607 = vrot.lane.b32.xlu0 %v2246, 104
    %v2608 = vpop.permute.xlu0 %2607
    %v2612 = vsel %vm229, %v2603, 0
    %v2615 = vsel %vm229, %v2604, 0
    %2617 = vmatpush.msra.mxu0 0.0
    %2618 = vmatpush.msra.mxu0 0.0
    %2619 = vmatpush.msra.mxu0 0.0
    %2620 = vmatpush.msra.mxu0 0.0
    %2621 = vmatpush.msra.mxu0 0.0
    %2622 = vmatpush.msra.mxu0 0.0
    %2623 = vmatpush.msra.mxu0 0.0
    %2624 = vmatpush.msra.mxu0 0.0
    %2625 = vmatpush.msra.mxu0 0.0
    %2626 = vmatpush.msra.mxu0 0.0
    %2627 = vmatpush.msra.mxu0 0.0
    %2628 = vmatpush.msra.mxu0 0.0
    %2629 = vmatpush.msra.mxu0 0.0
    %2630 = vmatpush.msra.mxu0 0.0
    %2631 = vmatpush.msra.mxu0 %v2608
    %2632 = vmatpush.msra.mxu0 %v2606
    %2633 = vmatmul.f32.gmra.mxu0 %v2612
    %v2634 = vpop.f32.mrf.mxu0
    %v2635 = vadd.f32 0.0, %v2634
    %2636 = vmatmul.f32.gmra.mxu0 %v2615
    %v2637 = vpop.f32.mrf.mxu0
    %v2638 = vadd.f32 0.0, %v2637
    %2639 = vdwg.mxu0
    %2642 = vrot.lane.b32.xlu0 %v2435, 8
    %v2643 = vpop.permute.xlu0 %2642
    %2644 = vrot.lane.b32.xlu0 %v2438, 8
    %v2645 = vpop.permute.xlu0 %2644
    %2650 = vrot.lane.b32.xlu0 %v2535, 16
    %v2651 = vpop.permute.xlu0 %2650
    %2652 = vrot.lane.b32.xlu0 %v2538, 16
    %v2653 = vpop.permute.xlu0 %2652
    %2658 = vrot.lane.b32.xlu0 %v2635, 24
    %v2659 = vpop.permute.xlu0 %2658
    %2660 = vrot.lane.b32.xlu0 %v2638, 24
    %v2661 = vpop.permute.xlu0 %2660
    %v2664 = vsel %vm189, %v2333, %v2643
    %v2665 = vsel %vm189, %v2336, %v2645
    %v2666 = vsel %vm229, %v2664, %v2651
    %v2667 = vsel %vm229, %v2665, %v2653
    %v2668 = vsel %vm611, %v2666, %v2659
    %v2669 = vsel %vm611, %v2667, %v2661
    %2670 = vrot.lane.b32.xlu0 %v1477, 32
    %v2671 = vpop.permute.xlu0 %2670
    %2672 = vrot.lane.b32.xlu0 %v1478, 32
    %v2673 = vpop.permute.xlu0 %2672
    %2674 = vrot.lane.b32.xlu0 %v1479, 32
    %v2675 = vpop.permute.xlu0 %2674
    %2676 = vrot.lane.b32.xlu0 %v1480, 32
    %v2677 = vpop.permute.xlu0 %2676
    %2682 = vrot.lane.b32.xlu0 %v2137, 32
    %v2683 = vpop.permute.xlu0 %2682
    %v2686 = vsel %vm79, %v2668, 0
    %v2689 = vsel %vm79, %v2669, 0
    %2691 = vmatpush.msra.mxu0 0.0
    %2692 = vmatpush.msra.mxu0 0.0
    %2693 = vmatpush.msra.mxu0 0.0
    %2694 = vmatpush.msra.mxu0 0.0
    %2695 = vmatpush.msra.mxu0 0.0
    %2696 = vmatpush.msra.mxu0 0.0
    %2697 = vmatpush.msra.mxu0 0.0
    %2698 = vmatpush.msra.mxu0 0.0
    %2699 = vmatpush.msra.mxu0 0.0
    %2700 = vmatpush.msra.mxu0 0.0
    %2701 = vmatpush.msra.mxu0 0.0
    %2702 = vmatpush.msra.mxu0 0.0
    %2703 = vmatpush.msra.mxu0 %v2677
    %2704 = vmatpush.msra.mxu0 %v2675
    %2705 = vmatpush.msra.mxu0 %v2673
    %2706 = vmatpush.msra.mxu0 %v2671
    %2707 = vmatmul.f32.gmra.mxu0 %v2686
    %v2708 = vpop.f32.mrf.mxu0
    %v2709 = vadd.f32 %v2683, %v2708
    %2710 = vmatmul.f32.gmra.mxu0 %v2689
    %v2711 = vpop.f32.mrf.mxu0
    %v2712 = vadd.f32 %v2683, %v2711
    %2713 = vdwg.mxu0
    %v2714 = vadd.f32 %v2134, %v2709
    %v2715 = vadd.f32 %v2135, %v2712
    %v2716 = vsel %vm79, %v2714, 0.0
    %2717 = vadd.xlane.f32.xlu0 %v2716
    %v2718 = vpop.xlane.xlu0 %2717
    %v2719 = vsel %vm79, %v2715, 0.0
    %2720 = vadd.xlane.f32.xlu0 %v2719
    %v2721 = vpop.xlane.xlu0 %2720
    %v2722 = vmul.f32 %v2718, %v672
    %v2723 = vmul.f32 %v2721, %v672
    %v2724 = vsub.f32 %v2714, %v2722
    %v2725 = vsub.f32 %v2715, %v2723
    %v2726 = vmul.f32 %v2724, %v2724
    %v2727 = vmul.f32 %v2725, %v2725
    %v2728 = vsel %vm79, %v2726, 0.0
    %2729 = vadd.xlane.f32.xlu0 %v2728
    %v2730 = vpop.xlane.xlu0 %2729
    %v2731 = vsel %vm79, %v2727, 0.0
    %2732 = vadd.xlane.f32.xlu0 %v2731
    %v2733 = vpop.xlane.xlu0 %2732
    %v2734 = vmul.f32 %v2730, %v672
    %v2735 = vmul.f32 %v2733, %v672
    %v2736 = vadd.f32 %v2734, 1e-05
    %v2737 = vadd.f32 %v2735, 1e-05
    %v2738 = vrsqrt.pop %v2736
    %v2739 = vmul.f32 %v2738, %v2736
    %v2740 = vmul.f32 %v2739, %v2738
    %v2741 = vmul.f32 0.5, %v2740
    %v2742 = vsub.f32 1.5, %v2741
    %v2743 = vmul.f32 %v2738, %v2742
    %vm2744 = vweird.f32 %v2736
    %vm2745 = vweird.f32 %v2738
    %vm2746 = vmor %vm2744, %vm2745
    %v2747 = vsel %vm2746, %v2738, %v2743
    %v2748 = vrsqrt.pop %v2737
    %v2749 = vmul.f32 %v2748, %v2737
    %v2750 = vmul.f32 %v2749, %v2748
    %v2751 = vmul.f32 0.5, %v2750
    %v2752 = vsub.f32 1.5, %v2751
    %v2753 = vmul.f32 %v2748, %v2752
    %vm2754 = vweird.f32 %v2737
    %vm2755 = vweird.f32 %v2748
    %vm2756 = vmor %vm2754, %vm2755
    %v2757 = vsel %vm2756, %v2748, %v2753
    %v2758 = vmul.f32 %v2724, %v2747
    %v2759 = vmul.f32 %v2725, %v2757
    %v2760 = vperm.slane %v1485, 1
    %v2761 = vmul.f32 %v2758, %v2760
    %v2762 = vmul.f32 %v2759, %v2760
    %v2763 = vperm.slane %v1487, 1
    %v2764 = vadd.f32 %v2761, %v2763
    %v2765 = vadd.f32 %v2762, %v2763
    %v2767 = vperm.slane %v1494, 0
    %v2770 = vsel %vm79, %v2764, 0
    %v2773 = vsel %vm79, %v2765, 0
    %2775 = vmatpush.msra.mxu0 0.0
    %2776 = vmatpush.msra.mxu0 0.0
    %2777 = vmatpush.msra.mxu0 0.0
    %2778 = vmatpush.msra.mxu0 0.0
    %2779 = vmatpush.msra.mxu0 0.0
    %2780 = vmatpush.msra.mxu0 0.0
    %2781 = vmatpush.msra.mxu0 0.0
    %2782 = vmatpush.msra.mxu0 0.0
    %2783 = vmatpush.msra.mxu0 0.0
    %2784 = vmatpush.msra.mxu0 0.0
    %2785 = vmatpush.msra.mxu0 0.0
    %2786 = vmatpush.msra.mxu0 0.0
    %2787 = vmatpush.msra.mxu0 %v1492
    %2788 = vmatpush.msra.mxu0 %v1491
    %2789 = vmatpush.msra.mxu0 %v1490
    %2790 = vmatpush.msra.mxu0 %v1489
    %2791 = vmatmul.f32.gmra.mxu0 %v2770
    %v2792 = vpop.f32.mrf.mxu0
    %v2793 = vadd.f32 %v2767, %v2792
    %2794 = vmatmul.f32.gmra.mxu0 %v2773
    %v2795 = vpop.f32.mrf.mxu0
    %v2796 = vadd.f32 %v2767, %v2795
    %2797 = vdwg.mxu0
    %v2798 = vmax.f32 %v2793, 0.0
    %v2799 = vmax.f32 %v2796, 0.0
    %v2801 = vperm.slane %v1505, 0
    %v2804 = vsel %vm1390, %v2798, 0
    %v2807 = vsel %vm1390, %v2799, 0
    %2809 = vmatpush.msra.mxu0 0.0
    %2810 = vmatpush.msra.mxu0 0.0
    %2811 = vmatpush.msra.mxu0 0.0
    %2812 = vmatpush.msra.mxu0 0.0
    %2813 = vmatpush.msra.mxu0 0.0
    %2814 = vmatpush.msra.mxu0 0.0
    %2815 = vmatpush.msra.mxu0 0.0
    %2816 = vmatpush.msra.mxu0 0.0
    %2817 = vmatpush.msra.mxu0 %v1503
    %2818 = vmatpush.msra.mxu0 %v1502
    %2819 = vmatpush.msra.mxu0 %v1501
    %2820 = vmatpush.msra.mxu0 %v1500
    %2821 = vmatpush.msra.mxu0 %v1499
    %2822 = vmatpush.msra.mxu0 %v1498
    %2823 = vmatpush.msra.mxu0 %v1497
    %2824 = vmatpush.msra.mxu0 %v1496
    %2825 = vmatmul.f32.gmra.mxu0 %v2804
    %v2826 = vpop.f32.mrf.mxu0
    %v2827 = vadd.f32 %v2801, %v2826
    %2828 = vmatmul.f32.gmra.mxu0 %v2807
    %v2829 = vpop.f32.mrf.mxu0
    %v2830 = vadd.f32 %v2801, %v2829
    %2831 = vdwg.mxu0
    %v2832 = vadd.f32 %v2764, %v2827
    %v2833 = vadd.f32 %v2765, %v2830
    %v2834 = vsel %vm79, %v2832, 0.0
    %2835 = vadd.xlane.f32.xlu0 %v2834
    %v2836 = vpop.xlane.xlu0 %2835
    %v2837 = vsel %vm79, %v2833, 0.0
    %2838 = vadd.xlane.f32.xlu0 %v2837
    %v2839 = vpop.xlane.xlu0 %2838
    %v2840 = vmul.f32 %v2836, %v672
    %v2841 = vmul.f32 %v2839, %v672
    %v2842 = vsub.f32 %v2832, %v2840
    %v2843 = vsub.f32 %v2833, %v2841
    %v2844 = vmul.f32 %v2842, %v2842
    %v2845 = vmul.f32 %v2843, %v2843
    %v2846 = vsel %vm79, %v2844, 0.0
    %2847 = vadd.xlane.f32.xlu0 %v2846
    %v2848 = vpop.xlane.xlu0 %2847
    %v2849 = vsel %vm79, %v2845, 0.0
    %2850 = vadd.xlane.f32.xlu0 %v2849
    %v2851 = vpop.xlane.xlu0 %2850
    %v2852 = vmul.f32 %v2848, %v672
    %v2853 = vmul.f32 %v2851, %v672
    %v2854 = vadd.f32 %v2852, 1e-05
    %v2855 = vadd.f32 %v2853, 1e-05
    %v2856 = vrsqrt.pop %v2854
    %v2857 = vmul.f32 %v2856, %v2854
    %v2858 = vmul.f32 %v2857, %v2856
    %v2859 = vmul.f32 0.5, %v2858
    %v2860 = vsub.f32 1.5, %v2859
    %v2861 = vmul.f32 %v2856, %v2860
    %vm2862 = vweird.f32 %v2854
    %vm2863 = vweird.f32 %v2856
    %vm2864 = vmor %vm2862, %vm2863
    %v2865 = vsel %vm2864, %v2856, %v2861
    %v2866 = vrsqrt.pop %v2855
    %v2867 = vmul.f32 %v2866, %v2855
    %v2868 = vmul.f32 %v2867, %v2866
    %v2869 = vmul.f32 0.5, %v2868
    %v2870 = vsub.f32 1.5, %v2869
    %v2871 = vmul.f32 %v2866, %v2870
    %vm2872 = vweird.f32 %v2855
    %vm2873 = vweird.f32 %v2866
    %vm2874 = vmor %vm2872, %vm2873
    %v2875 = vsel %vm2874, %v2866, %v2871
    %v2876 = vmul.f32 %v2842, %v2865
    %v2877 = vmul.f32 %v2843, %v2875
    %v2878 = vperm.slane %v1485, 2
    %v2879 = vmul.f32 %v2876, %v2878
    %v2880 = vmul.f32 %v2877, %v2878
    %v2881 = vperm.slane %v1487, 2
    %v2882 = vadd.f32 %v2879, %v2881
    %v2883 = vadd.f32 %v2880, %v2881
    %2884 = vst.msk [vmem:[#allocation2] sm:$0xff] %vm79, %v2882
    %2885 = vst.msk [vmem:[#allocation2 + $0x8] sm:$0xff] %vm79, %v2883
    // Predicated region
    $region50: #{decoder_model_forward.1} parent=1 // pred_check
      _
    $region51: #{decoder_model_forward.1} parent=1 // pred_check_branch
      %2887 = sbr.rel (0) target = $region53
    $region52: #{decoder_model_forward.1} parent=1 // pred_region
      %2889 = vsyncadd [#allocation3], 0
      %s2890 = sshll.u32 [#allocation2], 4
      %s2891 = int_to_ptr.vmem [resolvable:$true] %s2890
      %s2892 = sshll.u32 %s12, 4
      %s2893 = int_to_ptr.hbm [resolvable:$true] %s2892
      %2898 = dma.vmem_to_hbm [thread:$0]  %s2891, 256, %s2893, [#allocation3], 128, 128, 8
    $region53: #{decoder_model_forward.1} parent=1 // pred_fallthru
      _
    // Predicated region
    $region54: #{decoder_model_forward.1} parent=1 // pred_check
      _
    $region55: #{decoder_model_forward.1} parent=1 // pred_check_branch
      %2900 = sbr.rel (0) target = $region57
    $region56: #{decoder_model_forward.1} parent=1 // pred_region
      %2902 = dma.done [#allocation3], 256
    $region57: #{decoder_model_forward.1} parent=1 // pred_fallthru
      _
    %2903 = vsyncpa [#allocation3], 1

</llo_original>
